<compile_context>
chip_gen: v7x
topology: tpu7x:2x2x1
jax: 0.10.0
libtpu: 0.0.40
codegen_flags: <defaults>
</compile_context>

<pallas_src>
import functools

import jax
import jax.numpy as jnp
from jax.experimental import pallas as pl
from jax.experimental.pallas import tpu as pltpu


_VMEM_LIMIT = 64 * 1024 * 1024  # explicit scoped-VMEM cap; per-step blocks are budgeted << this


def _round_up(x, m):
    return ((x + m - 1) // m) * m


# ----------------------------------------------------------------------------
# Lane-dense, M-tiled Pallas matmul
# ----------------------------------------------------------------------------
def _matmul_kernel(a_ref, b_ref, o_ref):
    o_ref[...] = jnp.dot(a_ref[...], b_ref[...],
                         preferred_element_type=jnp.float32)


def pallas_matmul(a, b, *, max_tm=512, trim=True):
    """(M, K) @ (K, N) -> (M, N) in f32.

    N is zero-padded to a multiple of 128 (unmasked vector stores); M is padded to a
    multiple of a VMEM-budgeted row tile (<= max_tm) and pipelined over a parallel grid.
    K stays whole (it is tiny for every call here).
    # TODO(synk): add K-tiling + VMEM accumulator for large-K callers (v7x 64 MiB).
    """
    M, K = a.shape
    K2, N = b.shape
    assert K == K2
    n_pad = _round_up(N, 128)
    # keep A+output blocks (double-buffered) around ~4 MiB
    tm_cap = max(8, min(max_tm, ((4 * 1024 * 1024) // (4 * (K + n_pad))) // 8 * 8))
    tm = min(tm_cap, _round_up(M, 8))
    m_pad = _round_up(M, tm)
    if m_pad != M:
        a = jnp.pad(a, ((0, m_pad - M), (0, 0)))
    if n_pad != N:
        b = jnp.pad(b, ((0, 0), (0, n_pad - N)))
    out = pl.pallas_call(
        _matmul_kernel,
        out_shape=jax.ShapeDtypeStruct((m_pad, n_pad), jnp.float32),
        grid=(m_pad // tm,),
        in_specs=[pl.BlockSpec((tm, K), lambda i: (i, 0)),
                  pl.BlockSpec((K, n_pad), lambda i: (0, 0))],
        out_specs=pl.BlockSpec((tm, n_pad), lambda i: (i, 0)),
        compiler_params=pltpu.CompilerParams(
            dimension_semantics=("parallel",),
            vmem_limit_bytes=_VMEM_LIMIT),
    )(a, b)
    return out[:M, :N] if trim else out


# ----------------------------------------------------------------------------
# ConvTranspose2d = Pallas matmul + phase-decomposed fold (contiguous adds only)
# ----------------------------------------------------------------------------
def fold_col2im(cols_pad, bias, N, H, W, C, KH, KW,
                stride, padding, output_padding, dilation):
    sh, sw = stride
    ph, pw = padding
    oph, opw = output_padding
    dh, dw = dilation
    OH = (H - 1) * sh - 2 * ph + dh * (KH - 1) + oph + 1
    OW = (W - 1) * sw - 2 * pw + dw * (KW - 1) + opw + 1
    full_h = (H - 1) * sh + dh * (KH - 1) + 1 + oph
    full_w = (W - 1) * sw + dw * (KW - 1) + 1 + opw
    Qh = -(-full_h // sh)
    Qw = -(-full_w // sw)

    cols = cols_pad[: N * H * W].reshape(N, H, W, -1)   # lanes: (kh*KW+kw)*C + c (padded)

    # Phase-decomposed accumulation buffer: output position fh = qh*sh + rh.
    # Each tap lands in exactly one phase (rh, rw) at a CONTIGUOUS (H, W) region,
    # so every add is an input-sized, unstrided update (vs. 9 strided full-output RMWs).
    buf = jnp.zeros((N, Qh, sh, Qw, sw, C), jnp.float32)
    for kh in range(KH):
        rh, oh = (kh * dh) % sh, (kh * dh) // sh
        for kw in range(KW):
            rw, ow = (kw * dw) % sw, (kw * dw) // sw
            lane0 = (kh * KW + kw) * C
            tap = cols[..., lane0:lane0 + C]             # (N, H, W, C)
            buf = buf.at[:, oh:oh + H, rh, ow:ow + W, rw, :].add(tap)

    # (N, Qh, sh, Qw, sw, C) -> (N, Qh*sh, Qw*sw, C) is a pure metadata reshape.
    full = buf.reshape(N, Qh * sh, Qw * sw, C)
    # crop + bias in one fused pass (the bias is cancelled by BN anyway, kept for semantics)
    y = full[:, ph:ph + OH, pw:pw + OW, :] + bias
    return y, OH, OW


def conv_transpose2d(x_nhwc, weight, bias, stride, padding, output_padding, dilation):
    N, H, W, Cin = x_nhwc.shape
    Cin_w, Cout, KH, KW = weight.shape
    assert Cin == Cin_w
    a = x_nhwc.reshape(N * H * W, Cin)                                   # free reshape
    b = jnp.transpose(weight, (0, 2, 3, 1)).reshape(Cin, KH * KW * Cout)  # tiny, one-time
    cols = pallas_matmul(a, b, trim=False)   # (rows_pad, 128-padded), lane-dense stores
    return fold_col2im(cols, bias, N, H, W, Cout, KH, KW,
                       stride, padding, output_padding, dilation)


# ----------------------------------------------------------------------------
# UpsamplingBilinear2d (align_corners=True) — lane-dense matmuls, no transposes
# ----------------------------------------------------------------------------
def bilinear_matrix(L_in, L_out):
    denom = max(L_out - 1, 1)                      # guard the L_out == 1 edge case
    i = jnp.arange(L_out, dtype=jnp.float32)
    src = i * (L_in - 1) / denom
    i0 = jnp.clip(jnp.floor(src).astype(jnp.int32), 0, L_in - 1)
    i1 = jnp.clip(i0 + 1, 0, L_in - 1)
    w1 = src - i0.astype(jnp.float32)
    w0 = 1.0 - w1
    return (jax.nn.one_hot(i0, L_in, dtype=jnp.float32) * w0[:, None]
            + jax.nn.one_hot(i1, L_in, dtype=jnp.float32) * w1[:, None])   # (L_out, L_in)


def _winterp_matrix(OW, OWo, C):
    # Acts on the flattened (OW*C) lane axis: block-diagonal over channels so the
    # W-interp stays a plain 2-D matmul with lane-dense in (OW*C) and out (OWo*C).
    Mw = bilinear_matrix(OW, OWo)                                # (OWo, OW)
    eye = jnp.eye(C, dtype=jnp.float32)
    m = Mw.T[:, None, :, None] * eye[None, :, None, :]           # (OW, C, OWo, C)
    return m.reshape(OW * C, OWo * C)


def _hinterp_kernel(m_ref, x_ref, o_ref):
    x = x_ref[...]                                               # (N, OH, TL)
    m = jnp.broadcast_to(m_ref[...][None], (x.shape[0],) + m_ref.shape)
    o_ref[...] = jnp.einsum("boh,bhl->bol", m, x,
                            preferred_element_type=jnp.float32)  # (N, OHo, TL)


def _lane_tile(L, max_t=512):
    if L <= max_t or L % 128 != 0:
        return L
    t = (max_t // 128) * 128
    while L % t != 0:
        t -= 128
    return t


def hinterp(y, Mh):
    """y: (N, OH, L) channels-last flattened; returns (N, OHo, L). Lane-dense blocks."""
    N, OH, L = y.shape
    OHo = Mh.shape[0]
    TL = _lane_tile(L)
    return pl.pallas_call(
        _hinterp_kernel,
        out_shape=jax.ShapeDtypeStruct((N, OHo, L), jnp.float32),
        grid=(L // TL,),
        in_specs=[pl.BlockSpec((OHo, OH), lambda j: (0, 0)),
                  pl.BlockSpec((N, OH, TL), lambda j: (0, 0, j))],
        out_specs=pl.BlockSpec((N, OHo, TL), lambda j: (0, 0, j)),
        compiler_params=pltpu.CompilerParams(
            dimension_semantics=("parallel",),
            vmem_limit_bytes=_VMEM_LIMIT),
    )(Mh, y)


# ----------------------------------------------------------------------------
# BatchNorm2d (training-mode batch stats) + ReLU — tiled two-pass pipeline
# ----------------------------------------------------------------------------
def _bn_stats_kernel(x_ref, sum_ref, sq_ref):
    # sum/sq output blocks have a constant index_map -> resident VMEM accumulators.
    @pl.when(pl.program_id(0) == 0)
    def _init():
        sum_ref[...] = jnp.zeros_like(sum_ref)
        sq_ref[...] = jnp.zeros_like(sq_ref)

    x = x_ref[...]                                   # (TR, L)
    sum_ref[...] += jnp.sum(x, axis=0, keepdims=True)
    sq_ref[...] += jnp.sum(x * x, axis=0, keepdims=True)


def bn_stats(x2d, tr):
    R, L = x2d.shape
    return pl.pallas_call(
        _bn_stats_kernel,
        out_shape=(jax.ShapeDtypeStruct((1, L), jnp.float32),
                   jax.ShapeDtypeStruct((1, L), jnp.float32)),
        grid=(R // tr,),
        in_specs=[pl.BlockSpec((tr, L), lambda i: (i, 0))],
        out_specs=(pl.BlockSpec((1, L), lambda i: (0, 0)),
                   pl.BlockSpec((1, L), lambda i: (0, 0))),
        compiler_params=pltpu.CompilerParams(
            dimension_semantics=("arbitrary",),          # reduction over the grid
            vmem_limit_bytes=_VMEM_LIMIT),
    )(x2d)


def _bn_apply_kernel(x_ref, scale_ref, shift_ref, o_ref):
    o_ref[...] = jnp.maximum(x_ref[...] * scale_ref[...] + shift_ref[...], 0.0)


def bn_relu_apply(x2d, scale_row, shift_row, tr):
    R, L = x2d.shape
    return pl.pallas_call(
        _bn_apply_kernel,
        out_shape=jax.ShapeDtypeStruct((R, L), jnp.float32),
        grid=(R // tr,),
        in_specs=[pl.BlockSpec((tr, L), lambda i: (i, 0)),
                  pl.BlockSpec((1, L), lambda i: (0, 0)),
                  pl.BlockSpec((1, L), lambda i: (0, 0))],
        out_specs=pl.BlockSpec((tr, L), lambda i: (i, 0)),
        compiler_params=pltpu.CompilerParams(
            dimension_semantics=("parallel",),
            vmem_limit_bytes=_VMEM_LIMIT),
    )(x2d, scale_row, shift_row)


def _pad_rows(x2d, max_tr):
    R, _ = x2d.shape
    tr = min(max_tr, _round_up(R, 8))
    rp = _round_up(R, tr)
    if rp != R:
        x2d = jnp.pad(x2d, ((0, rp - R), (0, 0)))   # zero rows are harmless for sum/sumsq
    return x2d, tr


def _row_tile_budget(L, budget_bytes=2 * 1024 * 1024):
    t = budget_bytes // (L * 4)
    return max(8, min(512, (t // 8) * 8))


# ----------------------------------------------------------------------------
# Full block forward (NCHW in / NCHW out, NHWC internally)
# ----------------------------------------------------------------------------
def conv_transpose2d_block(x_nchw, params, cfg, eps=1e-5):
    N, Cin, H, W = x_nchw.shape
    w = params["w"]
    Cout, KH, KW = w.shape[1], w.shape[2], w.shape[3]
    scale = cfg["stride"][0]                     # UpsamplingBilinear2d(scale_factor=stride[0])

    # Boundary relayout only (channels-last everywhere inside the block).
    x = jnp.transpose(x_nchw, (0, 2, 3, 1))      # (N, H, W, Cin)

    # ConvTranspose2d
    y, OH, OW = conv_transpose2d(x, w, params["b"], cfg["stride"], cfg["padding"],
                                 cfg["output_padding"], cfg["dilation"])

    # Bilinear upsample (align_corners=True), separable: W-interp then H-interp.
    OHo, OWo = OH * scale, OW * scale
    m_wc = _winterp_matrix(OW, OWo, Cout)                       # (OW*C, OWo*C)
    yw = pallas_matmul(y.reshape(N * OH, OW * Cout), m_wc)      # (N*OH, OWo*C), lane-dense
    Mh = bilinear_matrix(OH, OHo)
    yh = hinterp(yw.reshape(N, OH, OWo * Cout), Mh)             # (N, OHo, OWo*C)

    # BatchNorm2d (batch statistics, biased variance) + ReLU, two tiled passes.
    R, L = N * OHo, OWo * Cout
    y2d = yh.reshape(R, L)
    xp, tr = _pad_rows(y2d, _row_tile_budget(L))
    sum_row, sq_row = bn_stats(xp, tr)
    count = float(R * OWo)                                      # true per-channel count
    s = sum_row.reshape(-1, Cout).sum(axis=0)
    q = sq_row.reshape(-1, Cout).sum(axis=0)
    mean = s / count
    var = jnp.maximum(q / count - mean * mean, 0.0)
    rstd = jax.lax.rsqrt(var + eps)
    scale_c = params["gamma"] * rstd
    shift_c = params["beta"] - mean * scale_c
    scale_row = jnp.tile(scale_c.reshape(1, Cout), (1, OWo))    # per-lane affine, tiny
    shift_row = jnp.tile(shift_c.reshape(1, Cout), (1, OWo))
    out2d = bn_relu_apply(xp, scale_row, shift_row, tr)[:R]

    out = out2d.reshape(N, OHo, OWo, Cout)
    return jnp.transpose(out, (0, 3, 1, 2))      # back to NCHW for the PyTorch interface


if __name__ == "__main__":
    key = jax.random.PRNGKey(0)
    k_w, k_b, k_x = jax.random.split(key, 3)

    N, Cin, H, W = 2, 4, 16, 16
    Cout = 8
    cfg = dict(kernel=(3, 3), stride=(2, 2), padding=(1, 1),
               output_padding=(1, 1), dilation=(1, 1))
    KH, KW = cfg["kernel"]

    # Deterministic PyTorch-style uniform init.
    bound = 1.0 / float(Cout * KH * KW) ** 0.5
    params = dict(
        w=jax.random.uniform(k_w, (Cin, Cout, KH, KW), jnp.float32, -bound, bound),
        b=jax.random.uniform(k_b, (Cout,), jnp.float32, -bound, bound),
        gamma=jnp.ones((Cout,), jnp.float32),    # BatchNorm2d default weight
        beta=jnp.zeros((Cout,), jnp.float32),    # BatchNorm2d default bias
    )
    x = jax.random.normal(k_x, (N, Cin, H, W), jnp.float32)

    out = jax.jit(lambda xx: conv_transpose2d_block(xx, params, cfg))(x)
    jax.block_until_ready(out)
    # convT: 16 -> 32, bilinear x2: 32 -> 64
    assert out.shape == (N, Cout, 64, 64), out.shape
    assert bool(jnp.all(jnp.isfinite(out)))
    assert bool(jnp.all(out >= 0.0))             # ReLU applied
    print("KERNEL_OK")
</pallas_src>

<mosaic_0001>
module attributes {stable_mosaic.version = 11 : i64} {
  func.func @_matmul_kernel(%arg0: i32, %arg1: memref<512x4xf32, #tpu.memory_space<vmem>>, %arg2: memref<4x128xf32, #tpu.memory_space<vmem>>, %arg3: memref<512x128xf32, #tpu.memory_space<vmem>>) attributes {dimension_semantics = [#tpu.dimension_semantics<parallel>], iteration_bounds = array<i64: 1>, scalar_prefetch = 0 : i64, scratch_operands = 0 : i64, tpu.core_type = #tpu.core_type<tc>, window_params = [{transform_indices = @transform_0, window_bounds = array<i64: 512, 4>}, {pipeline_mode = #tpu.pipeline_mode<synchronous>, transform_indices = @transform_1, window_bounds = array<i64: 4, 128>}, {transform_indices = @transform_2, window_bounds = array<i64: 512, 128>}]} {
    %c0 = arith.constant 0 : index
    %c0_0 = arith.constant 0 : index
    %0 = vector.load %arg1[%c0, %c0_0] : memref<512x4xf32, #tpu.memory_space<vmem>>, vector<512x4xf32>
    %c0_1 = arith.constant 0 : index
    %c0_2 = arith.constant 0 : index
    %1 = vector.load %arg2[%c0_1, %c0_2] : memref<4x128xf32, #tpu.memory_space<vmem>>, vector<4x128xf32>
    %cst = arith.constant dense<0.000000e+00> : vector<512x128xf32>
    %2 = tpu.matmul %0, %1, %cst {dimension_numbers = #tpu.dot_dimension_numbers<[1], [0], [0], [1], [0, 0, 1, 1], [], []>} : vector<512x4xf32>, vector<4x128xf32>, vector<512x128xf32> -> vector<512x128xf32>
    %c0_3 = arith.constant 0 : index
    %c0_4 = arith.constant 0 : index
    %3 = vector.load %arg3[%c0_3, %c0_4] : memref<512x128xf32, #tpu.memory_space<vmem>>, vector<512x128xf32>
    tpu.vector_store %arg3[%c0_3, %c0_4], %2 {strides = array<i32>} : memref<512x128xf32, #tpu.memory_space<vmem>>, vector<512x128xf32>,
    return
  }
  func.func @transform_0(%arg0: i32) -> (i32, i32) {
    %c0_i32 = arith.constant 0 : i32
    %c0_i32_0 = arith.constant 0 : i32
    return %arg0, %c0_i32 : i32, i32
  }
  func.func @transform_1(%arg0: i32) -> (i32, i32) {
    %c0_i32 = arith.constant 0 : i32
    %c0_i32_0 = arith.constant 0 : i32
    %c0_i32_1 = arith.constant 0 : i32
    return %c0_i32, %c0_i32_0 : i32, i32
  }
  func.func @transform_2(%arg0: i32) -> (i32, i32) {
    %c0_i32 = arith.constant 0 : i32
    %c0_i32_0 = arith.constant 0 : i32
    return %arg0, %c0_i32 : i32, i32
  }
}

module attributes {stable_mosaic.version = 11 : i64} {
  func.func @_matmul_kernel(%arg0: i32, %arg1: memref<64x256xf32, #tpu.memory_space<vmem>>, %arg2: memref<256x512xf32, #tpu.memory_space<vmem>>, %arg3: memref<64x512xf32, #tpu.memory_space<vmem>>) attributes {dimension_semantics = [#tpu.dimension_semantics<parallel>], iteration_bounds = array<i64: 1>, scalar_prefetch = 0 : i64, scratch_operands = 0 : i64, tpu.core_type = #tpu.core_type<tc>, window_params = [{transform_indices = @transform_0, window_bounds = array<i64: 64, 256>}, {pipeline_mode = #tpu.pipeline_mode<synchronous>, transform_indices = @transform_1, window_bounds = array<i64: 256, 512>}, {transform_indices = @transform_2, window_bounds = array<i64: 64, 512>}]} {
    %c0 = arith.constant 0 : index
    %c0_0 = arith.constant 0 : index
    %0 = vector.load %arg1[%c0, %c0_0] : memref<64x256xf32, #tpu.memory_space<vmem>>, vector<64x256xf32>
    %c0_1 = arith.constant 0 : index
    %c0_2 = arith.constant 0 : index
    %1 = vector.load %arg2[%c0_1, %c0_2] : memref<256x512xf32, #tpu.memory_space<vmem>>, vector<256x512xf32>
    %cst = arith.constant dense<0.000000e+00> : vector<64x512xf32>
    %2 = tpu.matmul %0, %1, %cst {dimension_numbers = #tpu.dot_dimension_numbers<[1], [0], [0], [1], [0, 0, 1, 1], [], []>} : vector<64x256xf32>, vector<256x512xf32>, vector<64x512xf32> -> vector<64x512xf32>
    %c0_3 = arith.constant 0 : index
    %c0_4 = arith.constant 0 : index
    %3 = vector.load %arg3[%c0_3, %c0_4] : memref<64x512xf32, #tpu.memory_space<vmem>>, vector<64x512xf32>
    tpu.vector_store %arg3[%c0_3, %c0_4], %2 {strides = array<i32>} : memref<64x512xf32, #tpu.memory_space<vmem>>, vector<64x512xf32>,
    return
  }
  func.func @transform_0(%arg0: i32) -> (i32, i32) {
    %c0_i32 = arith.constant 0 : i32
    %c0_i32_0 = arith.constant 0 : i32
    return %arg0, %c0_i32 : i32, i32
  }
  func.func @transform_1(%arg0: i32) -> (i32, i32) {
    %c0_i32 = arith.constant 0 : i32
    %c0_i32_0 = arith.constant 0 : i32
    %c0_i32_1 = arith.constant 0 : i32
    return %c0_i32, %c0_i32_0 : i32, i32
  }
  func.func @transform_2(%arg0: i32) -> (i32, i32) {
    %c0_i32 = arith.constant 0 : i32
    %c0_i32_0 = arith.constant 0 : i32
    return %arg0, %c0_i32 : i32, i32
  }
}

module attributes {stable_mosaic.version = 11 : i64} {
  func.func @_hinterp_kernel(%arg0: i32, %arg1: memref<64x32xf32, #tpu.memory_space<vmem>>, %arg2: memref<2x32x512xf32, #tpu.memory_space<vmem>>, %arg3: memref<2x64x512xf32, #tpu.memory_space<vmem>>) attributes {dimension_semantics = [#tpu.dimension_semantics<parallel>], iteration_bounds = array<i64: 1>, scalar_prefetch = 0 : i64, scratch_operands = 0 : i64, tpu.core_type = #tpu.core_type<tc>, window_params = [{pipeline_mode = #tpu.pipeline_mode<synchronous>, transform_indices = @transform_0, window_bounds = array<i64: 64, 32>}, {transform_indices = @transform_1, window_bounds = array<i64: 2, 32, 512>}, {transform_indices = @transform_2, window_bounds = array<i64: 2, 64, 512>}]} {
    %c0 = arith.constant 0 : index
    %c0_0 = arith.constant 0 : index
    %c0_1 = arith.constant 0 : index
    %0 = vector.load %arg2[%c0, %c0_0, %c0_1] : memref<2x32x512xf32, #tpu.memory_space<vmem>>, vector<2x32x512xf32>
    %c0_2 = arith.constant 0 : index
    %c0_3 = arith.constant 0 : index
    %1 = vector.load %arg1[%c0_2, %c0_3] : memref<64x32xf32, #tpu.memory_space<vmem>>, vector<64x32xf32>
    %2 = vector.shape_cast %1 : vector<64x32xf32> to vector<1x64x32xf32>
    %3 = vector.shape_cast %2 : vector<1x64x32xf32> to vector<1x64x32xf32>
    %4 = vector.broadcast %3 : vector<1x64x32xf32> to vector<2x64x32xf32>
    "tpu.trace_start"() <{level = 10 : i32, message = "boh,bhl->bol"}> : () -> ()
    %cst = arith.constant dense<0.000000e+00> : vector<2x64x512xf32>
    %5 = tpu.matmul %4, %0, %cst {dimension_numbers = #tpu.dot_dimension_numbers<[2], [1], [1], [2], [0, 0, 0, 1, 1, 2], [0], [0]>} : vector<2x64x32xf32>, vector<2x32x512xf32>, vector<2x64x512xf32> -> vector<2x64x512xf32>
    "tpu.trace_stop"() : () -> ()
    %c0_4 = arith.constant 0 : index
    %c0_5 = arith.constant 0 : index
    %c0_6 = arith.constant 0 : index
    %6 = vector.load %arg3[%c0_4, %c0_5, %c0_6] : memref<2x64x512xf32, #tpu.memory_space<vmem>>, vector<2x64x512xf32>
    tpu.vector_store %arg3[%c0_4, %c0_5, %c0_6], %5 {strides = array<i32>} : memref<2x64x512xf32, #tpu.memory_space<vmem>>, vector<2x64x512xf32>,
    return
  }
  func.func @transform_0(%arg0: i32) -> (i32, i32) {
    %c0_i32 = arith.constant 0 : i32
    %c0_i32_0 = arith.constant 0 : i32
    %c0_i32_1 = arith.constant 0 : i32
    return %c0_i32, %c0_i32_0 : i32, i32
  }
  func.func @transform_1(%arg0: i32) -> (i32, i32, i32) {
    %c0_i32 = arith.constant 0 : i32
    %c0_i32_0 = arith.constant 0 : i32
    %c0_i32_1 = arith.constant 0 : i32
    return %c0_i32, %c0_i32_0, %arg0 : i32, i32, i32
  }
  func.func @transform_2(%arg0: i32) -> (i32, i32, i32) {
    %c0_i32 = arith.constant 0 : i32
    %c0_i32_0 = arith.constant 0 : i32
    %c0_i32_1 = arith.constant 0 : i32
    return %c0_i32, %c0_i32_0, %arg0 : i32, i32, i32
  }
}

module attributes {stable_mosaic.version = 11 : i64} {
  func.func @_bn_stats_kernel(%arg0: i32, %arg1: memref<128x512xf32, #tpu.memory_space<vmem>>, %arg2: memref<1x512xf32, #tpu.memory_space<vmem>>, %arg3: memref<1x512xf32, #tpu.memory_space<vmem>>) attributes {dimension_semantics = [#tpu.dimension_semantics<arbitrary>], iteration_bounds = array<i64: 1>, scalar_prefetch = 0 : i64, scratch_operands = 0 : i64, tpu.core_type = #tpu.core_type<tc>, window_params = [{transform_indices = @transform_0, window_bounds = array<i64: 128, 512>}, {pipeline_mode = #tpu.pipeline_mode<synchronous>, transform_indices = @transform_1, window_bounds = array<i64: 1, 512>}, {pipeline_mode = #tpu.pipeline_mode<synchronous>, transform_indices = @transform_2, window_bounds = array<i64: 1, 512>}]} {
    %c0_i32 = arith.constant 0 : i32
    %0 = arith.cmpi eq, %arg0, %c0_i32 : i32
    %1 = arith.extui %0 : i1 to i32
    %c0_i32_0 = arith.constant 0 : i32
    %2 = arith.cmpi ne, %1, %c0_i32_0 : i32
    scf.if %2 {
      %cst_11 = arith.constant 0.000000e+00 : f32
      %15 = vector.broadcast %cst_11 : f32 to vector<1x512xf32>
      %c0_12 = arith.constant 0 : index
      %c0_13 = arith.constant 0 : index
      %16 = vector.load %arg2[%c0_12, %c0_13] : memref<1x512xf32, #tpu.memory_space<vmem>>, vector<1x512xf32>
      tpu.vector_store %arg2[%c0_12, %c0_13], %15 {strides = array<i32>} : memref<1x512xf32, #tpu.memory_space<vmem>>, vector<1x512xf32>,
      %cst_14 = arith.constant 0.000000e+00 : f32
      %17 = vector.broadcast %cst_14 : f32 to vector<1x512xf32>
      %c0_15 = arith.constant 0 : index
      %c0_16 = arith.constant 0 : index
      %18 = vector.load %arg3[%c0_15, %c0_16] : memref<1x512xf32, #tpu.memory_space<vmem>>, vector<1x512xf32>
      tpu.vector_store %arg3[%c0_15, %c0_16], %17 {strides = array<i32>} : memref<1x512xf32, #tpu.memory_space<vmem>>, vector<1x512xf32>,
    } else {
    }
    %c0 = arith.constant 0 : index
    %c0_1 = arith.constant 0 : index
    %3 = vector.load %arg1[%c0, %c0_1] : memref<128x512xf32, #tpu.memory_space<vmem>>, vector<128x512xf32>
    %c0_2 = arith.constant 0 : index
    %c0_3 = arith.constant 0 : index
    %4 = vector.load %arg2[%c0_2, %c0_3] : memref<1x512xf32, #tpu.memory_space<vmem>>, vector<1x512xf32>
    %cst = arith.constant dense<0.000000e+00> : vector<512xf32>
    %5 = vector.multi_reduction <add>, %3, %cst [0] : vector<128x512xf32> to vector<512xf32>
    %6 = vector.shape_cast %5 : vector<512xf32> to vector<1x512xf32>
    %7 = arith.addf %4, %6 : vector<1x512xf32>
    %c0_4 = arith.constant 0 : index
    %c0_5 = arith.constant 0 : index
    %8 = vector.load %arg2[%c0_4, %c0_5] : memref<1x512xf32, #tpu.memory_space<vmem>>, vector<1x512xf32>
    tpu.vector_store %arg2[%c0_4, %c0_5], %7 {strides = array<i32>} : memref<1x512xf32, #tpu.memory_space<vmem>>, vector<1x512xf32>,
    %c0_6 = arith.constant 0 : index
    %c0_7 = arith.constant 0 : index
    %9 = vector.load %arg3[%c0_6, %c0_7] : memref<1x512xf32, #tpu.memory_space<vmem>>, vector<1x512xf32>
    %10 = arith.mulf %3, %3 : vector<128x512xf32>
    %cst_8 = arith.constant dense<0.000000e+00> : vector<512xf32>
    %11 = vector.multi_reduction <add>, %10, %cst_8 [0] : vector<128x512xf32> to vector<512xf32>
    %12 = vector.shape_cast %11 : vector<512xf32> to vector<1x512xf32>
    %13 = arith.addf %9, %12 : vector<1x512xf32>
    %c0_9 = arith.constant 0 : index
    %c0_10 = arith.constant 0 : index
    %14 = vector.load %arg3[%c0_9, %c0_10] : memref<1x512xf32, #tpu.memory_space<vmem>>, vector<1x512xf32>
    tpu.vector_store %arg3[%c0_9, %c0_10], %13 {strides = array<i32>} : memref<1x512xf32, #tpu.memory_space<vmem>>, vector<1x512xf32>,
    return
  }
  func.func @transform_0(%arg0: i32) -> (i32, i32) {
    %c0_i32 = arith.constant 0 : i32
    %c0_i32_0 = arith.constant 0 : i32
    return %arg0, %c0_i32 : i32, i32
  }
  func.func @transform_1(%arg0: i32) -> (i32, i32) {
    %c0_i32 = arith.constant 0 : i32
    %c0_i32_0 = arith.constant 0 : i32
    %c0_i32_1 = arith.constant 0 : i32
    return %c0_i32, %c0_i32_0 : i32, i32
  }
  func.func @transform_2(%arg0: i32) -> (i32, i32) {
    %c0_i32 = arith.constant 0 : i32
    %c0_i32_0 = arith.constant 0 : i32
    %c0_i32_1 = arith.constant 0 : i32
    return %c0_i32, %c0_i32_0 : i32, i32
  }
}

module attributes {stable_mosaic.version = 11 : i64} {
  func.func @_bn_apply_kernel(%arg0: i32, %arg1: memref<128x512xf32, #tpu.memory_space<vmem>>, %arg2: memref<1x512xf32, #tpu.memory_space<vmem>>, %arg3: memref<1x512xf32, #tpu.memory_space<vmem>>, %arg4: memref<128x512xf32, #tpu.memory_space<vmem>>) attributes {dimension_semantics = [#tpu.dimension_semantics<parallel>], iteration_bounds = array<i64: 1>, scalar_prefetch = 0 : i64, scratch_operands = 0 : i64, tpu.core_type = #tpu.core_type<tc>, window_params = [{transform_indices = @transform_0, window_bounds = array<i64: 128, 512>}, {pipeline_mode = #tpu.pipeline_mode<synchronous>, transform_indices = @transform_1, window_bounds = array<i64: 1, 512>}, {pipeline_mode = #tpu.pipeline_mode<synchronous>, transform_indices = @transform_2, window_bounds = array<i64: 1, 512>}, {transform_indices = @transform_3, window_bounds = array<i64: 128, 512>}]} {
    %c0 = arith.constant 0 : index
    %c0_0 = arith.constant 0 : index
    %0 = vector.load %arg1[%c0, %c0_0] : memref<128x512xf32, #tpu.memory_space<vmem>>, vector<128x512xf32>
    %c0_1 = arith.constant 0 : index
    %c0_2 = arith.constant 0 : index
    %1 = vector.load %arg2[%c0_1, %c0_2] : memref<1x512xf32, #tpu.memory_space<vmem>>, vector<1x512xf32>
    %2 = vector.broadcast %1 : vector<1x512xf32> to vector<128x512xf32>
    %3 = arith.mulf %0, %2 : vector<128x512xf32>
    %c0_3 = arith.constant 0 : index
    %c0_4 = arith.constant 0 : index
    %4 = vector.load %arg3[%c0_3, %c0_4] : memref<1x512xf32, #tpu.memory_space<vmem>>, vector<1x512xf32>
    %5 = vector.broadcast %4 : vector<1x512xf32> to vector<128x512xf32>
    %6 = arith.addf %3, %5 : vector<128x512xf32>
    %cst = arith.constant 0.000000e+00 : f32
    %7 = vector.broadcast %cst : f32 to vector<128x512xf32>
    %8 = arith.maximumf %6, %7 : vector<128x512xf32>
    %c0_5 = arith.constant 0 : index
    %c0_6 = arith.constant 0 : index
    %9 = vector.load %arg4[%c0_5, %c0_6] : memref<128x512xf32, #tpu.memory_space<vmem>>, vector<128x512xf32>
    tpu.vector_store %arg4[%c0_5, %c0_6], %8 {strides = array<i32>} : memref<128x512xf32, #tpu.memory_space<vmem>>, vector<128x512xf32>,
    return
  }
  func.func @transform_0(%arg0: i32) -> (i32, i32) {
    %c0_i32 = arith.constant 0 : i32
    %c0_i32_0 = arith.constant 0 : i32
    return %arg0, %c0_i32 : i32, i32
  }
  func.func @transform_1(%arg0: i32) -> (i32, i32) {
    %c0_i32 = arith.constant 0 : i32
    %c0_i32_0 = arith.constant 0 : i32
    %c0_i32_1 = arith.constant 0 : i32
    return %c0_i32, %c0_i32_0 : i32, i32
  }
  func.func @transform_2(%arg0: i32) -> (i32, i32) {
    %c0_i32 = arith.constant 0 : i32
    %c0_i32_0 = arith.constant 0 : i32
    %c0_i32_1 = arith.constant 0 : i32
    return %c0_i32, %c0_i32_0 : i32, i32
  }
  func.func @transform_3(%arg0: i32) -> (i32, i32) {
    %c0_i32 = arith.constant 0 : i32
    %c0_i32_0 = arith.constant 0 : i32
    return %arg0, %c0_i32 : i32, i32
  }
}

</mosaic_0001>

<llo_original>
// kernel: _lambda_.5
$region0: #{_lambda_.5}
  #allocation0 [shape = 'u32[]', space=smem, size = 0x4, offset = 0x4, fixed_abs, tag = 'smem constant byte address 0x4 - core index']
  #allocation1 [shape = 'u32[144,128]{1,0:T(1,128)}', space=vmem, size = 0x12000, scoped, tag = 'internal scratch']
  %s0 = inlined_call_operand.hbm [shape: f32[512,4], index: 0, kind: input, shape index: {}]
  %s1 = inlined_call_operand.hbm [shape: f32[4,128], index: 1, kind: input, shape index: {}]
  %s2 = inlined_call_operand.hbm [shape: f32[512,128], index: 2, kind: output, shape index: {}]
  %s3 = sld [smem:[#allocation0]]
  $region26: #{_lambda_.5} parent=0
    _
  %s5 = ssub.s32 1, %s3
  %s6 = scalar_select 0, %s5, %s3
  $region1: #{_lambda_.5} parent=0
    #allocation2 [shape = 'u8[262144]{0}', space=vmem, size = 0x40000, scoped, tag = 'input window, operand 0, single buffered']
    #allocation3 [shape = 's32[1]{0}', space=sflag, size = 0x4, scoped, tag = 'scoped memory for _lambda_.5']
    #allocation4 [shape = 's32[1]{0}', space=sflag, size = 0x4, scoped, tag = 'scoped memory for _lambda_.5']
    #allocation5 [shape = 'u8[2048]{0}', space=vmem, size = 0x800, scoped, tag = 'input window, operand 1, single buffered']
    #allocation6 [shape = 's32[1]{0}', space=sflag, size = 0x4, scoped, tag = 'scoped memory for _lambda_.5']
    #allocation7 [shape = 'u8[262144]{0}', space=vmem, size = 0x40000, scoped, tag = 'output window, operand 0, single buffered']
    %7 = vsyncpa [#allocation3], 0
    %8 = vsyncpa [#allocation6], 0
    %9 = vsyncpa [#allocation4], 0
    // Predicated region
    $region2: #{_lambda_.5} parent=1 // pred_check
      _
    $region3: #{_lambda_.5} parent=1 // pred_check_branch
      %11 = sbr.rel (0) target = $region5
    $region4: #{_lambda_.5} parent=1 // pred_region
      %s13 = ssub.s32 8192, 8192
      %14 = vsyncadd [#allocation3], %s13
      %s15 = sshll.u32 [#allocation2], 4
      %s16 = int_to_ptr.vmem [resolvable:$true] %s15
      %21 = dma.hbm_to_vmem [thread:$0]  %s0, 8192, %s16, [#allocation3], 128, 128, 8
    $region5: #{_lambda_.5} parent=1 // pred_fallthru
      _
    // Predicated region
    $region6: #{_lambda_.5} parent=1 // pred_check
      _
    $region7: #{_lambda_.5} parent=1 // pred_check_branch
      %23 = sbr.rel (0) target = $region9
    $region8: #{_lambda_.5} parent=1 // pred_region
      %s25 = ssub.s32 64, 64
      %26 = vsyncadd [#allocation6], %s25
      %s28 = sshll.u32 [#allocation5], 4
      %s29 = int_to_ptr.vmem [resolvable:$true] %s28
      %31 = dma.hbm_to_vmem [thread:$0]  %s1, 64, %s29, [#allocation6]
    $region9: #{_lambda_.5} parent=1 // pred_fallthru
      _
    // Predicated region
    $region10: #{_lambda_.5} parent=1 // pred_check
      _
    $region11: #{_lambda_.5} parent=1 // pred_check_branch
      %33 = sbr.rel (0) target = $region13
    $region12: #{_lambda_.5} parent=1 // pred_region
      %34 = dma.done [#allocation3], 8192
    $region13: #{_lambda_.5} parent=1 // pred_fallthru
      _
    // Predicated region
    $region14: #{_lambda_.5} parent=1 // pred_check
      _
    $region15: #{_lambda_.5} parent=1 // pred_check_branch
      %36 = sbr.rel (0) target = $region17
    $region16: #{_lambda_.5} parent=1 // pred_region
      %37 = dma.done [#allocation6], 64
    $region17: #{_lambda_.5} parent=1 // pred_fallthru
      _
    %v38 = vld [vmem:[#allocation2] sm:$0xff]
    %v39 = vld [vmem:[#allocation2 + $0x8] sm:$0xff]
    %v40 = vld [vmem:[#allocation2 + $0x10] sm:$0xff]
    %v41 = vld [vmem:[#allocation2 + $0x18] sm:$0xff]
    %v42 = vld [vmem:[#allocation2 + $0x20] sm:$0xff]
    %v43 = vld [vmem:[#allocation2 + $0x28] sm:$0xff]
    %v44 = vld [vmem:[#allocation2 + $0x30] sm:$0xff]
    %v45 = vld [vmem:[#allocation2 + $0x38] sm:$0xff]
    %v46 = vld [vmem:[#allocation2 + $0x40] sm:$0xff]
    %v47 = vld [vmem:[#allocation2 + $0x48] sm:$0xff]
    %v48 = vld [vmem:[#allocation2 + $0x50] sm:$0xff]
    %v49 = vld [vmem:[#allocation2 + $0x58] sm:$0xff]
    %v50 = vld [vmem:[#allocation2 + $0x60] sm:$0xff]
    %v51 = vld [vmem:[#allocation2 + $0x68] sm:$0xff]
    %v52 = vld [vmem:[#allocation2 + $0x70] sm:$0xff]
    %v53 = vld [vmem:[#allocation2 + $0x78] sm:$0xff]
    %v54 = vld [vmem:[#allocation2 + $0x80] sm:$0xff]
    %v55 = vld [vmem:[#allocation2 + $0x88] sm:$0xff]
    %v56 = vld [vmem:[#allocation2 + $0x90] sm:$0xff]
    %v57 = vld [vmem:[#allocation2 + $0x98] sm:$0xff]
    %v58 = vld [vmem:[#allocation2 + $0xa0] sm:$0xff]
    %v59 = vld [vmem:[#allocation2 + $0xa8] sm:$0xff]
    %v60 = vld [vmem:[#allocation2 + $0xb0] sm:$0xff]
    %v61 = vld [vmem:[#allocation2 + $0xb8] sm:$0xff]
    %v62 = vld [vmem:[#allocation2 + $0xc0] sm:$0xff]
    %v63 = vld [vmem:[#allocation2 + $0xc8] sm:$0xff]
    %v64 = vld [vmem:[#allocation2 + $0xd0] sm:$0xff]
    %v65 = vld [vmem:[#allocation2 + $0xd8] sm:$0xff]
    %v66 = vld [vmem:[#allocation2 + $0xe0] sm:$0xff]
    %v67 = vld [vmem:[#allocation2 + $0xe8] sm:$0xff]
    %v68 = vld [vmem:[#allocation2 + $0xf0] sm:$0xff]
    %v69 = vld [vmem:[#allocation2 + $0xf8] sm:$0xff]
    %v70 = vld [vmem:[#allocation2 + $0x100] sm:$0xff]
    %v71 = vld [vmem:[#allocation2 + $0x108] sm:$0xff]
    %v72 = vld [vmem:[#allocation2 + $0x110] sm:$0xff]
    %v73 = vld [vmem:[#allocation2 + $0x118] sm:$0xff]
    %v74 = vld [vmem:[#allocation2 + $0x120] sm:$0xff]
    %v75 = vld [vmem:[#allocation2 + $0x128] sm:$0xff]
    %v76 = vld [vmem:[#allocation2 + $0x130] sm:$0xff]
    %v77 = vld [vmem:[#allocation2 + $0x138] sm:$0xff]
    %v78 = vld [vmem:[#allocation2 + $0x140] sm:$0xff]
    %v79 = vld [vmem:[#allocation2 + $0x148] sm:$0xff]
    %v80 = vld [vmem:[#allocation2 + $0x150] sm:$0xff]
    %v81 = vld [vmem:[#allocation2 + $0x158] sm:$0xff]
    %v82 = vld [vmem:[#allocation2 + $0x160] sm:$0xff]
    %v83 = vld [vmem:[#allocation2 + $0x168] sm:$0xff]
    %v84 = vld [vmem:[#allocation2 + $0x170] sm:$0xff]
    %v85 = vld [vmem:[#allocation2 + $0x178] sm:$0xff]
    %v86 = vld [vmem:[#allocation2 + $0x180] sm:$0xff]
    %v87 = vld [vmem:[#allocation2 + $0x188] sm:$0xff]
    %v88 = vld [vmem:[#allocation2 + $0x190] sm:$0xff]
    %v89 = vld [vmem:[#allocation2 + $0x198] sm:$0xff]
    %v90 = vld [vmem:[#allocation2 + $0x1a0] sm:$0xff]
    %v91 = vld [vmem:[#allocation2 + $0x1a8] sm:$0xff]
    %v92 = vld [vmem:[#allocation2 + $0x1b0] sm:$0xff]
    %v93 = vld [vmem:[#allocation2 + $0x1b8] sm:$0xff]
    %v94 = vld [vmem:[#allocation2 + $0x1c0] sm:$0xff]
    %v95 = vld [vmem:[#allocation2 + $0x1c8] sm:$0xff]
    %v96 = vld [vmem:[#allocation2 + $0x1d0] sm:$0xff]
    %v97 = vld [vmem:[#allocation2 + $0x1d8] sm:$0xff]
    %v98 = vld [vmem:[#allocation2 + $0x1e0] sm:$0xff]
    %v99 = vld [vmem:[#allocation2 + $0x1e8] sm:$0xff]
    %v100 = vld [vmem:[#allocation2 + $0x1f0] sm:$0xff]
    %v101 = vld [vmem:[#allocation2 + $0x1f8] sm:$0xff]
    %v102 = vld [vmem:[#allocation5] sm:$0xf]
    %vm103 = vcmask 31744
    %v105 = vsel %vm103, %v38, 0
    %v108 = vsel %vm103, %v39, 0
    %v111 = vsel %vm103, %v40, 0
    %v114 = vsel %vm103, %v41, 0
    %v117 = vsel %vm103, %v42, 0
    %v120 = vsel %vm103, %v43, 0
    %v123 = vsel %vm103, %v44, 0
    %v126 = vsel %vm103, %v45, 0
    %v129 = vsel %vm103, %v46, 0
    %v132 = vsel %vm103, %v47, 0
    %v135 = vsel %vm103, %v48, 0
    %v138 = vsel %vm103, %v49, 0
    %v141 = vsel %vm103, %v50, 0
    %v144 = vsel %vm103, %v51, 0
    %v147 = vsel %vm103, %v52, 0
    %v150 = vsel %vm103, %v53, 0
    %v153 = vsel %vm103, %v54, 0
    %v156 = vsel %vm103, %v55, 0
    %v159 = vsel %vm103, %v56, 0
    %v162 = vsel %vm103, %v57, 0
    %v165 = vsel %vm103, %v58, 0
    %v168 = vsel %vm103, %v59, 0
    %v171 = vsel %vm103, %v60, 0
    %v174 = vsel %vm103, %v61, 0
    %v177 = vsel %vm103, %v62, 0
    %v180 = vsel %vm103, %v63, 0
    %v183 = vsel %vm103, %v64, 0
    %v186 = vsel %vm103, %v65, 0
    %v189 = vsel %vm103, %v66, 0
    %v192 = vsel %vm103, %v67, 0
    %v195 = vsel %vm103, %v68, 0
    %v198 = vsel %vm103, %v69, 0
    %v201 = vsel %vm103, %v70, 0
    %v204 = vsel %vm103, %v71, 0
    %v207 = vsel %vm103, %v72, 0
    %v210 = vsel %vm103, %v73, 0
    %v213 = vsel %vm103, %v74, 0
    %v216 = vsel %vm103, %v75, 0
    %v219 = vsel %vm103, %v76, 0
    %v222 = vsel %vm103, %v77, 0
    %v225 = vsel %vm103, %v78, 0
    %v228 = vsel %vm103, %v79, 0
    %v231 = vsel %vm103, %v80, 0
    %v234 = vsel %vm103, %v81, 0
    %v237 = vsel %vm103, %v82, 0
    %v240 = vsel %vm103, %v83, 0
    %v243 = vsel %vm103, %v84, 0
    %v246 = vsel %vm103, %v85, 0
    %v249 = vsel %vm103, %v86, 0
    %v252 = vsel %vm103, %v87, 0
    %v255 = vsel %vm103, %v88, 0
    %v258 = vsel %vm103, %v89, 0
    %v261 = vsel %vm103, %v90, 0
    %v264 = vsel %vm103, %v91, 0
    %v267 = vsel %vm103, %v92, 0
    %v270 = vsel %vm103, %v93, 0
    %v273 = vsel %vm103, %v94, 0
    %v276 = vsel %vm103, %v95, 0
    %v279 = vsel %vm103, %v96, 0
    %v282 = vsel %vm103, %v97, 0
    %v285 = vsel %vm103, %v98, 0
    %v288 = vsel %vm103, %v99, 0
    %v291 = vsel %vm103, %v100, 0
    %v294 = vsel %vm103, %v101, 0
    %vm296 = vcmask 1043456
    %v298 = vsel %vm296, %v102, 0
    %300 = vmatprep.subr.mxu0 0.0
    %301 = vmatpush1.msra.mxu0 %v298
    %302 = vmatprep.subr.mxu0 0.0
    %303 = vmatpush1.msra.mxu0 0.0
    %304 = vmatprep.subr.mxu0 0.0
    %305 = vmatpush1.msra.mxu0 0.0
    %306 = vmatprep.subr.mxu0 0.0
    %307 = vmatpush1.msra.mxu0 0.0
    %308 = vmatprep.subr.mxu0 0.0
    %309 = vmatpush1.msra.mxu0 0.0
    %310 = vmatprep.subr.mxu0 0.0
    %311 = vmatpush1.msra.mxu0 0.0
    %312 = vmatprep.subr.mxu0 0.0
    %313 = vmatpush1.msra.mxu0 0.0
    %314 = vmatprep.subr.mxu0 0.0
    %315 = vmatpush1.msra.mxu0 0.0
    %316 = vmatprep.subr.mxu0 0.0
    %317 = vmatpush1.msra.mxu0 0.0
    %318 = vmatprep.subr.mxu0 0.0
    %319 = vmatpush1.msra.mxu0 0.0
    %320 = vmatprep.subr.mxu0 0.0
    %321 = vmatpush1.msra.mxu0 0.0
    %322 = vmatprep.subr.mxu0 0.0
    %323 = vmatpush1.msra.mxu0 0.0
    %324 = vmatprep.subr.mxu0 0.0
    %325 = vmatpush1.msra.mxu0 0.0
    %326 = vmatprep.subr.mxu0 0.0
    %327 = vmatpush1.msra.mxu0 0.0
    %328 = vmatprep.subr.mxu0 0.0
    %329 = vmatpush1.msra.mxu0 0.0
    %330 = vmatprep.subr.mxu0 0.0
    %331 = vmatpush1.msra.mxu0 0.0
    %332 = vmatprep.subr.mxu0 0.0
    %333 = vmatpush1.msra.mxu0 0.0
    %334 = vmatprep.subr.mxu0 0.0
    %335 = vmatpush1.msra.mxu0 0.0
    %336 = vmatprep.subr.mxu0 0.0
    %337 = vmatpush1.msra.mxu0 0.0
    %338 = vmatprep.subr.mxu0 0.0
    %339 = vmatpush1.msra.mxu0 0.0
    %340 = vmatprep.subr.mxu0 0.0
    %341 = vmatpush1.msra.mxu0 0.0
    %342 = vmatprep.subr.mxu0 0.0
    %343 = vmatpush1.msra.mxu0 0.0
    %344 = vmatprep.subr.mxu0 0.0
    %345 = vmatpush1.msra.mxu0 0.0
    %346 = vmatprep.subr.mxu0 0.0
    %347 = vmatpush1.msra.mxu0 0.0
    %348 = vmatprep.subr.mxu0 0.0
    %349 = vmatpush1.msra.mxu0 0.0
    %350 = vmatprep.subr.mxu0 0.0
    %351 = vmatpush1.msra.mxu0 0.0
    %352 = vmatprep.subr.mxu0 0.0
    %353 = vmatpush1.msra.mxu0 0.0
    %354 = vmatprep.subr.mxu0 0.0
    %355 = vmatpush1.msra.mxu0 0.0
    %356 = vmatprep.subr.mxu0 0.0
    %357 = vmatpush1.msra.mxu0 0.0
    %358 = vmatprep.subr.mxu0 0.0
    %359 = vmatpush1.msra.mxu0 0.0
    %360 = vmatprep.subr.mxu0 0.0
    %361 = vmatpush1.msra.mxu0 0.0
    %362 = vmatprep.subr.mxu0 0.0
    %363 = vmatpush1.msra.mxu0 0.0
    %364 = vmatprep.mubr.f32.mxu0 0.0
    %365 = vmatmul.mubr.f32.gmra.mrb[0].mxu0 %v105
    %v366 = vpop.f32.mrb[0].mxu0
    %v367 = vadd.f32 0.0, %v366
    %v368 = vpop.f32.mrb[0].mxu0
    %369 = vmatprep.mubr.f32.mxu0 0.0
    %370 = vmatmul.mubr.f32.gmra.mrb[0].mxu0 %v108
    %v371 = vpop.f32.mrb[0].mxu0
    %v372 = vadd.f32 0.0, %v371
    %v373 = vpop.f32.mrb[0].mxu0
    %374 = vmatprep.mubr.f32.mxu0 0.0
    %375 = vmatmul.mubr.f32.gmra.mrb[0].mxu0 %v111
    %v376 = vpop.f32.mrb[0].mxu0
    %v377 = vadd.f32 0.0, %v376
    %v378 = vpop.f32.mrb[0].mxu0
    %379 = vmatprep.mubr.f32.mxu0 0.0
    %380 = vmatmul.mubr.f32.gmra.mrb[0].mxu0 %v114
    %v381 = vpop.f32.mrb[0].mxu0
    %v382 = vadd.f32 0.0, %v381
    %v383 = vpop.f32.mrb[0].mxu0
    %384 = vmatprep.mubr.f32.mxu0 0.0
    %385 = vmatmul.mubr.f32.gmra.mrb[0].mxu0 %v117
    %v386 = vpop.f32.mrb[0].mxu0
    %v387 = vadd.f32 0.0, %v386
    %v388 = vpop.f32.mrb[0].mxu0
    %389 = vmatprep.mubr.f32.mxu0 0.0
    %390 = vmatmul.mubr.f32.gmra.mrb[0].mxu0 %v120
    %v391 = vpop.f32.mrb[0].mxu0
    %v392 = vadd.f32 0.0, %v391
    %v393 = vpop.f32.mrb[0].mxu0
    %394 = vmatprep.mubr.f32.mxu0 0.0
    %395 = vmatmul.mubr.f32.gmra.mrb[0].mxu0 %v123
    %v396 = vpop.f32.mrb[0].mxu0
    %v397 = vadd.f32 0.0, %v396
    %v398 = vpop.f32.mrb[0].mxu0
    %399 = vmatprep.mubr.f32.mxu0 0.0
    %400 = vmatmul.mubr.f32.gmra.mrb[0].mxu0 %v126
    %v401 = vpop.f32.mrb[0].mxu0
    %v402 = vadd.f32 0.0, %v401
    %v403 = vpop.f32.mrb[0].mxu0
    %404 = vmatprep.mubr.f32.mxu0 0.0
    %405 = vmatmul.mubr.f32.gmra.mrb[0].mxu0 %v129
    %v406 = vpop.f32.mrb[0].mxu0
    %v407 = vadd.f32 0.0, %v406
    %v408 = vpop.f32.mrb[0].mxu0
    %409 = vmatprep.mubr.f32.mxu0 0.0
    %410 = vmatmul.mubr.f32.gmra.mrb[0].mxu0 %v132
    %v411 = vpop.f32.mrb[0].mxu0
    %v412 = vadd.f32 0.0, %v411
    %v413 = vpop.f32.mrb[0].mxu0
    %414 = vmatprep.mubr.f32.mxu0 0.0
    %415 = vmatmul.mubr.f32.gmra.mrb[0].mxu0 %v135
    %v416 = vpop.f32.mrb[0].mxu0
    %v417 = vadd.f32 0.0, %v416
    %v418 = vpop.f32.mrb[0].mxu0
    %419 = vmatprep.mubr.f32.mxu0 0.0
    %420 = vmatmul.mubr.f32.gmra.mrb[0].mxu0 %v138
    %v421 = vpop.f32.mrb[0].mxu0
    %v422 = vadd.f32 0.0, %v421
    %v423 = vpop.f32.mrb[0].mxu0
    %424 = vmatprep.mubr.f32.mxu0 0.0
    %425 = vmatmul.mubr.f32.gmra.mrb[0].mxu0 %v141
    %v426 = vpop.f32.mrb[0].mxu0
    %v427 = vadd.f32 0.0, %v426
    %v428 = vpop.f32.mrb[0].mxu0
    %429 = vmatprep.mubr.f32.mxu0 0.0
    %430 = vmatmul.mubr.f32.gmra.mrb[0].mxu0 %v144
    %v431 = vpop.f32.mrb[0].mxu0
    %v432 = vadd.f32 0.0, %v431
    %v433 = vpop.f32.mrb[0].mxu0
    %434 = vmatprep.mubr.f32.mxu0 0.0
    %435 = vmatmul.mubr.f32.gmra.mrb[0].mxu0 %v147
    %v436 = vpop.f32.mrb[0].mxu0
    %v437 = vadd.f32 0.0, %v436
    %v438 = vpop.f32.mrb[0].mxu0
    %439 = vmatprep.mubr.f32.mxu0 0.0
    %440 = vmatmul.mubr.f32.gmra.mrb[0].mxu0 %v150
    %v441 = vpop.f32.mrb[0].mxu0
    %v442 = vadd.f32 0.0, %v441
    %v443 = vpop.f32.mrb[0].mxu0
    %444 = vmatprep.mubr.f32.mxu0 0.0
    %445 = vmatmul.mubr.f32.gmra.mrb[0].mxu0 %v153
    %v446 = vpop.f32.mrb[0].mxu0
    %v447 = vadd.f32 0.0, %v446
    %v448 = vpop.f32.mrb[0].mxu0
    %449 = vmatprep.mubr.f32.mxu0 0.0
    %450 = vmatmul.mubr.f32.gmra.mrb[0].mxu0 %v156
    %v451 = vpop.f32.mrb[0].mxu0
    %v452 = vadd.f32 0.0, %v451
    %v453 = vpop.f32.mrb[0].mxu0
    %454 = vmatprep.mubr.f32.mxu0 0.0
    %455 = vmatmul.mubr.f32.gmra.mrb[0].mxu0 %v159
    %v456 = vpop.f32.mrb[0].mxu0
    %v457 = vadd.f32 0.0, %v456
    %v458 = vpop.f32.mrb[0].mxu0
    %459 = vmatprep.mubr.f32.mxu0 0.0
    %460 = vmatmul.mubr.f32.gmra.mrb[0].mxu0 %v162
    %v461 = vpop.f32.mrb[0].mxu0
    %v462 = vadd.f32 0.0, %v461
    %v463 = vpop.f32.mrb[0].mxu0
    %464 = vmatprep.mubr.f32.mxu0 0.0
    %465 = vmatmul.mubr.f32.gmra.mrb[0].mxu0 %v165
    %v466 = vpop.f32.mrb[0].mxu0
    %v467 = vadd.f32 0.0, %v466
    %v468 = vpop.f32.mrb[0].mxu0
    %469 = vmatprep.mubr.f32.mxu0 0.0
    %470 = vmatmul.mubr.f32.gmra.mrb[0].mxu0 %v168
    %v471 = vpop.f32.mrb[0].mxu0
    %v472 = vadd.f32 0.0, %v471
    %v473 = vpop.f32.mrb[0].mxu0
    %474 = vmatprep.mubr.f32.mxu0 0.0
    %475 = vmatmul.mubr.f32.gmra.mrb[0].mxu0 %v171
    %v476 = vpop.f32.mrb[0].mxu0
    %v477 = vadd.f32 0.0, %v476
    %v478 = vpop.f32.mrb[0].mxu0
    %479 = vmatprep.mubr.f32.mxu0 0.0
    %480 = vmatmul.mubr.f32.gmra.mrb[0].mxu0 %v174
    %v481 = vpop.f32.mrb[0].mxu0
    %v482 = vadd.f32 0.0, %v481
    %v483 = vpop.f32.mrb[0].mxu0
    %484 = vmatprep.mubr.f32.mxu0 0.0
    %485 = vmatmul.mubr.f32.gmra.mrb[0].mxu0 %v177
    %v486 = vpop.f32.mrb[0].mxu0
    %v487 = vadd.f32 0.0, %v486
    %v488 = vpop.f32.mrb[0].mxu0
    %489 = vmatprep.mubr.f32.mxu0 0.0
    %490 = vmatmul.mubr.f32.gmra.mrb[0].mxu0 %v180
    %v491 = vpop.f32.mrb[0].mxu0
    %v492 = vadd.f32 0.0, %v491
    %v493 = vpop.f32.mrb[0].mxu0
    %494 = vmatprep.mubr.f32.mxu0 0.0
    %495 = vmatmul.mubr.f32.gmra.mrb[0].mxu0 %v183
    %v496 = vpop.f32.mrb[0].mxu0
    %v497 = vadd.f32 0.0, %v496
    %v498 = vpop.f32.mrb[0].mxu0
    %499 = vmatprep.mubr.f32.mxu0 0.0
    %500 = vmatmul.mubr.f32.gmra.mrb[0].mxu0 %v186
    %v501 = vpop.f32.mrb[0].mxu0
    %v502 = vadd.f32 0.0, %v501
    %v503 = vpop.f32.mrb[0].mxu0
    %504 = vmatprep.mubr.f32.mxu0 0.0
    %505 = vmatmul.mubr.f32.gmra.mrb[0].mxu0 %v189
    %v506 = vpop.f32.mrb[0].mxu0
    %v507 = vadd.f32 0.0, %v506
    %v508 = vpop.f32.mrb[0].mxu0
    %509 = vmatprep.mubr.f32.mxu0 0.0
    %510 = vmatmul.mubr.f32.gmra.mrb[0].mxu0 %v192
    %v511 = vpop.f32.mrb[0].mxu0
    %v512 = vadd.f32 0.0, %v511
    %v513 = vpop.f32.mrb[0].mxu0
    %514 = vmatprep.mubr.f32.mxu0 0.0
    %515 = vmatmul.mubr.f32.gmra.mrb[0].mxu0 %v195
    %v516 = vpop.f32.mrb[0].mxu0
    %v517 = vadd.f32 0.0, %v516
    %v518 = vpop.f32.mrb[0].mxu0
    %519 = vmatprep.mubr.f32.mxu0 0.0
    %520 = vmatmul.mubr.f32.gmra.mrb[0].mxu0 %v198
    %v521 = vpop.f32.mrb[0].mxu0
    %v522 = vadd.f32 0.0, %v521
    %v523 = vpop.f32.mrb[0].mxu0
    %524 = vmatprep.mubr.f32.mxu0 0.0
    %525 = vmatmul.mubr.f32.gmra.mrb[0].mxu0 %v201
    %v526 = vpop.f32.mrb[0].mxu0
    %v527 = vadd.f32 0.0, %v526
    %v528 = vpop.f32.mrb[0].mxu0
    %529 = vmatprep.mubr.f32.mxu0 0.0
    %530 = vmatmul.mubr.f32.gmra.mrb[0].mxu0 %v204
    %v531 = vpop.f32.mrb[0].mxu0
    %v532 = vadd.f32 0.0, %v531
    %v533 = vpop.f32.mrb[0].mxu0
    %534 = vmatprep.mubr.f32.mxu0 0.0
    %535 = vmatmul.mubr.f32.gmra.mrb[0].mxu0 %v207
    %v536 = vpop.f32.mrb[0].mxu0
    %v537 = vadd.f32 0.0, %v536
    %v538 = vpop.f32.mrb[0].mxu0
    %539 = vmatprep.mubr.f32.mxu0 0.0
    %540 = vmatmul.mubr.f32.gmra.mrb[0].mxu0 %v210
    %v541 = vpop.f32.mrb[0].mxu0
    %v542 = vadd.f32 0.0, %v541
    %v543 = vpop.f32.mrb[0].mxu0
    %544 = vmatprep.mubr.f32.mxu0 0.0
    %545 = vmatmul.mubr.f32.gmra.mrb[0].mxu0 %v213
    %v546 = vpop.f32.mrb[0].mxu0
    %v547 = vadd.f32 0.0, %v546
    %v548 = vpop.f32.mrb[0].mxu0
    %549 = vmatprep.mubr.f32.mxu0 0.0
    %550 = vmatmul.mubr.f32.gmra.mrb[0].mxu0 %v216
    %v551 = vpop.f32.mrb[0].mxu0
    %v552 = vadd.f32 0.0, %v551
    %v553 = vpop.f32.mrb[0].mxu0
    %554 = vmatprep.mubr.f32.mxu0 0.0
    %555 = vmatmul.mubr.f32.gmra.mrb[0].mxu0 %v219
    %v556 = vpop.f32.mrb[0].mxu0
    %v557 = vadd.f32 0.0, %v556
    %v558 = vpop.f32.mrb[0].mxu0
    %559 = vmatprep.mubr.f32.mxu0 0.0
    %560 = vmatmul.mubr.f32.gmra.mrb[0].mxu0 %v222
    %v561 = vpop.f32.mrb[0].mxu0
    %v562 = vadd.f32 0.0, %v561
    %v563 = vpop.f32.mrb[0].mxu0
    %564 = vmatprep.mubr.f32.mxu0 0.0
    %565 = vmatmul.mubr.f32.gmra.mrb[0].mxu0 %v225
    %v566 = vpop.f32.mrb[0].mxu0
    %v567 = vadd.f32 0.0, %v566
    %v568 = vpop.f32.mrb[0].mxu0
    %569 = vmatprep.mubr.f32.mxu0 0.0
    %570 = vmatmul.mubr.f32.gmra.mrb[0].mxu0 %v228
    %v571 = vpop.f32.mrb[0].mxu0
    %v572 = vadd.f32 0.0, %v571
    %v573 = vpop.f32.mrb[0].mxu0
    %574 = vmatprep.mubr.f32.mxu0 0.0
    %575 = vmatmul.mubr.f32.gmra.mrb[0].mxu0 %v231
    %v576 = vpop.f32.mrb[0].mxu0
    %v577 = vadd.f32 0.0, %v576
    %v578 = vpop.f32.mrb[0].mxu0
    %579 = vmatprep.mubr.f32.mxu0 0.0
    %580 = vmatmul.mubr.f32.gmra.mrb[0].mxu0 %v234
    %v581 = vpop.f32.mrb[0].mxu0
    %v582 = vadd.f32 0.0, %v581
    %v583 = vpop.f32.mrb[0].mxu0
    %584 = vmatprep.mubr.f32.mxu0 0.0
    %585 = vmatmul.mubr.f32.gmra.mrb[0].mxu0 %v237
    %v586 = vpop.f32.mrb[0].mxu0
    %v587 = vadd.f32 0.0, %v586
    %v588 = vpop.f32.mrb[0].mxu0
    %589 = vmatprep.mubr.f32.mxu0 0.0
    %590 = vmatmul.mubr.f32.gmra.mrb[0].mxu0 %v240
    %v591 = vpop.f32.mrb[0].mxu0
    %v592 = vadd.f32 0.0, %v591
    %v593 = vpop.f32.mrb[0].mxu0
    %594 = vmatprep.mubr.f32.mxu0 0.0
    %595 = vmatmul.mubr.f32.gmra.mrb[0].mxu0 %v243
    %v596 = vpop.f32.mrb[0].mxu0
    %v597 = vadd.f32 0.0, %v596
    %v598 = vpop.f32.mrb[0].mxu0
    %599 = vmatprep.mubr.f32.mxu0 0.0
    %600 = vmatmul.mubr.f32.gmra.mrb[0].mxu0 %v246
    %v601 = vpop.f32.mrb[0].mxu0
    %v602 = vadd.f32 0.0, %v601
    %v603 = vpop.f32.mrb[0].mxu0
    %604 = vmatprep.mubr.f32.mxu0 0.0
    %605 = vmatmul.mubr.f32.gmra.mrb[0].mxu0 %v249
    %v606 = vpop.f32.mrb[0].mxu0
    %v607 = vadd.f32 0.0, %v606
    %v608 = vpop.f32.mrb[0].mxu0
    %609 = vmatprep.mubr.f32.mxu0 0.0
    %610 = vmatmul.mubr.f32.gmra.mrb[0].mxu0 %v252
    %v611 = vpop.f32.mrb[0].mxu0
    %v612 = vadd.f32 0.0, %v611
    %v613 = vpop.f32.mrb[0].mxu0
    %614 = vmatprep.mubr.f32.mxu0 0.0
    %615 = vmatmul.mubr.f32.gmra.mrb[0].mxu0 %v255
    %v616 = vpop.f32.mrb[0].mxu0
    %v617 = vadd.f32 0.0, %v616
    %v618 = vpop.f32.mrb[0].mxu0
    %619 = vmatprep.mubr.f32.mxu0 0.0
    %620 = vmatmul.mubr.f32.gmra.mrb[0].mxu0 %v258
    %v621 = vpop.f32.mrb[0].mxu0
    %v622 = vadd.f32 0.0, %v621
    %v623 = vpop.f32.mrb[0].mxu0
    %624 = vmatprep.mubr.f32.mxu0 0.0
    %625 = vmatmul.mubr.f32.gmra.mrb[0].mxu0 %v261
    %v626 = vpop.f32.mrb[0].mxu0
    %v627 = vadd.f32 0.0, %v626
    %v628 = vpop.f32.mrb[0].mxu0
    %629 = vmatprep.mubr.f32.mxu0 0.0
    %630 = vmatmul.mubr.f32.gmra.mrb[0].mxu0 %v264
    %v631 = vpop.f32.mrb[0].mxu0
    %v632 = vadd.f32 0.0, %v631
    %v633 = vpop.f32.mrb[0].mxu0
    %634 = vmatprep.mubr.f32.mxu0 0.0
    %635 = vmatmul.mubr.f32.gmra.mrb[0].mxu0 %v267
    %v636 = vpop.f32.mrb[0].mxu0
    %v637 = vadd.f32 0.0, %v636
    %v638 = vpop.f32.mrb[0].mxu0
    %639 = vmatprep.mubr.f32.mxu0 0.0
    %640 = vmatmul.mubr.f32.gmra.mrb[0].mxu0 %v270
    %v641 = vpop.f32.mrb[0].mxu0
    %v642 = vadd.f32 0.0, %v641
    %v643 = vpop.f32.mrb[0].mxu0
    %644 = vmatprep.mubr.f32.mxu0 0.0
    %645 = vmatmul.mubr.f32.gmra.mrb[0].mxu0 %v273
    %v646 = vpop.f32.mrb[0].mxu0
    %v647 = vadd.f32 0.0, %v646
    %v648 = vpop.f32.mrb[0].mxu0
    %649 = vmatprep.mubr.f32.mxu0 0.0
    %650 = vmatmul.mubr.f32.gmra.mrb[0].mxu0 %v276
    %v651 = vpop.f32.mrb[0].mxu0
    %v652 = vadd.f32 0.0, %v651
    %v653 = vpop.f32.mrb[0].mxu0
    %654 = vmatprep.mubr.f32.mxu0 0.0
    %655 = vmatmul.mubr.f32.gmra.mrb[0].mxu0 %v279
    %v656 = vpop.f32.mrb[0].mxu0
    %v657 = vadd.f32 0.0, %v656
    %v658 = vpop.f32.mrb[0].mxu0
    %659 = vmatprep.mubr.f32.mxu0 0.0
    %660 = vmatmul.mubr.f32.gmra.mrb[0].mxu0 %v282
    %v661 = vpop.f32.mrb[0].mxu0
    %v662 = vadd.f32 0.0, %v661
    %v663 = vpop.f32.mrb[0].mxu0
    %664 = vmatprep.mubr.f32.mxu0 0.0
    %665 = vmatmul.mubr.f32.gmra.mrb[0].mxu0 %v285
    %v666 = vpop.f32.mrb[0].mxu0
    %v667 = vadd.f32 0.0, %v666
    %v668 = vpop.f32.mrb[0].mxu0
    %669 = vmatprep.mubr.f32.mxu0 0.0
    %670 = vmatmul.mubr.f32.gmra.mrb[0].mxu0 %v288
    %v671 = vpop.f32.mrb[0].mxu0
    %v672 = vadd.f32 0.0, %v671
    %v673 = vpop.f32.mrb[0].mxu0
    %674 = vmatprep.mubr.f32.mxu0 0.0
    %675 = vmatmul.mubr.f32.gmra.mrb[0].mxu0 %v291
    %v676 = vpop.f32.mrb[0].mxu0
    %v677 = vadd.f32 0.0, %v676
    %v678 = vpop.f32.mrb[0].mxu0
    %679 = vmatprep.mubr.f32.mxu0 0.0
    %680 = vmatmul.mubr.f32.gmra.mrb[0].mxu0 %v294
    %v681 = vpop.f32.mrb[0].mxu0
    %v682 = vadd.f32 0.0, %v681
    %v683 = vpop.f32.mrb[0].mxu0
    %684 = vdwg.mxu0
    %685 = vst [vmem:[#allocation7] sm:$0xff] %v367
    %686 = vst [vmem:[#allocation7 + $0x8] sm:$0xff] %v372
    %687 = vst [vmem:[#allocation7 + $0x10] sm:$0xff] %v377
    %688 = vst [vmem:[#allocation7 + $0x18] sm:$0xff] %v382
    %689 = vst [vmem:[#allocation7 + $0x20] sm:$0xff] %v387
    %690 = vst [vmem:[#allocation7 + $0x28] sm:$0xff] %v392
    %691 = vst [vmem:[#allocation7 + $0x30] sm:$0xff] %v397
    %692 = vst [vmem:[#allocation7 + $0x38] sm:$0xff] %v402
    %693 = vst [vmem:[#allocation7 + $0x40] sm:$0xff] %v407
    %694 = vst [vmem:[#allocation7 + $0x48] sm:$0xff] %v412
    %695 = vst [vmem:[#allocation7 + $0x50] sm:$0xff] %v417
    %696 = vst [vmem:[#allocation7 + $0x58] sm:$0xff] %v422
    %697 = vst [vmem:[#allocation7 + $0x60] sm:$0xff] %v427
    %698 = vst [vmem:[#allocation7 + $0x68] sm:$0xff] %v432
    %699 = vst [vmem:[#allocation7 + $0x70] sm:$0xff] %v437
    %700 = vst [vmem:[#allocation7 + $0x78] sm:$0xff] %v442
    %701 = vst [vmem:[#allocation7 + $0x80] sm:$0xff] %v447
    %702 = vst [vmem:[#allocation7 + $0x88] sm:$0xff] %v452
    %703 = vst [vmem:[#allocation7 + $0x90] sm:$0xff] %v457
    %704 = vst [vmem:[#allocation7 + $0x98] sm:$0xff] %v462
    %705 = vst [vmem:[#allocation7 + $0xa0] sm:$0xff] %v467
    %706 = vst [vmem:[#allocation7 + $0xa8] sm:$0xff] %v472
    %707 = vst [vmem:[#allocation7 + $0xb0] sm:$0xff] %v477
    %708 = vst [vmem:[#allocation7 + $0xb8] sm:$0xff] %v482
    %709 = vst [vmem:[#allocation7 + $0xc0] sm:$0xff] %v487
    %710 = vst [vmem:[#allocation7 + $0xc8] sm:$0xff] %v492
    %711 = vst [vmem:[#allocation7 + $0xd0] sm:$0xff] %v497
    %712 = vst [vmem:[#allocation7 + $0xd8] sm:$0xff] %v502
    %713 = vst [vmem:[#allocation7 + $0xe0] sm:$0xff] %v507
    %714 = vst [vmem:[#allocation7 + $0xe8] sm:$0xff] %v512
    %715 = vst [vmem:[#allocation7 + $0xf0] sm:$0xff] %v517
    %716 = vst [vmem:[#allocation7 + $0xf8] sm:$0xff] %v522
    %717 = vst [vmem:[#allocation7 + $0x100] sm:$0xff] %v527
    %718 = vst [vmem:[#allocation7 + $0x108] sm:$0xff] %v532
    %719 = vst [vmem:[#allocation7 + $0x110] sm:$0xff] %v537
    %720 = vst [vmem:[#allocation7 + $0x118] sm:$0xff] %v542
    %721 = vst [vmem:[#allocation7 + $0x120] sm:$0xff] %v547
    %722 = vst [vmem:[#allocation7 + $0x128] sm:$0xff] %v552
    %723 = vst [vmem:[#allocation7 + $0x130] sm:$0xff] %v557
    %724 = vst [vmem:[#allocation7 + $0x138] sm:$0xff] %v562
    %725 = vst [vmem:[#allocation7 + $0x140] sm:$0xff] %v567
    %726 = vst [vmem:[#allocation7 + $0x148] sm:$0xff] %v572
    %727 = vst [vmem:[#allocation7 + $0x150] sm:$0xff] %v577
    %728 = vst [vmem:[#allocation7 + $0x158] sm:$0xff] %v582
    %729 = vst [vmem:[#allocation7 + $0x160] sm:$0xff] %v587
    %730 = vst [vmem:[#allocation7 + $0x168] sm:$0xff] %v592
    %731 = vst [vmem:[#allocation7 + $0x170] sm:$0xff] %v597
    %732 = vst [vmem:[#allocation7 + $0x178] sm:$0xff] %v602
    %733 = vst [vmem:[#allocation7 + $0x180] sm:$0xff] %v607
    %734 = vst [vmem:[#allocation7 + $0x188] sm:$0xff] %v612
    %735 = vst [vmem:[#allocation7 + $0x190] sm:$0xff] %v617
    %736 = vst [vmem:[#allocation7 + $0x198] sm:$0xff] %v622
    %737 = vst [vmem:[#allocation7 + $0x1a0] sm:$0xff] %v627
    %738 = vst [vmem:[#allocation7 + $0x1a8] sm:$0xff] %v632
    %739 = vst [vmem:[#allocation7 + $0x1b0] sm:$0xff] %v637
    %740 = vst [vmem:[#allocation7 + $0x1b8] sm:$0xff] %v642
    %741 = vst [vmem:[#allocation7 + $0x1c0] sm:$0xff] %v647
    %742 = vst [vmem:[#allocation7 + $0x1c8] sm:$0xff] %v652
    %743 = vst [vmem:[#allocation7 + $0x1d0] sm:$0xff] %v657
    %744 = vst [vmem:[#allocation7 + $0x1d8] sm:$0xff] %v662
    %745 = vst [vmem:[#allocation7 + $0x1e0] sm:$0xff] %v667
    %746 = vst [vmem:[#allocation7 + $0x1e8] sm:$0xff] %v672
    %747 = vst [vmem:[#allocation7 + $0x1f0] sm:$0xff] %v677
    %748 = vst [vmem:[#allocation7 + $0x1f8] sm:$0xff] %v682
    // Predicated region
    $region18: #{_lambda_.5} parent=1 // pred_check
      _
    $region19: #{_lambda_.5} parent=1 // pred_check_branch
      %750 = sbr.rel (0) target = $region21
    $region20: #{_lambda_.5} parent=1 // pred_region
      %s752 = ssub.s32 8192, 8192
      %753 = vsyncadd [#allocation4], %s752
      %s754 = sshll.u32 [#allocation7], 4
      %s755 = int_to_ptr.vmem [resolvable:$true] %s754
      %760 = dma.vmem_to_hbm [thread:$0]  %s755, 8192, %s2, [#allocation4], 128, 128, 8
    $region21: #{_lambda_.5} parent=1 // pred_fallthru
      _
    // Predicated region
    $region22: #{_lambda_.5} parent=1 // pred_check
      _
    $region23: #{_lambda_.5} parent=1 // pred_check_branch
      %762 = sbr.rel (0) target = $region25
    $region24: #{_lambda_.5} parent=1 // pred_region
      %763 = dma.done [#allocation4], 8192
    $region25: #{_lambda_.5} parent=1 // pred_fallthru
      _
    %764 = vsyncpa [#allocation3], 1
    %765 = vsyncpa [#allocation6], 1
    %766 = vsyncpa [#allocation4], 1

// kernel: _lambda_.6
$region0: #{_lambda_.6}
  #allocation0 [shape = 'u32[]', space=smem, size = 0x4, offset = 0x4, fixed_abs, tag = 'smem constant byte address 0x4 - core index']
  #allocation1 [shape = 'u32[144,128]{1,0:T(1,128)}', space=vmem, size = 0x12000, scoped, tag = 'internal scratch']
  %s0 = inlined_call_operand.hbm [shape: f32[64,256], index: 0, kind: input, shape index: {}]
  %s1 = inlined_call_operand.hbm [shape: f32[256,512], index: 1, kind: input, shape index: {}]
  %s2 = inlined_call_operand.hbm [shape: f32[64,512], index: 2, kind: output, shape index: {}]
  %s3 = sld [smem:[#allocation0]]
  $region26: #{_lambda_.6} parent=0
    _
  %s5 = ssub.s32 1, %s3
  %s6 = scalar_select 0, %s5, %s3
  $region1: #{_lambda_.6} parent=0
    #allocation2 [shape = 'u8[65536]{0}', space=vmem, size = 0x10000, scoped, tag = 'input window, operand 0, single buffered']
    #allocation3 [shape = 's32[1]{0}', space=sflag, size = 0x4, scoped, tag = 'scoped memory for _lambda_.6']
    #allocation4 [shape = 's32[1]{0}', space=sflag, size = 0x4, scoped, tag = 'scoped memory for _lambda_.6']
    #allocation5 [shape = 'u8[524288]{0}', space=vmem, size = 0x80000, scoped, tag = 'input window, operand 1, single buffered']
    #allocation6 [shape = 's32[1]{0}', space=sflag, size = 0x4, scoped, tag = 'scoped memory for _lambda_.6']
    #allocation7 [shape = 'u8[131072]{0}', space=vmem, size = 0x20000, scoped, tag = 'output window, operand 0, single buffered']
    %7 = vsyncpa [#allocation3], 0
    %8 = vsyncpa [#allocation6], 0
    %9 = vsyncpa [#allocation4], 0
    // Predicated region
    $region2: #{_lambda_.6} parent=1 // pred_check
      _
    $region3: #{_lambda_.6} parent=1 // pred_check_branch
      %11 = sbr.rel (0) target = $region5
    $region4: #{_lambda_.6} parent=1 // pred_region
      %s13 = ssub.s32 2048, 2048
      %14 = vsyncadd [#allocation3], %s13
      %s15 = sshll.u32 [#allocation2], 4
      %s16 = int_to_ptr.vmem [resolvable:$true] %s15
      %21 = dma.hbm_to_vmem [thread:$0]  %s0, 2048, %s16, [#allocation3], 256, 256, 16
    $region5: #{_lambda_.6} parent=1 // pred_fallthru
      _
    // Predicated region
    $region6: #{_lambda_.6} parent=1 // pred_check
      _
    $region7: #{_lambda_.6} parent=1 // pred_check_branch
      %23 = sbr.rel (0) target = $region9
    $region8: #{_lambda_.6} parent=1 // pred_region
      %s25 = ssub.s32 16384, 16384
      %26 = vsyncadd [#allocation6], %s25
      %s27 = sshll.u32 [#allocation5], 4
      %s28 = int_to_ptr.vmem [resolvable:$true] %s27
      %33 = dma.hbm_to_vmem [thread:$0]  %s1, 16384, %s28, [#allocation6], 512, 512, 32
    $region9: #{_lambda_.6} parent=1 // pred_fallthru
      _
    // Predicated region
    $region10: #{_lambda_.6} parent=1 // pred_check
      _
    $region11: #{_lambda_.6} parent=1 // pred_check_branch
      %35 = sbr.rel (0) target = $region13
    $region12: #{_lambda_.6} parent=1 // pred_region
      %36 = dma.done [#allocation3], 2048
    $region13: #{_lambda_.6} parent=1 // pred_fallthru
      _
    // Predicated region
    $region14: #{_lambda_.6} parent=1 // pred_check
      _
    $region15: #{_lambda_.6} parent=1 // pred_check_branch
      %38 = sbr.rel (0) target = $region17
    $region16: #{_lambda_.6} parent=1 // pred_region
      %39 = dma.done [#allocation6], 16384
    $region17: #{_lambda_.6} parent=1 // pred_fallthru
      _
    %v40 = vld [vmem:[#allocation2] sm:$0xff]
    %v41 = vld [vmem:[#allocation2 + $0x8] sm:$0xff]
    %v42 = vld [vmem:[#allocation2 + $0x10] sm:$0xff]
    %v43 = vld [vmem:[#allocation2 + $0x18] sm:$0xff]
    %v44 = vld [vmem:[#allocation2 + $0x20] sm:$0xff]
    %v45 = vld [vmem:[#allocation2 + $0x28] sm:$0xff]
    %v46 = vld [vmem:[#allocation2 + $0x30] sm:$0xff]
    %v47 = vld [vmem:[#allocation2 + $0x38] sm:$0xff]
    %v48 = vld [vmem:[#allocation2 + $0x40] sm:$0xff]
    %v49 = vld [vmem:[#allocation2 + $0x48] sm:$0xff]
    %v50 = vld [vmem:[#allocation2 + $0x50] sm:$0xff]
    %v51 = vld [vmem:[#allocation2 + $0x58] sm:$0xff]
    %v52 = vld [vmem:[#allocation2 + $0x60] sm:$0xff]
    %v53 = vld [vmem:[#allocation2 + $0x68] sm:$0xff]
    %v54 = vld [vmem:[#allocation2 + $0x70] sm:$0xff]
    %v55 = vld [vmem:[#allocation2 + $0x78] sm:$0xff]
    %v56 = vld [vmem:[#allocation5] sm:$0xff]
    %v57 = vld [vmem:[#allocation5 + $0x8] sm:$0xff]
    %v58 = vld [vmem:[#allocation5 + $0x10] sm:$0xff]
    %v59 = vld [vmem:[#allocation5 + $0x18] sm:$0xff]
    %v60 = vld [vmem:[#allocation5 + $0x20] sm:$0xff]
    %v61 = vld [vmem:[#allocation5 + $0x28] sm:$0xff]
    %v62 = vld [vmem:[#allocation5 + $0x30] sm:$0xff]
    %v63 = vld [vmem:[#allocation5 + $0x38] sm:$0xff]
    %v64 = vld [vmem:[#allocation5 + $0x40] sm:$0xff]
    %v65 = vld [vmem:[#allocation5 + $0x48] sm:$0xff]
    %v66 = vld [vmem:[#allocation5 + $0x50] sm:$0xff]
    %v67 = vld [vmem:[#allocation5 + $0x58] sm:$0xff]
    %v68 = vld [vmem:[#allocation5 + $0x60] sm:$0xff]
    %v69 = vld [vmem:[#allocation5 + $0x68] sm:$0xff]
    %v70 = vld [vmem:[#allocation5 + $0x70] sm:$0xff]
    %v71 = vld [vmem:[#allocation5 + $0x78] sm:$0xff]
    %v72 = vld [vmem:[#allocation5 + $0x80] sm:$0xff]
    %v73 = vld [vmem:[#allocation5 + $0x88] sm:$0xff]
    %v74 = vld [vmem:[#allocation5 + $0x90] sm:$0xff]
    %v75 = vld [vmem:[#allocation5 + $0x98] sm:$0xff]
    %v76 = vld [vmem:[#allocation5 + $0xa0] sm:$0xff]
    %v77 = vld [vmem:[#allocation5 + $0xa8] sm:$0xff]
    %v78 = vld [vmem:[#allocation5 + $0xb0] sm:$0xff]
    %v79 = vld [vmem:[#allocation5 + $0xb8] sm:$0xff]
    %v80 = vld [vmem:[#allocation5 + $0xc0] sm:$0xff]
    %v81 = vld [vmem:[#allocation5 + $0xc8] sm:$0xff]
    %v82 = vld [vmem:[#allocation5 + $0xd0] sm:$0xff]
    %v83 = vld [vmem:[#allocation5 + $0xd8] sm:$0xff]
    %v84 = vld [vmem:[#allocation5 + $0xe0] sm:$0xff]
    %v85 = vld [vmem:[#allocation5 + $0xe8] sm:$0xff]
    %v86 = vld [vmem:[#allocation5 + $0xf0] sm:$0xff]
    %v87 = vld [vmem:[#allocation5 + $0xf8] sm:$0xff]
    %v88 = vld [vmem:[#allocation5 + $0x100] sm:$0xff]
    %v89 = vld [vmem:[#allocation5 + $0x108] sm:$0xff]
    %v90 = vld [vmem:[#allocation5 + $0x110] sm:$0xff]
    %v91 = vld [vmem:[#allocation5 + $0x118] sm:$0xff]
    %v92 = vld [vmem:[#allocation5 + $0x120] sm:$0xff]
    %v93 = vld [vmem:[#allocation5 + $0x128] sm:$0xff]
    %v94 = vld [vmem:[#allocation5 + $0x130] sm:$0xff]
    %v95 = vld [vmem:[#allocation5 + $0x138] sm:$0xff]
    %v96 = vld [vmem:[#allocation5 + $0x140] sm:$0xff]
    %v97 = vld [vmem:[#allocation5 + $0x148] sm:$0xff]
    %v98 = vld [vmem:[#allocation5 + $0x150] sm:$0xff]
    %v99 = vld [vmem:[#allocation5 + $0x158] sm:$0xff]
    %v100 = vld [vmem:[#allocation5 + $0x160] sm:$0xff]
    %v101 = vld [vmem:[#allocation5 + $0x168] sm:$0xff]
    %v102 = vld [vmem:[#allocation5 + $0x170] sm:$0xff]
    %v103 = vld [vmem:[#allocation5 + $0x178] sm:$0xff]
    %v104 = vld [vmem:[#allocation5 + $0x180] sm:$0xff]
    %v105 = vld [vmem:[#allocation5 + $0x188] sm:$0xff]
    %v106 = vld [vmem:[#allocation5 + $0x190] sm:$0xff]
    %v107 = vld [vmem:[#allocation5 + $0x198] sm:$0xff]
    %v108 = vld [vmem:[#allocation5 + $0x1a0] sm:$0xff]
    %v109 = vld [vmem:[#allocation5 + $0x1a8] sm:$0xff]
    %v110 = vld [vmem:[#allocation5 + $0x1b0] sm:$0xff]
    %v111 = vld [vmem:[#allocation5 + $0x1b8] sm:$0xff]
    %v112 = vld [vmem:[#allocation5 + $0x1c0] sm:$0xff]
    %v113 = vld [vmem:[#allocation5 + $0x1c8] sm:$0xff]
    %v114 = vld [vmem:[#allocation5 + $0x1d0] sm:$0xff]
    %v115 = vld [vmem:[#allocation5 + $0x1d8] sm:$0xff]
    %v116 = vld [vmem:[#allocation5 + $0x1e0] sm:$0xff]
    %v117 = vld [vmem:[#allocation5 + $0x1e8] sm:$0xff]
    %v118 = vld [vmem:[#allocation5 + $0x1f0] sm:$0xff]
    %v119 = vld [vmem:[#allocation5 + $0x1f8] sm:$0xff]
    %v120 = vld [vmem:[#allocation5 + $0x200] sm:$0xff]
    %v121 = vld [vmem:[#allocation5 + $0x208] sm:$0xff]
    %v122 = vld [vmem:[#allocation5 + $0x210] sm:$0xff]
    %v123 = vld [vmem:[#allocation5 + $0x218] sm:$0xff]
    %v124 = vld [vmem:[#allocation5 + $0x220] sm:$0xff]
    %v125 = vld [vmem:[#allocation5 + $0x228] sm:$0xff]
    %v126 = vld [vmem:[#allocation5 + $0x230] sm:$0xff]
    %v127 = vld [vmem:[#allocation5 + $0x238] sm:$0xff]
    %v128 = vld [vmem:[#allocation5 + $0x240] sm:$0xff]
    %v129 = vld [vmem:[#allocation5 + $0x248] sm:$0xff]
    %v130 = vld [vmem:[#allocation5 + $0x250] sm:$0xff]
    %v131 = vld [vmem:[#allocation5 + $0x258] sm:$0xff]
    %v132 = vld [vmem:[#allocation5 + $0x260] sm:$0xff]
    %v133 = vld [vmem:[#allocation5 + $0x268] sm:$0xff]
    %v134 = vld [vmem:[#allocation5 + $0x270] sm:$0xff]
    %v135 = vld [vmem:[#allocation5 + $0x278] sm:$0xff]
    %v136 = vld [vmem:[#allocation5 + $0x280] sm:$0xff]
    %v137 = vld [vmem:[#allocation5 + $0x288] sm:$0xff]
    %v138 = vld [vmem:[#allocation5 + $0x290] sm:$0xff]
    %v139 = vld [vmem:[#allocation5 + $0x298] sm:$0xff]
    %v140 = vld [vmem:[#allocation5 + $0x2a0] sm:$0xff]
    %v141 = vld [vmem:[#allocation5 + $0x2a8] sm:$0xff]
    %v142 = vld [vmem:[#allocation5 + $0x2b0] sm:$0xff]
    %v143 = vld [vmem:[#allocation5 + $0x2b8] sm:$0xff]
    %v144 = vld [vmem:[#allocation5 + $0x2c0] sm:$0xff]
    %v145 = vld [vmem:[#allocation5 + $0x2c8] sm:$0xff]
    %v146 = vld [vmem:[#allocation5 + $0x2d0] sm:$0xff]
    %v147 = vld [vmem:[#allocation5 + $0x2d8] sm:$0xff]
    %v148 = vld [vmem:[#allocation5 + $0x2e0] sm:$0xff]
    %v149 = vld [vmem:[#allocation5 + $0x2e8] sm:$0xff]
    %v150 = vld [vmem:[#allocation5 + $0x2f0] sm:$0xff]
    %v151 = vld [vmem:[#allocation5 + $0x2f8] sm:$0xff]
    %v152 = vld [vmem:[#allocation5 + $0x300] sm:$0xff]
    %v153 = vld [vmem:[#allocation5 + $0x308] sm:$0xff]
    %v154 = vld [vmem:[#allocation5 + $0x310] sm:$0xff]
    %v155 = vld [vmem:[#allocation5 + $0x318] sm:$0xff]
    %v156 = vld [vmem:[#allocation5 + $0x320] sm:$0xff]
    %v157 = vld [vmem:[#allocation5 + $0x328] sm:$0xff]
    %v158 = vld [vmem:[#allocation5 + $0x330] sm:$0xff]
    %v159 = vld [vmem:[#allocation5 + $0x338] sm:$0xff]
    %v160 = vld [vmem:[#allocation5 + $0x340] sm:$0xff]
    %v161 = vld [vmem:[#allocation5 + $0x348] sm:$0xff]
    %v162 = vld [vmem:[#allocation5 + $0x350] sm:$0xff]
    %v163 = vld [vmem:[#allocation5 + $0x358] sm:$0xff]
    %v164 = vld [vmem:[#allocation5 + $0x360] sm:$0xff]
    %v165 = vld [vmem:[#allocation5 + $0x368] sm:$0xff]
    %v166 = vld [vmem:[#allocation5 + $0x370] sm:$0xff]
    %v167 = vld [vmem:[#allocation5 + $0x378] sm:$0xff]
    %v168 = vld [vmem:[#allocation5 + $0x380] sm:$0xff]
    %v169 = vld [vmem:[#allocation5 + $0x388] sm:$0xff]
    %v170 = vld [vmem:[#allocation5 + $0x390] sm:$0xff]
    %v171 = vld [vmem:[#allocation5 + $0x398] sm:$0xff]
    %v172 = vld [vmem:[#allocation5 + $0x3a0] sm:$0xff]
    %v173 = vld [vmem:[#allocation5 + $0x3a8] sm:$0xff]
    %v174 = vld [vmem:[#allocation5 + $0x3b0] sm:$0xff]
    %v175 = vld [vmem:[#allocation5 + $0x3b8] sm:$0xff]
    %v176 = vld [vmem:[#allocation5 + $0x3c0] sm:$0xff]
    %v177 = vld [vmem:[#allocation5 + $0x3c8] sm:$0xff]
    %v178 = vld [vmem:[#allocation5 + $0x3d0] sm:$0xff]
    %v179 = vld [vmem:[#allocation5 + $0x3d8] sm:$0xff]
    %v180 = vld [vmem:[#allocation5 + $0x3e0] sm:$0xff]
    %v181 = vld [vmem:[#allocation5 + $0x3e8] sm:$0xff]
    %v182 = vld [vmem:[#allocation5 + $0x3f0] sm:$0xff]
    %v183 = vld [vmem:[#allocation5 + $0x3f8] sm:$0xff]
    %184 = vmatprep.subr.mxu0 %v57
    %185 = vmatpush1.msra.mxu0 %v56
    %186 = vmatprep.subr.mxu0 %v61
    %187 = vmatpush1.msra.mxu0 %v60
    %188 = vmatprep.subr.mxu0 %v65
    %189 = vmatpush1.msra.mxu0 %v64
    %190 = vmatprep.subr.mxu0 %v69
    %191 = vmatpush1.msra.mxu0 %v68
    %192 = vmatprep.subr.mxu0 %v73
    %193 = vmatpush1.msra.mxu0 %v72
    %194 = vmatprep.subr.mxu0 %v77
    %195 = vmatpush1.msra.mxu0 %v76
    %196 = vmatprep.subr.mxu0 %v81
    %197 = vmatpush1.msra.mxu0 %v80
    %198 = vmatprep.subr.mxu0 %v85
    %199 = vmatpush1.msra.mxu0 %v84
    %200 = vmatprep.subr.mxu0 %v89
    %201 = vmatpush1.msra.mxu0 %v88
    %202 = vmatprep.subr.mxu0 %v93
    %203 = vmatpush1.msra.mxu0 %v92
    %204 = vmatprep.subr.mxu0 %v97
    %205 = vmatpush1.msra.mxu0 %v96
    %206 = vmatprep.subr.mxu0 %v101
    %207 = vmatpush1.msra.mxu0 %v100
    %208 = vmatprep.subr.mxu0 %v105
    %209 = vmatpush1.msra.mxu0 %v104
    %210 = vmatprep.subr.mxu0 %v109
    %211 = vmatpush1.msra.mxu0 %v108
    %212 = vmatprep.subr.mxu0 %v113
    %213 = vmatpush1.msra.mxu0 %v112
    %214 = vmatprep.subr.mxu0 %v117
    %215 = vmatpush1.msra.mxu0 %v116
    %216 = vmatprep.subr.mxu0 %v121
    %217 = vmatpush1.msra.mxu0 %v120
    %218 = vmatprep.subr.mxu0 %v125
    %219 = vmatpush1.msra.mxu0 %v124
    %220 = vmatprep.subr.mxu0 %v129
    %221 = vmatpush1.msra.mxu0 %v128
    %222 = vmatprep.subr.mxu0 %v133
    %223 = vmatpush1.msra.mxu0 %v132
    %224 = vmatprep.subr.mxu0 %v137
    %225 = vmatpush1.msra.mxu0 %v136
    %226 = vmatprep.subr.mxu0 %v141
    %227 = vmatpush1.msra.mxu0 %v140
    %228 = vmatprep.subr.mxu0 %v145
    %229 = vmatpush1.msra.mxu0 %v144
    %230 = vmatprep.subr.mxu0 %v149
    %231 = vmatpush1.msra.mxu0 %v148
    %232 = vmatprep.subr.mxu0 %v153
    %233 = vmatpush1.msra.mxu0 %v152
    %234 = vmatprep.subr.mxu0 %v157
    %235 = vmatpush1.msra.mxu0 %v156
    %236 = vmatprep.subr.mxu0 %v161
    %237 = vmatpush1.msra.mxu0 %v160
    %238 = vmatprep.subr.mxu0 %v165
    %239 = vmatpush1.msra.mxu0 %v164
    %240 = vmatprep.subr.mxu0 %v169
    %241 = vmatpush1.msra.mxu0 %v168
    %242 = vmatprep.subr.mxu0 %v173
    %243 = vmatpush1.msra.mxu0 %v172
    %244 = vmatprep.subr.mxu0 %v177
    %245 = vmatpush1.msra.mxu0 %v176
    %246 = vmatprep.subr.mxu0 %v181
    %247 = vmatpush1.msra.mxu0 %v180
    %248 = vmatprep.mubr.f32.mxu0 %v41
    %249 = vmatmul.mubr.f32.gmra.mrb[0].mxu0 %v40
    %v250 = vpop.f32.mrb[0].mxu0
    %v251 = vadd.f32 0.0, %v250
    %v252 = vpop.f32.mrb[0].mxu0
    %v253 = vadd.f32 0.0, %v252
    %254 = vmatprep.mubr.f32.mxu0 %v43
    %255 = vmatmul.mubr.f32.gmra.mrb[0].mxu0 %v42
    %v256 = vpop.f32.mrb[0].mxu0
    %v257 = vadd.f32 0.0, %v256
    %v258 = vpop.f32.mrb[0].mxu0
    %v259 = vadd.f32 0.0, %v258
    %260 = vmatprep.mubr.f32.mxu0 %v45
    %261 = vmatmul.mubr.f32.gmra.mrb[0].mxu0 %v44
    %v262 = vpop.f32.mrb[0].mxu0
    %v263 = vadd.f32 0.0, %v262
    %v264 = vpop.f32.mrb[0].mxu0
    %v265 = vadd.f32 0.0, %v264
    %266 = vmatprep.mubr.f32.mxu0 %v47
    %267 = vmatmul.mubr.f32.gmra.mrb[0].mxu0 %v46
    %v268 = vpop.f32.mrb[0].mxu0
    %v269 = vadd.f32 0.0, %v268
    %v270 = vpop.f32.mrb[0].mxu0
    %v271 = vadd.f32 0.0, %v270
    %272 = vmatprep.mubr.f32.mxu0 %v49
    %273 = vmatmul.mubr.f32.gmra.mrb[0].mxu0 %v48
    %v274 = vpop.f32.mrb[0].mxu0
    %v275 = vadd.f32 0.0, %v274
    %v276 = vpop.f32.mrb[0].mxu0
    %v277 = vadd.f32 0.0, %v276
    %278 = vmatprep.mubr.f32.mxu0 %v51
    %279 = vmatmul.mubr.f32.gmra.mrb[0].mxu0 %v50
    %v280 = vpop.f32.mrb[0].mxu0
    %v281 = vadd.f32 0.0, %v280
    %v282 = vpop.f32.mrb[0].mxu0
    %v283 = vadd.f32 0.0, %v282
    %284 = vmatprep.mubr.f32.mxu0 %v53
    %285 = vmatmul.mubr.f32.gmra.mrb[0].mxu0 %v52
    %v286 = vpop.f32.mrb[0].mxu0
    %v287 = vadd.f32 0.0, %v286
    %v288 = vpop.f32.mrb[0].mxu0
    %v289 = vadd.f32 0.0, %v288
    %290 = vmatprep.mubr.f32.mxu0 %v55
    %291 = vmatmul.mubr.f32.gmra.mrb[0].mxu0 %v54
    %v292 = vpop.f32.mrb[0].mxu0
    %v293 = vadd.f32 0.0, %v292
    %v294 = vpop.f32.mrb[0].mxu0
    %v295 = vadd.f32 0.0, %v294
    %296 = vdwg.mxu0
    %297 = vmatprep.subr.mxu0 %v59
    %298 = vmatpush1.msra.mxu0 %v58
    %299 = vmatprep.subr.mxu0 %v63
    %300 = vmatpush1.msra.mxu0 %v62
    %301 = vmatprep.subr.mxu0 %v67
    %302 = vmatpush1.msra.mxu0 %v66
    %303 = vmatprep.subr.mxu0 %v71
    %304 = vmatpush1.msra.mxu0 %v70
    %305 = vmatprep.subr.mxu0 %v75
    %306 = vmatpush1.msra.mxu0 %v74
    %307 = vmatprep.subr.mxu0 %v79
    %308 = vmatpush1.msra.mxu0 %v78
    %309 = vmatprep.subr.mxu0 %v83
    %310 = vmatpush1.msra.mxu0 %v82
    %311 = vmatprep.subr.mxu0 %v87
    %312 = vmatpush1.msra.mxu0 %v86
    %313 = vmatprep.subr.mxu0 %v91
    %314 = vmatpush1.msra.mxu0 %v90
    %315 = vmatprep.subr.mxu0 %v95
    %316 = vmatpush1.msra.mxu0 %v94
    %317 = vmatprep.subr.mxu0 %v99
    %318 = vmatpush1.msra.mxu0 %v98
    %319 = vmatprep.subr.mxu0 %v103
    %320 = vmatpush1.msra.mxu0 %v102
    %321 = vmatprep.subr.mxu0 %v107
    %322 = vmatpush1.msra.mxu0 %v106
    %323 = vmatprep.subr.mxu0 %v111
    %324 = vmatpush1.msra.mxu0 %v110
    %325 = vmatprep.subr.mxu0 %v115
    %326 = vmatpush1.msra.mxu0 %v114
    %327 = vmatprep.subr.mxu0 %v119
    %328 = vmatpush1.msra.mxu0 %v118
    %329 = vmatprep.subr.mxu0 %v123
    %330 = vmatpush1.msra.mxu0 %v122
    %331 = vmatprep.subr.mxu0 %v127
    %332 = vmatpush1.msra.mxu0 %v126
    %333 = vmatprep.subr.mxu0 %v131
    %334 = vmatpush1.msra.mxu0 %v130
    %335 = vmatprep.subr.mxu0 %v135
    %336 = vmatpush1.msra.mxu0 %v134
    %337 = vmatprep.subr.mxu0 %v139
    %338 = vmatpush1.msra.mxu0 %v138
    %339 = vmatprep.subr.mxu0 %v143
    %340 = vmatpush1.msra.mxu0 %v142
    %341 = vmatprep.subr.mxu0 %v147
    %342 = vmatpush1.msra.mxu0 %v146
    %343 = vmatprep.subr.mxu0 %v151
    %344 = vmatpush1.msra.mxu0 %v150
    %345 = vmatprep.subr.mxu0 %v155
    %346 = vmatpush1.msra.mxu0 %v154
    %347 = vmatprep.subr.mxu0 %v159
    %348 = vmatpush1.msra.mxu0 %v158
    %349 = vmatprep.subr.mxu0 %v163
    %350 = vmatpush1.msra.mxu0 %v162
    %351 = vmatprep.subr.mxu0 %v167
    %352 = vmatpush1.msra.mxu0 %v166
    %353 = vmatprep.subr.mxu0 %v171
    %354 = vmatpush1.msra.mxu0 %v170
    %355 = vmatprep.subr.mxu0 %v175
    %356 = vmatpush1.msra.mxu0 %v174
    %357 = vmatprep.subr.mxu0 %v179
    %358 = vmatpush1.msra.mxu0 %v178
    %359 = vmatprep.subr.mxu0 %v183
    %360 = vmatpush1.msra.mxu0 %v182
    %361 = vmatprep.mubr.f32.mxu0 %v41
    %362 = vmatmul.mubr.f32.gmra.mrb[0].mxu0 %v40
    %v363 = vpop.f32.mrb[0].mxu0
    %v364 = vadd.f32 0.0, %v363
    %v365 = vpop.f32.mrb[0].mxu0
    %v366 = vadd.f32 0.0, %v365
    %367 = vmatprep.mubr.f32.mxu0 %v43
    %368 = vmatmul.mubr.f32.gmra.mrb[0].mxu0 %v42
    %v369 = vpop.f32.mrb[0].mxu0
    %v370 = vadd.f32 0.0, %v369
    %v371 = vpop.f32.mrb[0].mxu0
    %v372 = vadd.f32 0.0, %v371
    %373 = vmatprep.mubr.f32.mxu0 %v45
    %374 = vmatmul.mubr.f32.gmra.mrb[0].mxu0 %v44
    %v375 = vpop.f32.mrb[0].mxu0
    %v376 = vadd.f32 0.0, %v375
    %v377 = vpop.f32.mrb[0].mxu0
    %v378 = vadd.f32 0.0, %v377
    %379 = vmatprep.mubr.f32.mxu0 %v47
    %380 = vmatmul.mubr.f32.gmra.mrb[0].mxu0 %v46
    %v381 = vpop.f32.mrb[0].mxu0
    %v382 = vadd.f32 0.0, %v381
    %v383 = vpop.f32.mrb[0].mxu0
    %v384 = vadd.f32 0.0, %v383
    %385 = vmatprep.mubr.f32.mxu0 %v49
    %386 = vmatmul.mubr.f32.gmra.mrb[0].mxu0 %v48
    %v387 = vpop.f32.mrb[0].mxu0
    %v388 = vadd.f32 0.0, %v387
    %v389 = vpop.f32.mrb[0].mxu0
    %v390 = vadd.f32 0.0, %v389
    %391 = vmatprep.mubr.f32.mxu0 %v51
    %392 = vmatmul.mubr.f32.gmra.mrb[0].mxu0 %v50
    %v393 = vpop.f32.mrb[0].mxu0
    %v394 = vadd.f32 0.0, %v393
    %v395 = vpop.f32.mrb[0].mxu0
    %v396 = vadd.f32 0.0, %v395
    %397 = vmatprep.mubr.f32.mxu0 %v53
    %398 = vmatmul.mubr.f32.gmra.mrb[0].mxu0 %v52
    %v399 = vpop.f32.mrb[0].mxu0
    %v400 = vadd.f32 0.0, %v399
    %v401 = vpop.f32.mrb[0].mxu0
    %v402 = vadd.f32 0.0, %v401
    %403 = vmatprep.mubr.f32.mxu0 %v55
    %404 = vmatmul.mubr.f32.gmra.mrb[0].mxu0 %v54
    %v405 = vpop.f32.mrb[0].mxu0
    %v406 = vadd.f32 0.0, %v405
    %v407 = vpop.f32.mrb[0].mxu0
    %v408 = vadd.f32 0.0, %v407
    %409 = vdwg.mxu0
    %410 = vst [vmem:[#allocation7] sm:$0xff] %v251
    %411 = vst [vmem:[#allocation7 + $0x8] sm:$0xff] %v253
    %412 = vst [vmem:[#allocation7 + $0x10] sm:$0xff] %v364
    %413 = vst [vmem:[#allocation7 + $0x18] sm:$0xff] %v366
    %414 = vst [vmem:[#allocation7 + $0x20] sm:$0xff] %v257
    %415 = vst [vmem:[#allocation7 + $0x28] sm:$0xff] %v259
    %416 = vst [vmem:[#allocation7 + $0x30] sm:$0xff] %v370
    %417 = vst [vmem:[#allocation7 + $0x38] sm:$0xff] %v372
    %418 = vst [vmem:[#allocation7 + $0x40] sm:$0xff] %v263
    %419 = vst [vmem:[#allocation7 + $0x48] sm:$0xff] %v265
    %420 = vst [vmem:[#allocation7 + $0x50] sm:$0xff] %v376
    %421 = vst [vmem:[#allocation7 + $0x58] sm:$0xff] %v378
    %422 = vst [vmem:[#allocation7 + $0x60] sm:$0xff] %v269
    %423 = vst [vmem:[#allocation7 + $0x68] sm:$0xff] %v271
    %424 = vst [vmem:[#allocation7 + $0x70] sm:$0xff] %v382
    %425 = vst [vmem:[#allocation7 + $0x78] sm:$0xff] %v384
    %426 = vst [vmem:[#allocation7 + $0x80] sm:$0xff] %v275
    %427 = vst [vmem:[#allocation7 + $0x88] sm:$0xff] %v277
    %428 = vst [vmem:[#allocation7 + $0x90] sm:$0xff] %v388
    %429 = vst [vmem:[#allocation7 + $0x98] sm:$0xff] %v390
    %430 = vst [vmem:[#allocation7 + $0xa0] sm:$0xff] %v281
    %431 = vst [vmem:[#allocation7 + $0xa8] sm:$0xff] %v283
    %432 = vst [vmem:[#allocation7 + $0xb0] sm:$0xff] %v394
    %433 = vst [vmem:[#allocation7 + $0xb8] sm:$0xff] %v396
    %434 = vst [vmem:[#allocation7 + $0xc0] sm:$0xff] %v287
    %435 = vst [vmem:[#allocation7 + $0xc8] sm:$0xff] %v289
    %436 = vst [vmem:[#allocation7 + $0xd0] sm:$0xff] %v400
    %437 = vst [vmem:[#allocation7 + $0xd8] sm:$0xff] %v402
    %438 = vst [vmem:[#allocation7 + $0xe0] sm:$0xff] %v293
    %439 = vst [vmem:[#allocation7 + $0xe8] sm:$0xff] %v295
    %440 = vst [vmem:[#allocation7 + $0xf0] sm:$0xff] %v406
    %441 = vst [vmem:[#allocation7 + $0xf8] sm:$0xff] %v408
    // Predicated region
    $region18: #{_lambda_.6} parent=1 // pred_check
      _
    $region19: #{_lambda_.6} parent=1 // pred_check_branch
      %443 = sbr.rel (0) target = $region21
    $region20: #{_lambda_.6} parent=1 // pred_region
      %s445 = ssub.s32 4096, 4096
      %446 = vsyncadd [#allocation4], %s445
      %s447 = sshll.u32 [#allocation7], 4
      %s448 = int_to_ptr.vmem [resolvable:$true] %s447
      %453 = dma.vmem_to_hbm [thread:$0]  %s448, 4096, %s2, [#allocation4], 512, 512, 32
    $region21: #{_lambda_.6} parent=1 // pred_fallthru
      _
    // Predicated region
    $region22: #{_lambda_.6} parent=1 // pred_check
      _
    $region23: #{_lambda_.6} parent=1 // pred_check_branch
      %455 = sbr.rel (0) target = $region25
    $region24: #{_lambda_.6} parent=1 // pred_region
      %456 = dma.done [#allocation4], 4096
    $region25: #{_lambda_.6} parent=1 // pred_fallthru
      _
    %457 = vsyncpa [#allocation3], 1
    %458 = vsyncpa [#allocation6], 1
    %459 = vsyncpa [#allocation4], 1

// kernel: _lambda_.7
$region0: #{_lambda_.7}
  #allocation0 [shape = 'u32[]', space=smem, size = 0x4, offset = 0x4, fixed_abs, tag = 'smem constant byte address 0x4 - core index']
  #allocation1 [shape = 'u32[144,128]{1,0:T(1,128)}', space=vmem, size = 0x12000, scoped, tag = 'internal scratch']
  %s0 = inlined_call_operand.hbm [shape: f32[64,32], index: 0, kind: input, shape index: {}]
  %s1 = inlined_call_operand.hbm [shape: f32[2,32,512], index: 1, kind: input, shape index: {}]
  %s2 = inlined_call_operand.hbm [shape: f32[2,64,512], index: 2, kind: output, shape index: {}]
  %s3 = sld [smem:[#allocation0]]
  $region26: #{_lambda_.7} parent=0
    _
  %s5 = ssub.s32 1, %s3
  %s6 = scalar_select 0, %s5, %s3
  $region1: #{_lambda_.7} parent=0
    #allocation2 [shape = 'u8[32768]{0}', space=vmem, size = 0x8000, scoped, tag = 'input window, operand 0, single buffered']
    #allocation3 [shape = 's32[1]{0}', space=sflag, size = 0x4, scoped, tag = 'scoped memory for _lambda_.7']
    #allocation4 [shape = 's32[1]{0}', space=sflag, size = 0x4, scoped, tag = 'scoped memory for _lambda_.7']
    #allocation5 [shape = 'u8[131072]{0}', space=vmem, size = 0x20000, scoped, tag = 'input window, operand 1, single buffered']
    #allocation6 [shape = 's32[1]{0}', space=sflag, size = 0x4, scoped, tag = 'scoped memory for _lambda_.7']
    #allocation7 [shape = 'u8[262144]{0}', space=vmem, size = 0x40000, scoped, tag = 'output window, operand 0, single buffered']
    %7 = vsyncpa [#allocation3], 0
    %8 = vsyncpa [#allocation6], 0
    %9 = vsyncpa [#allocation4], 0
    // Predicated region
    $region2: #{_lambda_.7} parent=1 // pred_check
      _
    $region3: #{_lambda_.7} parent=1 // pred_check_branch
      %11 = sbr.rel (0) target = $region5
    $region4: #{_lambda_.7} parent=1 // pred_region
      %s13 = ssub.s32 1024, 1024
      %14 = vsyncadd [#allocation3], %s13
      %s15 = sshll.u32 [#allocation2], 4
      %s16 = int_to_ptr.vmem [resolvable:$true] %s15
      %21 = dma.hbm_to_vmem [thread:$0]  %s0, 1024, %s16, [#allocation3], 128, 128, 8
    $region5: #{_lambda_.7} parent=1 // pred_fallthru
      _
    // Predicated region
    $region6: #{_lambda_.7} parent=1 // pred_check
      _
    $region7: #{_lambda_.7} parent=1 // pred_check_branch
      %23 = sbr.rel (0) target = $region9
    $region8: #{_lambda_.7} parent=1 // pred_region
      %s25 = ssub.s32 4096, 4096
      %26 = vsyncadd [#allocation6], %s25
      %s27 = sshll.u32 [#allocation5], 4
      %s28 = int_to_ptr.vmem [resolvable:$true] %s27
      %33 = dma.hbm_to_vmem [thread:$0]  %s1, 4096, %s28, [#allocation6], 512, 512, 32
    $region9: #{_lambda_.7} parent=1 // pred_fallthru
      _
    // Predicated region
    $region10: #{_lambda_.7} parent=1 // pred_check
      _
    $region11: #{_lambda_.7} parent=1 // pred_check_branch
      %35 = sbr.rel (0) target = $region13
    $region12: #{_lambda_.7} parent=1 // pred_region
      %36 = dma.done [#allocation3], 1024
    $region13: #{_lambda_.7} parent=1 // pred_fallthru
      _
    // Predicated region
    $region14: #{_lambda_.7} parent=1 // pred_check
      _
    $region15: #{_lambda_.7} parent=1 // pred_check_branch
      %38 = sbr.rel (0) target = $region17
    $region16: #{_lambda_.7} parent=1 // pred_region
      %39 = dma.done [#allocation6], 4096
    $region17: #{_lambda_.7} parent=1 // pred_fallthru
      _
    %v40 = vld [vmem:[#allocation5] sm:$0xff]
    %v41 = vld [vmem:[#allocation5 + $0x8] sm:$0xff]
    %v42 = vld [vmem:[#allocation5 + $0x10] sm:$0xff]
    %v43 = vld [vmem:[#allocation5 + $0x18] sm:$0xff]
    %v44 = vld [vmem:[#allocation5 + $0x20] sm:$0xff]
    %v45 = vld [vmem:[#allocation5 + $0x28] sm:$0xff]
    %v46 = vld [vmem:[#allocation5 + $0x30] sm:$0xff]
    %v47 = vld [vmem:[#allocation5 + $0x38] sm:$0xff]
    %v48 = vld [vmem:[#allocation5 + $0x40] sm:$0xff]
    %v49 = vld [vmem:[#allocation5 + $0x48] sm:$0xff]
    %v50 = vld [vmem:[#allocation5 + $0x50] sm:$0xff]
    %v51 = vld [vmem:[#allocation5 + $0x58] sm:$0xff]
    %v52 = vld [vmem:[#allocation5 + $0x60] sm:$0xff]
    %v53 = vld [vmem:[#allocation5 + $0x68] sm:$0xff]
    %v54 = vld [vmem:[#allocation5 + $0x70] sm:$0xff]
    %v55 = vld [vmem:[#allocation5 + $0x78] sm:$0xff]
    %v56 = vld [vmem:[#allocation5 + $0x80] sm:$0xff]
    %v57 = vld [vmem:[#allocation5 + $0x88] sm:$0xff]
    %v58 = vld [vmem:[#allocation5 + $0x90] sm:$0xff]
    %v59 = vld [vmem:[#allocation5 + $0x98] sm:$0xff]
    %v60 = vld [vmem:[#allocation5 + $0xa0] sm:$0xff]
    %v61 = vld [vmem:[#allocation5 + $0xa8] sm:$0xff]
    %v62 = vld [vmem:[#allocation5 + $0xb0] sm:$0xff]
    %v63 = vld [vmem:[#allocation5 + $0xb8] sm:$0xff]
    %v64 = vld [vmem:[#allocation5 + $0xc0] sm:$0xff]
    %v65 = vld [vmem:[#allocation5 + $0xc8] sm:$0xff]
    %v66 = vld [vmem:[#allocation5 + $0xd0] sm:$0xff]
    %v67 = vld [vmem:[#allocation5 + $0xd8] sm:$0xff]
    %v68 = vld [vmem:[#allocation5 + $0xe0] sm:$0xff]
    %v69 = vld [vmem:[#allocation5 + $0xe8] sm:$0xff]
    %v70 = vld [vmem:[#allocation5 + $0xf0] sm:$0xff]
    %v71 = vld [vmem:[#allocation5 + $0xf8] sm:$0xff]
    %v72 = vld [vmem:[#allocation2] sm:$0xff]
    %v73 = vld [vmem:[#allocation2 + $0x8] sm:$0xff]
    %v74 = vld [vmem:[#allocation2 + $0x10] sm:$0xff]
    %v75 = vld [vmem:[#allocation2 + $0x18] sm:$0xff]
    %v76 = vld [vmem:[#allocation2 + $0x20] sm:$0xff]
    %v77 = vld [vmem:[#allocation2 + $0x28] sm:$0xff]
    %v78 = vld [vmem:[#allocation2 + $0x30] sm:$0xff]
    %v79 = vld [vmem:[#allocation2 + $0x38] sm:$0xff]
    %vm80 = vcmask 261120
    %v82 = vsel %vm80, %v72, 0
    %v85 = vsel %vm80, %v73, 0
    %v88 = vsel %vm80, %v74, 0
    %v91 = vsel %vm80, %v75, 0
    %v94 = vsel %vm80, %v76, 0
    %v97 = vsel %vm80, %v77, 0
    %v100 = vsel %vm80, %v78, 0
    %v103 = vsel %vm80, %v79, 0
    %105 = vmatprep.subr.mxu0 %v41
    %106 = vmatpush1.msra.mxu0 %v40
    %107 = vmatprep.subr.mxu0 %v45
    %108 = vmatpush1.msra.mxu0 %v44
    %109 = vmatprep.subr.mxu0 %v49
    %110 = vmatpush1.msra.mxu0 %v48
    %111 = vmatprep.subr.mxu0 %v53
    %112 = vmatpush1.msra.mxu0 %v52
    %113 = vmatprep.subr.mxu0 0.0
    %114 = vmatpush1.msra.mxu0 0.0
    %115 = vmatprep.subr.mxu0 0.0
    %116 = vmatpush1.msra.mxu0 0.0
    %117 = vmatprep.subr.mxu0 0.0
    %118 = vmatpush1.msra.mxu0 0.0
    %119 = vmatprep.subr.mxu0 0.0
    %120 = vmatpush1.msra.mxu0 0.0
    %121 = vmatprep.subr.mxu0 0.0
    %122 = vmatpush1.msra.mxu0 0.0
    %123 = vmatprep.subr.mxu0 0.0
    %124 = vmatpush1.msra.mxu0 0.0
    %125 = vmatprep.subr.mxu0 0.0
    %126 = vmatpush1.msra.mxu0 0.0
    %127 = vmatprep.subr.mxu0 0.0
    %128 = vmatpush1.msra.mxu0 0.0
    %129 = vmatprep.subr.mxu0 0.0
    %130 = vmatpush1.msra.mxu0 0.0
    %131 = vmatprep.subr.mxu0 0.0
    %132 = vmatpush1.msra.mxu0 0.0
    %133 = vmatprep.subr.mxu0 0.0
    %134 = vmatpush1.msra.mxu0 0.0
    %135 = vmatprep.subr.mxu0 0.0
    %136 = vmatpush1.msra.mxu0 0.0
    %137 = vmatprep.subr.mxu0 0.0
    %138 = vmatpush1.msra.mxu0 0.0
    %139 = vmatprep.subr.mxu0 0.0
    %140 = vmatpush1.msra.mxu0 0.0
    %141 = vmatprep.subr.mxu0 0.0
    %142 = vmatpush1.msra.mxu0 0.0
    %143 = vmatprep.subr.mxu0 0.0
    %144 = vmatpush1.msra.mxu0 0.0
    %145 = vmatprep.subr.mxu0 0.0
    %146 = vmatpush1.msra.mxu0 0.0
    %147 = vmatprep.subr.mxu0 0.0
    %148 = vmatpush1.msra.mxu0 0.0
    %149 = vmatprep.subr.mxu0 0.0
    %150 = vmatpush1.msra.mxu0 0.0
    %151 = vmatprep.subr.mxu0 0.0
    %152 = vmatpush1.msra.mxu0 0.0
    %153 = vmatprep.subr.mxu0 0.0
    %154 = vmatpush1.msra.mxu0 0.0
    %155 = vmatprep.subr.mxu0 0.0
    %156 = vmatpush1.msra.mxu0 0.0
    %157 = vmatprep.subr.mxu0 0.0
    %158 = vmatpush1.msra.mxu0 0.0
    %159 = vmatprep.subr.mxu0 0.0
    %160 = vmatpush1.msra.mxu0 0.0
    %161 = vmatprep.subr.mxu0 0.0
    %162 = vmatpush1.msra.mxu0 0.0
    %163 = vmatprep.subr.mxu0 0.0
    %164 = vmatpush1.msra.mxu0 0.0
    %165 = vmatprep.subr.mxu0 0.0
    %166 = vmatpush1.msra.mxu0 0.0
    %167 = vmatprep.subr.mxu0 0.0
    %168 = vmatpush1.msra.mxu0 0.0
    %169 = vmatprep.mubr.f32.mxu0 0.0
    %170 = vmatmul.mubr.f32.gmra.mrb[0].mxu0 %v82
    %v171 = vpop.f32.mrb[0].mxu0
    %v172 = vadd.f32 0.0, %v171
    %v173 = vpop.f32.mrb[0].mxu0
    %v174 = vadd.f32 0.0, %v173
    %175 = vmatprep.mubr.f32.mxu0 0.0
    %176 = vmatmul.mubr.f32.gmra.mrb[0].mxu0 %v85
    %v177 = vpop.f32.mrb[0].mxu0
    %v178 = vadd.f32 0.0, %v177
    %v179 = vpop.f32.mrb[0].mxu0
    %v180 = vadd.f32 0.0, %v179
    %181 = vmatprep.mubr.f32.mxu0 0.0
    %182 = vmatmul.mubr.f32.gmra.mrb[0].mxu0 %v88
    %v183 = vpop.f32.mrb[0].mxu0
    %v184 = vadd.f32 0.0, %v183
    %v185 = vpop.f32.mrb[0].mxu0
    %v186 = vadd.f32 0.0, %v185
    %187 = vmatprep.mubr.f32.mxu0 0.0
    %188 = vmatmul.mubr.f32.gmra.mrb[0].mxu0 %v91
    %v189 = vpop.f32.mrb[0].mxu0
    %v190 = vadd.f32 0.0, %v189
    %v191 = vpop.f32.mrb[0].mxu0
    %v192 = vadd.f32 0.0, %v191
    %193 = vmatprep.mubr.f32.mxu0 0.0
    %194 = vmatmul.mubr.f32.gmra.mrb[0].mxu0 %v94
    %v195 = vpop.f32.mrb[0].mxu0
    %v196 = vadd.f32 0.0, %v195
    %v197 = vpop.f32.mrb[0].mxu0
    %v198 = vadd.f32 0.0, %v197
    %199 = vmatprep.mubr.f32.mxu0 0.0
    %200 = vmatmul.mubr.f32.gmra.mrb[0].mxu0 %v97
    %v201 = vpop.f32.mrb[0].mxu0
    %v202 = vadd.f32 0.0, %v201
    %v203 = vpop.f32.mrb[0].mxu0
    %v204 = vadd.f32 0.0, %v203
    %205 = vmatprep.mubr.f32.mxu0 0.0
    %206 = vmatmul.mubr.f32.gmra.mrb[0].mxu0 %v100
    %v207 = vpop.f32.mrb[0].mxu0
    %v208 = vadd.f32 0.0, %v207
    %v209 = vpop.f32.mrb[0].mxu0
    %v210 = vadd.f32 0.0, %v209
    %211 = vmatprep.mubr.f32.mxu0 0.0
    %212 = vmatmul.mubr.f32.gmra.mrb[0].mxu0 %v103
    %v213 = vpop.f32.mrb[0].mxu0
    %v214 = vadd.f32 0.0, %v213
    %v215 = vpop.f32.mrb[0].mxu0
    %v216 = vadd.f32 0.0, %v215
    %217 = vdwg.mxu0
    %218 = vmatprep.subr.mxu0 %v43
    %219 = vmatpush1.msra.mxu0 %v42
    %220 = vmatprep.subr.mxu0 %v47
    %221 = vmatpush1.msra.mxu0 %v46
    %222 = vmatprep.subr.mxu0 %v51
    %223 = vmatpush1.msra.mxu0 %v50
    %224 = vmatprep.subr.mxu0 %v55
    %225 = vmatpush1.msra.mxu0 %v54
    %226 = vmatprep.subr.mxu0 0.0
    %227 = vmatpush1.msra.mxu0 0.0
    %228 = vmatprep.subr.mxu0 0.0
    %229 = vmatpush1.msra.mxu0 0.0
    %230 = vmatprep.subr.mxu0 0.0
    %231 = vmatpush1.msra.mxu0 0.0
    %232 = vmatprep.subr.mxu0 0.0
    %233 = vmatpush1.msra.mxu0 0.0
    %234 = vmatprep.subr.mxu0 0.0
    %235 = vmatpush1.msra.mxu0 0.0
    %236 = vmatprep.subr.mxu0 0.0
    %237 = vmatpush1.msra.mxu0 0.0
    %238 = vmatprep.subr.mxu0 0.0
    %239 = vmatpush1.msra.mxu0 0.0
    %240 = vmatprep.subr.mxu0 0.0
    %241 = vmatpush1.msra.mxu0 0.0
    %242 = vmatprep.subr.mxu0 0.0
    %243 = vmatpush1.msra.mxu0 0.0
    %244 = vmatprep.subr.mxu0 0.0
    %245 = vmatpush1.msra.mxu0 0.0
    %246 = vmatprep.subr.mxu0 0.0
    %247 = vmatpush1.msra.mxu0 0.0
    %248 = vmatprep.subr.mxu0 0.0
    %249 = vmatpush1.msra.mxu0 0.0
    %250 = vmatprep.subr.mxu0 0.0
    %251 = vmatpush1.msra.mxu0 0.0
    %252 = vmatprep.subr.mxu0 0.0
    %253 = vmatpush1.msra.mxu0 0.0
    %254 = vmatprep.subr.mxu0 0.0
    %255 = vmatpush1.msra.mxu0 0.0
    %256 = vmatprep.subr.mxu0 0.0
    %257 = vmatpush1.msra.mxu0 0.0
    %258 = vmatprep.subr.mxu0 0.0
    %259 = vmatpush1.msra.mxu0 0.0
    %260 = vmatprep.subr.mxu0 0.0
    %261 = vmatpush1.msra.mxu0 0.0
    %262 = vmatprep.subr.mxu0 0.0
    %263 = vmatpush1.msra.mxu0 0.0
    %264 = vmatprep.subr.mxu0 0.0
    %265 = vmatpush1.msra.mxu0 0.0
    %266 = vmatprep.subr.mxu0 0.0
    %267 = vmatpush1.msra.mxu0 0.0
    %268 = vmatprep.subr.mxu0 0.0
    %269 = vmatpush1.msra.mxu0 0.0
    %270 = vmatprep.subr.mxu0 0.0
    %271 = vmatpush1.msra.mxu0 0.0
    %272 = vmatprep.subr.mxu0 0.0
    %273 = vmatpush1.msra.mxu0 0.0
    %274 = vmatprep.subr.mxu0 0.0
    %275 = vmatpush1.msra.mxu0 0.0
    %276 = vmatprep.subr.mxu0 0.0
    %277 = vmatpush1.msra.mxu0 0.0
    %278 = vmatprep.subr.mxu0 0.0
    %279 = vmatpush1.msra.mxu0 0.0
    %280 = vmatprep.subr.mxu0 0.0
    %281 = vmatpush1.msra.mxu0 0.0
    %282 = vmatprep.mubr.f32.mxu0 0.0
    %283 = vmatmul.mubr.f32.gmra.mrb[0].mxu0 %v82
    %v284 = vpop.f32.mrb[0].mxu0
    %v285 = vadd.f32 0.0, %v284
    %v286 = vpop.f32.mrb[0].mxu0
    %v287 = vadd.f32 0.0, %v286
    %288 = vmatprep.mubr.f32.mxu0 0.0
    %289 = vmatmul.mubr.f32.gmra.mrb[0].mxu0 %v85
    %v290 = vpop.f32.mrb[0].mxu0
    %v291 = vadd.f32 0.0, %v290
    %v292 = vpop.f32.mrb[0].mxu0
    %v293 = vadd.f32 0.0, %v292
    %294 = vmatprep.mubr.f32.mxu0 0.0
    %295 = vmatmul.mubr.f32.gmra.mrb[0].mxu0 %v88
    %v296 = vpop.f32.mrb[0].mxu0
    %v297 = vadd.f32 0.0, %v296
    %v298 = vpop.f32.mrb[0].mxu0
    %v299 = vadd.f32 0.0, %v298
    %300 = vmatprep.mubr.f32.mxu0 0.0
    %301 = vmatmul.mubr.f32.gmra.mrb[0].mxu0 %v91
    %v302 = vpop.f32.mrb[0].mxu0
    %v303 = vadd.f32 0.0, %v302
    %v304 = vpop.f32.mrb[0].mxu0
    %v305 = vadd.f32 0.0, %v304
    %306 = vmatprep.mubr.f32.mxu0 0.0
    %307 = vmatmul.mubr.f32.gmra.mrb[0].mxu0 %v94
    %v308 = vpop.f32.mrb[0].mxu0
    %v309 = vadd.f32 0.0, %v308
    %v310 = vpop.f32.mrb[0].mxu0
    %v311 = vadd.f32 0.0, %v310
    %312 = vmatprep.mubr.f32.mxu0 0.0
    %313 = vmatmul.mubr.f32.gmra.mrb[0].mxu0 %v97
    %v314 = vpop.f32.mrb[0].mxu0
    %v315 = vadd.f32 0.0, %v314
    %v316 = vpop.f32.mrb[0].mxu0
    %v317 = vadd.f32 0.0, %v316
    %318 = vmatprep.mubr.f32.mxu0 0.0
    %319 = vmatmul.mubr.f32.gmra.mrb[0].mxu0 %v100
    %v320 = vpop.f32.mrb[0].mxu0
    %v321 = vadd.f32 0.0, %v320
    %v322 = vpop.f32.mrb[0].mxu0
    %v323 = vadd.f32 0.0, %v322
    %324 = vmatprep.mubr.f32.mxu0 0.0
    %325 = vmatmul.mubr.f32.gmra.mrb[0].mxu0 %v103
    %v326 = vpop.f32.mrb[0].mxu0
    %v327 = vadd.f32 0.0, %v326
    %v328 = vpop.f32.mrb[0].mxu0
    %v329 = vadd.f32 0.0, %v328
    %330 = vdwg.mxu0
    %331 = vmatprep.subr.mxu0 %v57
    %332 = vmatpush1.msra.mxu0 %v56
    %333 = vmatprep.subr.mxu0 %v61
    %334 = vmatpush1.msra.mxu0 %v60
    %335 = vmatprep.subr.mxu0 %v65
    %336 = vmatpush1.msra.mxu0 %v64
    %337 = vmatprep.subr.mxu0 %v69
    %338 = vmatpush1.msra.mxu0 %v68
    %339 = vmatprep.subr.mxu0 0.0
    %340 = vmatpush1.msra.mxu0 0.0
    %341 = vmatprep.subr.mxu0 0.0
    %342 = vmatpush1.msra.mxu0 0.0
    %343 = vmatprep.subr.mxu0 0.0
    %344 = vmatpush1.msra.mxu0 0.0
    %345 = vmatprep.subr.mxu0 0.0
    %346 = vmatpush1.msra.mxu0 0.0
    %347 = vmatprep.subr.mxu0 0.0
    %348 = vmatpush1.msra.mxu0 0.0
    %349 = vmatprep.subr.mxu0 0.0
    %350 = vmatpush1.msra.mxu0 0.0
    %351 = vmatprep.subr.mxu0 0.0
    %352 = vmatpush1.msra.mxu0 0.0
    %353 = vmatprep.subr.mxu0 0.0
    %354 = vmatpush1.msra.mxu0 0.0
    %355 = vmatprep.subr.mxu0 0.0
    %356 = vmatpush1.msra.mxu0 0.0
    %357 = vmatprep.subr.mxu0 0.0
    %358 = vmatpush1.msra.mxu0 0.0
    %359 = vmatprep.subr.mxu0 0.0
    %360 = vmatpush1.msra.mxu0 0.0
    %361 = vmatprep.subr.mxu0 0.0
    %362 = vmatpush1.msra.mxu0 0.0
    %363 = vmatprep.subr.mxu0 0.0
    %364 = vmatpush1.msra.mxu0 0.0
    %365 = vmatprep.subr.mxu0 0.0
    %366 = vmatpush1.msra.mxu0 0.0
    %367 = vmatprep.subr.mxu0 0.0
    %368 = vmatpush1.msra.mxu0 0.0
    %369 = vmatprep.subr.mxu0 0.0
    %370 = vmatpush1.msra.mxu0 0.0
    %371 = vmatprep.subr.mxu0 0.0
    %372 = vmatpush1.msra.mxu0 0.0
    %373 = vmatprep.subr.mxu0 0.0
    %374 = vmatpush1.msra.mxu0 0.0
    %375 = vmatprep.subr.mxu0 0.0
    %376 = vmatpush1.msra.mxu0 0.0
    %377 = vmatprep.subr.mxu0 0.0
    %378 = vmatpush1.msra.mxu0 0.0
    %379 = vmatprep.subr.mxu0 0.0
    %380 = vmatpush1.msra.mxu0 0.0
    %381 = vmatprep.subr.mxu0 0.0
    %382 = vmatpush1.msra.mxu0 0.0
    %383 = vmatprep.subr.mxu0 0.0
    %384 = vmatpush1.msra.mxu0 0.0
    %385 = vmatprep.subr.mxu0 0.0
    %386 = vmatpush1.msra.mxu0 0.0
    %387 = vmatprep.subr.mxu0 0.0
    %388 = vmatpush1.msra.mxu0 0.0
    %389 = vmatprep.subr.mxu0 0.0
    %390 = vmatpush1.msra.mxu0 0.0
    %391 = vmatprep.subr.mxu0 0.0
    %392 = vmatpush1.msra.mxu0 0.0
    %393 = vmatprep.subr.mxu0 0.0
    %394 = vmatpush1.msra.mxu0 0.0
    %395 = vmatprep.mubr.f32.mxu0 0.0
    %396 = vmatmul.mubr.f32.gmra.mrb[0].mxu0 %v82
    %v397 = vpop.f32.mrb[0].mxu0
    %v398 = vadd.f32 0.0, %v397
    %v399 = vpop.f32.mrb[0].mxu0
    %v400 = vadd.f32 0.0, %v399
    %401 = vmatprep.mubr.f32.mxu0 0.0
    %402 = vmatmul.mubr.f32.gmra.mrb[0].mxu0 %v85
    %v403 = vpop.f32.mrb[0].mxu0
    %v404 = vadd.f32 0.0, %v403
    %v405 = vpop.f32.mrb[0].mxu0
    %v406 = vadd.f32 0.0, %v405
    %407 = vmatprep.mubr.f32.mxu0 0.0
    %408 = vmatmul.mubr.f32.gmra.mrb[0].mxu0 %v88
    %v409 = vpop.f32.mrb[0].mxu0
    %v410 = vadd.f32 0.0, %v409
    %v411 = vpop.f32.mrb[0].mxu0
    %v412 = vadd.f32 0.0, %v411
    %413 = vmatprep.mubr.f32.mxu0 0.0
    %414 = vmatmul.mubr.f32.gmra.mrb[0].mxu0 %v91
    %v415 = vpop.f32.mrb[0].mxu0
    %v416 = vadd.f32 0.0, %v415
    %v417 = vpop.f32.mrb[0].mxu0
    %v418 = vadd.f32 0.0, %v417
    %419 = vmatprep.mubr.f32.mxu0 0.0
    %420 = vmatmul.mubr.f32.gmra.mrb[0].mxu0 %v94
    %v421 = vpop.f32.mrb[0].mxu0
    %v422 = vadd.f32 0.0, %v421
    %v423 = vpop.f32.mrb[0].mxu0
    %v424 = vadd.f32 0.0, %v423
    %425 = vmatprep.mubr.f32.mxu0 0.0
    %426 = vmatmul.mubr.f32.gmra.mrb[0].mxu0 %v97
    %v427 = vpop.f32.mrb[0].mxu0
    %v428 = vadd.f32 0.0, %v427
    %v429 = vpop.f32.mrb[0].mxu0
    %v430 = vadd.f32 0.0, %v429
    %431 = vmatprep.mubr.f32.mxu0 0.0
    %432 = vmatmul.mubr.f32.gmra.mrb[0].mxu0 %v100
    %v433 = vpop.f32.mrb[0].mxu0
    %v434 = vadd.f32 0.0, %v433
    %v435 = vpop.f32.mrb[0].mxu0
    %v436 = vadd.f32 0.0, %v435
    %437 = vmatprep.mubr.f32.mxu0 0.0
    %438 = vmatmul.mubr.f32.gmra.mrb[0].mxu0 %v103
    %v439 = vpop.f32.mrb[0].mxu0
    %v440 = vadd.f32 0.0, %v439
    %v441 = vpop.f32.mrb[0].mxu0
    %v442 = vadd.f32 0.0, %v441
    %443 = vdwg.mxu0
    %444 = vmatprep.subr.mxu0 %v59
    %445 = vmatpush1.msra.mxu0 %v58
    %446 = vmatprep.subr.mxu0 %v63
    %447 = vmatpush1.msra.mxu0 %v62
    %448 = vmatprep.subr.mxu0 %v67
    %449 = vmatpush1.msra.mxu0 %v66
    %450 = vmatprep.subr.mxu0 %v71
    %451 = vmatpush1.msra.mxu0 %v70
    %452 = vmatprep.subr.mxu0 0.0
    %453 = vmatpush1.msra.mxu0 0.0
    %454 = vmatprep.subr.mxu0 0.0
    %455 = vmatpush1.msra.mxu0 0.0
    %456 = vmatprep.subr.mxu0 0.0
    %457 = vmatpush1.msra.mxu0 0.0
    %458 = vmatprep.subr.mxu0 0.0
    %459 = vmatpush1.msra.mxu0 0.0
    %460 = vmatprep.subr.mxu0 0.0
    %461 = vmatpush1.msra.mxu0 0.0
    %462 = vmatprep.subr.mxu0 0.0
    %463 = vmatpush1.msra.mxu0 0.0
    %464 = vmatprep.subr.mxu0 0.0
    %465 = vmatpush1.msra.mxu0 0.0
    %466 = vmatprep.subr.mxu0 0.0
    %467 = vmatpush1.msra.mxu0 0.0
    %468 = vmatprep.subr.mxu0 0.0
    %469 = vmatpush1.msra.mxu0 0.0
    %470 = vmatprep.subr.mxu0 0.0
    %471 = vmatpush1.msra.mxu0 0.0
    %472 = vmatprep.subr.mxu0 0.0
    %473 = vmatpush1.msra.mxu0 0.0
    %474 = vmatprep.subr.mxu0 0.0
    %475 = vmatpush1.msra.mxu0 0.0
    %476 = vmatprep.subr.mxu0 0.0
    %477 = vmatpush1.msra.mxu0 0.0
    %478 = vmatprep.subr.mxu0 0.0
    %479 = vmatpush1.msra.mxu0 0.0
    %480 = vmatprep.subr.mxu0 0.0
    %481 = vmatpush1.msra.mxu0 0.0
    %482 = vmatprep.subr.mxu0 0.0
    %483 = vmatpush1.msra.mxu0 0.0
    %484 = vmatprep.subr.mxu0 0.0
    %485 = vmatpush1.msra.mxu0 0.0
    %486 = vmatprep.subr.mxu0 0.0
    %487 = vmatpush1.msra.mxu0 0.0
    %488 = vmatprep.subr.mxu0 0.0
    %489 = vmatpush1.msra.mxu0 0.0
    %490 = vmatprep.subr.mxu0 0.0
    %491 = vmatpush1.msra.mxu0 0.0
    %492 = vmatprep.subr.mxu0 0.0
    %493 = vmatpush1.msra.mxu0 0.0
    %494 = vmatprep.subr.mxu0 0.0
    %495 = vmatpush1.msra.mxu0 0.0
    %496 = vmatprep.subr.mxu0 0.0
    %497 = vmatpush1.msra.mxu0 0.0
    %498 = vmatprep.subr.mxu0 0.0
    %499 = vmatpush1.msra.mxu0 0.0
    %500 = vmatprep.subr.mxu0 0.0
    %501 = vmatpush1.msra.mxu0 0.0
    %502 = vmatprep.subr.mxu0 0.0
    %503 = vmatpush1.msra.mxu0 0.0
    %504 = vmatprep.subr.mxu0 0.0
    %505 = vmatpush1.msra.mxu0 0.0
    %506 = vmatprep.subr.mxu0 0.0
    %507 = vmatpush1.msra.mxu0 0.0
    %508 = vmatprep.mubr.f32.mxu0 0.0
    %509 = vmatmul.mubr.f32.gmra.mrb[0].mxu0 %v82
    %v510 = vpop.f32.mrb[0].mxu0
    %v511 = vadd.f32 0.0, %v510
    %v512 = vpop.f32.mrb[0].mxu0
    %v513 = vadd.f32 0.0, %v512
    %514 = vmatprep.mubr.f32.mxu0 0.0
    %515 = vmatmul.mubr.f32.gmra.mrb[0].mxu0 %v85
    %v516 = vpop.f32.mrb[0].mxu0
    %v517 = vadd.f32 0.0, %v516
    %v518 = vpop.f32.mrb[0].mxu0
    %v519 = vadd.f32 0.0, %v518
    %520 = vmatprep.mubr.f32.mxu0 0.0
    %521 = vmatmul.mubr.f32.gmra.mrb[0].mxu0 %v88
    %v522 = vpop.f32.mrb[0].mxu0
    %v523 = vadd.f32 0.0, %v522
    %v524 = vpop.f32.mrb[0].mxu0
    %v525 = vadd.f32 0.0, %v524
    %526 = vmatprep.mubr.f32.mxu0 0.0
    %527 = vmatmul.mubr.f32.gmra.mrb[0].mxu0 %v91
    %v528 = vpop.f32.mrb[0].mxu0
    %v529 = vadd.f32 0.0, %v528
    %v530 = vpop.f32.mrb[0].mxu0
    %v531 = vadd.f32 0.0, %v530
    %532 = vmatprep.mubr.f32.mxu0 0.0
    %533 = vmatmul.mubr.f32.gmra.mrb[0].mxu0 %v94
    %v534 = vpop.f32.mrb[0].mxu0
    %v535 = vadd.f32 0.0, %v534
    %v536 = vpop.f32.mrb[0].mxu0
    %v537 = vadd.f32 0.0, %v536
    %538 = vmatprep.mubr.f32.mxu0 0.0
    %539 = vmatmul.mubr.f32.gmra.mrb[0].mxu0 %v97
    %v540 = vpop.f32.mrb[0].mxu0
    %v541 = vadd.f32 0.0, %v540
    %v542 = vpop.f32.mrb[0].mxu0
    %v543 = vadd.f32 0.0, %v542
    %544 = vmatprep.mubr.f32.mxu0 0.0
    %545 = vmatmul.mubr.f32.gmra.mrb[0].mxu0 %v100
    %v546 = vpop.f32.mrb[0].mxu0
    %v547 = vadd.f32 0.0, %v546
    %v548 = vpop.f32.mrb[0].mxu0
    %v549 = vadd.f32 0.0, %v548
    %550 = vmatprep.mubr.f32.mxu0 0.0
    %551 = vmatmul.mubr.f32.gmra.mrb[0].mxu0 %v103
    %v552 = vpop.f32.mrb[0].mxu0
    %v553 = vadd.f32 0.0, %v552
    %v554 = vpop.f32.mrb[0].mxu0
    %v555 = vadd.f32 0.0, %v554
    %556 = vdwg.mxu0
    %557 = vst [vmem:[#allocation7] sm:$0xff] %v172
    %558 = vst [vmem:[#allocation7 + $0x8] sm:$0xff] %v174
    %559 = vst [vmem:[#allocation7 + $0x10] sm:$0xff] %v285
    %560 = vst [vmem:[#allocation7 + $0x18] sm:$0xff] %v287
    %561 = vst [vmem:[#allocation7 + $0x20] sm:$0xff] %v178
    %562 = vst [vmem:[#allocation7 + $0x28] sm:$0xff] %v180
    %563 = vst [vmem:[#allocation7 + $0x30] sm:$0xff] %v291
    %564 = vst [vmem:[#allocation7 + $0x38] sm:$0xff] %v293
    %565 = vst [vmem:[#allocation7 + $0x40] sm:$0xff] %v184
    %566 = vst [vmem:[#allocation7 + $0x48] sm:$0xff] %v186
    %567 = vst [vmem:[#allocation7 + $0x50] sm:$0xff] %v297
    %568 = vst [vmem:[#allocation7 + $0x58] sm:$0xff] %v299
    %569 = vst [vmem:[#allocation7 + $0x60] sm:$0xff] %v190
    %570 = vst [vmem:[#allocation7 + $0x68] sm:$0xff] %v192
    %571 = vst [vmem:[#allocation7 + $0x70] sm:$0xff] %v303
    %572 = vst [vmem:[#allocation7 + $0x78] sm:$0xff] %v305
    %573 = vst [vmem:[#allocation7 + $0x80] sm:$0xff] %v196
    %574 = vst [vmem:[#allocation7 + $0x88] sm:$0xff] %v198
    %575 = vst [vmem:[#allocation7 + $0x90] sm:$0xff] %v309
    %576 = vst [vmem:[#allocation7 + $0x98] sm:$0xff] %v311
    %577 = vst [vmem:[#allocation7 + $0xa0] sm:$0xff] %v202
    %578 = vst [vmem:[#allocation7 + $0xa8] sm:$0xff] %v204
    %579 = vst [vmem:[#allocation7 + $0xb0] sm:$0xff] %v315
    %580 = vst [vmem:[#allocation7 + $0xb8] sm:$0xff] %v317
    %581 = vst [vmem:[#allocation7 + $0xc0] sm:$0xff] %v208
    %582 = vst [vmem:[#allocation7 + $0xc8] sm:$0xff] %v210
    %583 = vst [vmem:[#allocation7 + $0xd0] sm:$0xff] %v321
    %584 = vst [vmem:[#allocation7 + $0xd8] sm:$0xff] %v323
    %585 = vst [vmem:[#allocation7 + $0xe0] sm:$0xff] %v214
    %586 = vst [vmem:[#allocation7 + $0xe8] sm:$0xff] %v216
    %587 = vst [vmem:[#allocation7 + $0xf0] sm:$0xff] %v327
    %588 = vst [vmem:[#allocation7 + $0xf8] sm:$0xff] %v329
    %589 = vst [vmem:[#allocation7 + $0x100] sm:$0xff] %v398
    %590 = vst [vmem:[#allocation7 + $0x108] sm:$0xff] %v400
    %591 = vst [vmem:[#allocation7 + $0x110] sm:$0xff] %v511
    %592 = vst [vmem:[#allocation7 + $0x118] sm:$0xff] %v513
    %593 = vst [vmem:[#allocation7 + $0x120] sm:$0xff] %v404
    %594 = vst [vmem:[#allocation7 + $0x128] sm:$0xff] %v406
    %595 = vst [vmem:[#allocation7 + $0x130] sm:$0xff] %v517
    %596 = vst [vmem:[#allocation7 + $0x138] sm:$0xff] %v519
    %597 = vst [vmem:[#allocation7 + $0x140] sm:$0xff] %v410
    %598 = vst [vmem:[#allocation7 + $0x148] sm:$0xff] %v412
    %599 = vst [vmem:[#allocation7 + $0x150] sm:$0xff] %v523
    %600 = vst [vmem:[#allocation7 + $0x158] sm:$0xff] %v525
    %601 = vst [vmem:[#allocation7 + $0x160] sm:$0xff] %v416
    %602 = vst [vmem:[#allocation7 + $0x168] sm:$0xff] %v418
    %603 = vst [vmem:[#allocation7 + $0x170] sm:$0xff] %v529
    %604 = vst [vmem:[#allocation7 + $0x178] sm:$0xff] %v531
    %605 = vst [vmem:[#allocation7 + $0x180] sm:$0xff] %v422
    %606 = vst [vmem:[#allocation7 + $0x188] sm:$0xff] %v424
    %607 = vst [vmem:[#allocation7 + $0x190] sm:$0xff] %v535
    %608 = vst [vmem:[#allocation7 + $0x198] sm:$0xff] %v537
    %609 = vst [vmem:[#allocation7 + $0x1a0] sm:$0xff] %v428
    %610 = vst [vmem:[#allocation7 + $0x1a8] sm:$0xff] %v430
    %611 = vst [vmem:[#allocation7 + $0x1b0] sm:$0xff] %v541
    %612 = vst [vmem:[#allocation7 + $0x1b8] sm:$0xff] %v543
    %613 = vst [vmem:[#allocation7 + $0x1c0] sm:$0xff] %v434
    %614 = vst [vmem:[#allocation7 + $0x1c8] sm:$0xff] %v436
    %615 = vst [vmem:[#allocation7 + $0x1d0] sm:$0xff] %v547
    %616 = vst [vmem:[#allocation7 + $0x1d8] sm:$0xff] %v549
    %617 = vst [vmem:[#allocation7 + $0x1e0] sm:$0xff] %v440
    %618 = vst [vmem:[#allocation7 + $0x1e8] sm:$0xff] %v442
    %619 = vst [vmem:[#allocation7 + $0x1f0] sm:$0xff] %v553
    %620 = vst [vmem:[#allocation7 + $0x1f8] sm:$0xff] %v555
    // Predicated region
    $region18: #{_lambda_.7} parent=1 // pred_check
      _
    $region19: #{_lambda_.7} parent=1 // pred_check_branch
      %622 = sbr.rel (0) target = $region21
    $region20: #{_lambda_.7} parent=1 // pred_region
      %s624 = ssub.s32 8192, 8192
      %625 = vsyncadd [#allocation4], %s624
      %s626 = sshll.u32 [#allocation7], 4
      %s627 = int_to_ptr.vmem [resolvable:$true] %s626
      %632 = dma.vmem_to_hbm [thread:$0]  %s627, 8192, %s2, [#allocation4], 512, 512, 32
    $region21: #{_lambda_.7} parent=1 // pred_fallthru
      _
    // Predicated region
    $region22: #{_lambda_.7} parent=1 // pred_check
      _
    $region23: #{_lambda_.7} parent=1 // pred_check_branch
      %634 = sbr.rel (0) target = $region25
    $region24: #{_lambda_.7} parent=1 // pred_region
      %635 = dma.done [#allocation4], 8192
    $region25: #{_lambda_.7} parent=1 // pred_fallthru
      _
    %636 = vsyncpa [#allocation3], 1
    %637 = vsyncpa [#allocation6], 1
    %638 = vsyncpa [#allocation4], 1

// kernel: _lambda_.8
$region0: #{_lambda_.8}
  #allocation0 [shape = 'u32[]', space=smem, size = 0x4, offset = 0x4, fixed_abs, tag = 'smem constant byte address 0x4 - core index']
  #allocation1 [shape = 'u32[144,128]{1,0:T(1,128)}', space=vmem, size = 0x12000, scoped, tag = 'internal scratch']
  %s0 = inlined_call_operand.hbm [shape: f32[128,512], index: 0, kind: input, shape index: {}]
  %s1 = inlined_call_operand.hbm [shape: f32[1,512], index: 1, kind: output, shape index: {0}]
  %s2 = inlined_call_operand.hbm [shape: f32[1,512], index: 2, kind: output, shape index: {1}]
  %3 = xla_tuple %s1, %s2
  %s4 = sld [smem:[#allocation0]]
  $region30: #{_lambda_.8} parent=0
    _
  %s6 = ssub.s32 1, %s4
  %s7 = scalar_select 0, %s6, %s4
  $region1: #{_lambda_.8} parent=0
    #allocation2 [shape = 'u8[262144]{0}', space=vmem, size = 0x40000, scoped, tag = 'input window, operand 0, single buffered']
    #allocation3 [shape = 's32[1]{0}', space=sflag, size = 0x4, scoped, tag = 'scoped memory for _lambda_.8']
    #allocation4 [shape = 's32[1]{0}', space=sflag, size = 0x4, scoped, tag = 'scoped memory for _lambda_.8']
    #allocation5 [shape = 'u8[2048]{0}', space=vmem, size = 0x800, scoped, tag = 'output window, operand 0, single buffered']
    #allocation6 [shape = 'u8[2048]{0}', space=vmem, size = 0x800, scoped, tag = 'output window, operand 1, single buffered']
    #allocation7 [shape = 's32[1]{0}', space=sflag, size = 0x4, scoped, tag = 'scoped memory for _lambda_.8']
    %8 = vsyncpa [#allocation3], 0
    %9 = vsyncpa [#allocation4], 0
    %10 = vsyncpa [#allocation7], 0
    // Predicated region
    $region2: #{_lambda_.8} parent=1 // pred_check
      _
    $region3: #{_lambda_.8} parent=1 // pred_check_branch
      %12 = sbr.rel (0) target = $region5
    $region4: #{_lambda_.8} parent=1 // pred_region
      %s14 = ssub.s32 8192, 8192
      %15 = vsyncadd [#allocation3], %s14
      %s16 = sshll.u32 [#allocation2], 4
      %s17 = int_to_ptr.vmem [resolvable:$true] %s16
      %22 = dma.hbm_to_vmem [thread:$0]  %s0, 8192, %s17, [#allocation3], 512, 512, 32
    $region5: #{_lambda_.8} parent=1 // pred_fallthru
      _
    // Predicated region
    $region6: #{_lambda_.8} parent=1 // pred_check
      _
    $region7: #{_lambda_.8} parent=1 // pred_check_branch
      %24 = sbr.rel (0) target = $region9
    $region8: #{_lambda_.8} parent=1 // pred_region
      %25 = dma.done [#allocation3], 8192
    $region9: #{_lambda_.8} parent=1 // pred_fallthru
      _
    %p26 = scmp.eq.s32.totalorder 0, 0
    // Predicated region
    $region10: #{_lambda_.8} parent=1 // pred_check
      %p27 = pneg %p26
    $region11: #{_lambda_.8} parent=1 // pred_check_branch
      %29 = sbr.rel (%p27) target = $region13
    $region12: #{_lambda_.8} parent=1 // pred_region
      %v30 = vlaneseq
      %vm31 = vcmp.ge.s32.totalorder %v30, 0
      %vm32 = vcmp.lt.s32.totalorder %v30, 512
      %vm33 = vmand %vm31, %vm32
      %34 = vst.msk [vmem:[#allocation5] sm:$0xf] %vm33, 0.0
      %35 = vst.msk [vmem:[#allocation6] sm:$0xf] %vm33, 0.0
    $region13: #{_lambda_.8} parent=1 // pred_fallthru
      _
    %v36 = vld [vmem:[#allocation2] sm:$0xff]
    %v37 = vld [vmem:[#allocation2 + $0x8] sm:$0xff]
    %v38 = vld [vmem:[#allocation2 + $0x10] sm:$0xff]
    %v39 = vld [vmem:[#allocation2 + $0x18] sm:$0xff]
    %v40 = vld [vmem:[#allocation2 + $0x20] sm:$0xff]
    %v41 = vld [vmem:[#allocation2 + $0x28] sm:$0xff]
    %v42 = vld [vmem:[#allocation2 + $0x30] sm:$0xff]
    %v43 = vld [vmem:[#allocation2 + $0x38] sm:$0xff]
    %v44 = vld [vmem:[#allocation2 + $0x40] sm:$0xff]
    %v45 = vld [vmem:[#allocation2 + $0x48] sm:$0xff]
    %v46 = vld [vmem:[#allocation2 + $0x50] sm:$0xff]
    %v47 = vld [vmem:[#allocation2 + $0x58] sm:$0xff]
    %v48 = vld [vmem:[#allocation2 + $0x60] sm:$0xff]
    %v49 = vld [vmem:[#allocation2 + $0x68] sm:$0xff]
    %v50 = vld [vmem:[#allocation2 + $0x70] sm:$0xff]
    %v51 = vld [vmem:[#allocation2 + $0x78] sm:$0xff]
    %v52 = vld [vmem:[#allocation2 + $0x80] sm:$0xff]
    %v53 = vld [vmem:[#allocation2 + $0x88] sm:$0xff]
    %v54 = vld [vmem:[#allocation2 + $0x90] sm:$0xff]
    %v55 = vld [vmem:[#allocation2 + $0x98] sm:$0xff]
    %v56 = vld [vmem:[#allocation2 + $0xa0] sm:$0xff]
    %v57 = vld [vmem:[#allocation2 + $0xa8] sm:$0xff]
    %v58 = vld [vmem:[#allocation2 + $0xb0] sm:$0xff]
    %v59 = vld [vmem:[#allocation2 + $0xb8] sm:$0xff]
    %v60 = vld [vmem:[#allocation2 + $0xc0] sm:$0xff]
    %v61 = vld [vmem:[#allocation2 + $0xc8] sm:$0xff]
    %v62 = vld [vmem:[#allocation2 + $0xd0] sm:$0xff]
    %v63 = vld [vmem:[#allocation2 + $0xd8] sm:$0xff]
    %v64 = vld [vmem:[#allocation2 + $0xe0] sm:$0xff]
    %v65 = vld [vmem:[#allocation2 + $0xe8] sm:$0xff]
    %v66 = vld [vmem:[#allocation2 + $0xf0] sm:$0xff]
    %v67 = vld [vmem:[#allocation2 + $0xf8] sm:$0xff]
    %v68 = vld [vmem:[#allocation2 + $0x100] sm:$0xff]
    %v69 = vld [vmem:[#allocation2 + $0x108] sm:$0xff]
    %v70 = vld [vmem:[#allocation2 + $0x110] sm:$0xff]
    %v71 = vld [vmem:[#allocation2 + $0x118] sm:$0xff]
    %v72 = vld [vmem:[#allocation2 + $0x120] sm:$0xff]
    %v73 = vld [vmem:[#allocation2 + $0x128] sm:$0xff]
    %v74 = vld [vmem:[#allocation2 + $0x130] sm:$0xff]
    %v75 = vld [vmem:[#allocation2 + $0x138] sm:$0xff]
    %v76 = vld [vmem:[#allocation2 + $0x140] sm:$0xff]
    %v77 = vld [vmem:[#allocation2 + $0x148] sm:$0xff]
    %v78 = vld [vmem:[#allocation2 + $0x150] sm:$0xff]
    %v79 = vld [vmem:[#allocation2 + $0x158] sm:$0xff]
    %v80 = vld [vmem:[#allocation2 + $0x160] sm:$0xff]
    %v81 = vld [vmem:[#allocation2 + $0x168] sm:$0xff]
    %v82 = vld [vmem:[#allocation2 + $0x170] sm:$0xff]
    %v83 = vld [vmem:[#allocation2 + $0x178] sm:$0xff]
    %v84 = vld [vmem:[#allocation2 + $0x180] sm:$0xff]
    %v85 = vld [vmem:[#allocation2 + $0x188] sm:$0xff]
    %v86 = vld [vmem:[#allocation2 + $0x190] sm:$0xff]
    %v87 = vld [vmem:[#allocation2 + $0x198] sm:$0xff]
    %v88 = vld [vmem:[#allocation2 + $0x1a0] sm:$0xff]
    %v89 = vld [vmem:[#allocation2 + $0x1a8] sm:$0xff]
    %v90 = vld [vmem:[#allocation2 + $0x1b0] sm:$0xff]
    %v91 = vld [vmem:[#allocation2 + $0x1b8] sm:$0xff]
    %v92 = vld [vmem:[#allocation2 + $0x1c0] sm:$0xff]
    %v93 = vld [vmem:[#allocation2 + $0x1c8] sm:$0xff]
    %v94 = vld [vmem:[#allocation2 + $0x1d0] sm:$0xff]
    %v95 = vld [vmem:[#allocation2 + $0x1d8] sm:$0xff]
    %v96 = vld [vmem:[#allocation2 + $0x1e0] sm:$0xff]
    %v97 = vld [vmem:[#allocation2 + $0x1e8] sm:$0xff]
    %v98 = vld [vmem:[#allocation2 + $0x1f0] sm:$0xff]
    %v99 = vld [vmem:[#allocation2 + $0x1f8] sm:$0xff]
    %v100 = vld [vmem:[#allocation5] sm:$0xf]
    %v101 = vadd.f32 %v36, %v40
    %v102 = vadd.f32 %v101, %v44
    %v103 = vadd.f32 %v102, %v48
    %v104 = vadd.f32 %v103, %v52
    %v105 = vadd.f32 %v104, %v56
    %v106 = vadd.f32 %v105, %v60
    %v107 = vadd.f32 %v106, %v64
    %v108 = vadd.f32 %v107, %v68
    %v109 = vadd.f32 %v108, %v72
    %v110 = vadd.f32 %v109, %v76
    %v111 = vadd.f32 %v110, %v80
    %v112 = vadd.f32 %v111, %v84
    %v113 = vadd.f32 %v112, %v88
    %v114 = vadd.f32 %v113, %v92
    %v115 = vadd.f32 %v114, %v96
    %v116 = vrot.slane %v115, 4
    %v117 = vadd.f32 %v115, %v116
    %v118 = vrot.slane %v117, 2
    %v119 = vadd.f32 %v117, %v118
    %v120 = vrot.slane %v119, 1
    %v121 = vadd.f32 %v119, %v120
    %v122 = vadd.f32 %v37, %v41
    %v123 = vadd.f32 %v122, %v45
    %v124 = vadd.f32 %v123, %v49
    %v125 = vadd.f32 %v124, %v53
    %v126 = vadd.f32 %v125, %v57
    %v127 = vadd.f32 %v126, %v61
    %v128 = vadd.f32 %v127, %v65
    %v129 = vadd.f32 %v128, %v69
    %v130 = vadd.f32 %v129, %v73
    %v131 = vadd.f32 %v130, %v77
    %v132 = vadd.f32 %v131, %v81
    %v133 = vadd.f32 %v132, %v85
    %v134 = vadd.f32 %v133, %v89
    %v135 = vadd.f32 %v134, %v93
    %v136 = vadd.f32 %v135, %v97
    %v137 = vrot.slane %v136, 4
    %v138 = vadd.f32 %v136, %v137
    %v139 = vrot.slane %v138, 2
    %v140 = vadd.f32 %v138, %v139
    %v141 = vrot.slane %v140, 1
    %v142 = vadd.f32 %v140, %v141
    %v143 = vadd.f32 %v38, %v42
    %v144 = vadd.f32 %v143, %v46
    %v145 = vadd.f32 %v144, %v50
    %v146 = vadd.f32 %v145, %v54
    %v147 = vadd.f32 %v146, %v58
    %v148 = vadd.f32 %v147, %v62
    %v149 = vadd.f32 %v148, %v66
    %v150 = vadd.f32 %v149, %v70
    %v151 = vadd.f32 %v150, %v74
    %v152 = vadd.f32 %v151, %v78
    %v153 = vadd.f32 %v152, %v82
    %v154 = vadd.f32 %v153, %v86
    %v155 = vadd.f32 %v154, %v90
    %v156 = vadd.f32 %v155, %v94
    %v157 = vadd.f32 %v156, %v98
    %v158 = vrot.slane %v157, 4
    %v159 = vadd.f32 %v157, %v158
    %v160 = vrot.slane %v159, 2
    %v161 = vadd.f32 %v159, %v160
    %v162 = vrot.slane %v161, 1
    %v163 = vadd.f32 %v161, %v162
    %v164 = vadd.f32 %v39, %v43
    %v165 = vadd.f32 %v164, %v47
    %v166 = vadd.f32 %v165, %v51
    %v167 = vadd.f32 %v166, %v55
    %v168 = vadd.f32 %v167, %v59
    %v169 = vadd.f32 %v168, %v63
    %v170 = vadd.f32 %v169, %v67
    %v171 = vadd.f32 %v170, %v71
    %v172 = vadd.f32 %v171, %v75
    %v173 = vadd.f32 %v172, %v79
    %v174 = vadd.f32 %v173, %v83
    %v175 = vadd.f32 %v174, %v87
    %v176 = vadd.f32 %v175, %v91
    %v177 = vadd.f32 %v176, %v95
    %v178 = vadd.f32 %v177, %v99
    %v179 = vrot.slane %v178, 4
    %v180 = vadd.f32 %v178, %v179
    %v181 = vrot.slane %v180, 2
    %v182 = vadd.f32 %v180, %v181
    %v183 = vrot.slane %v182, 1
    %v184 = vadd.f32 %v182, %v183
    %v189 = vcombine.low %v121, %v142
    %v190 = vcombine.low %v163, %v184
    %v192 = vunpack.c.l.s4 1966171168
    %v193 = vunpack.c.0.s8 %v192
    %v194 = vlaneseq
    %v195 = vshrl.u32 %v194, 7
    %v196 = vsub.s32 %v193, %v195
    %v197 = vrot.slane %v189, %v196
    %v199 = vunpack.c.l.s4 1966171168
    %v200 = vunpack.c.0.s8 %v199
    %v201 = vlaneseq
    %v202 = vshrl.u32 %v201, 7
    %v203 = vsub.s32 %v200, %v202
    %v204 = vrot.slane %v190, %v203
    %v205 = vcombine.low %v197, %v204
    %v207 = vunpack.c.l.s4 1966171168
    %v208 = vunpack.c.0.s8 %v207
    %v209 = vlaneseq
    %v210 = vshrl.u32 %v209, 7
    %v211 = vsub.s32 %v208, %v210
    %v212 = vrot.slane %v205, %v211
    %v214 = vadd.f32 %v100, %v212
    %v215 = vlaneseq
    %vm216 = vcmp.ge.s32.totalorder %v215, 0
    %vm217 = vcmp.lt.s32.totalorder %v215, 512
    %vm218 = vmand %vm216, %vm217
    %219 = vst.msk [vmem:[#allocation5] sm:$0xf] %vm218, %v214
    %v220 = vld [vmem:[#allocation6] sm:$0xf]
    %v221 = vmul.f32 %v36, %v36
    %v222 = vmul.f32 %v37, %v37
    %v223 = vmul.f32 %v38, %v38
    %v224 = vmul.f32 %v39, %v39
    %v225 = vmul.f32 %v40, %v40
    %v226 = vmul.f32 %v41, %v41
    %v227 = vmul.f32 %v42, %v42
    %v228 = vmul.f32 %v43, %v43
    %v229 = vmul.f32 %v44, %v44
    %v230 = vmul.f32 %v45, %v45
    %v231 = vmul.f32 %v46, %v46
    %v232 = vmul.f32 %v47, %v47
    %v233 = vmul.f32 %v48, %v48
    %v234 = vmul.f32 %v49, %v49
    %v235 = vmul.f32 %v50, %v50
    %v236 = vmul.f32 %v51, %v51
    %v237 = vmul.f32 %v52, %v52
    %v238 = vmul.f32 %v53, %v53
    %v239 = vmul.f32 %v54, %v54
    %v240 = vmul.f32 %v55, %v55
    %v241 = vmul.f32 %v56, %v56
    %v242 = vmul.f32 %v57, %v57
    %v243 = vmul.f32 %v58, %v58
    %v244 = vmul.f32 %v59, %v59
    %v245 = vmul.f32 %v60, %v60
    %v246 = vmul.f32 %v61, %v61
    %v247 = vmul.f32 %v62, %v62
    %v248 = vmul.f32 %v63, %v63
    %v249 = vmul.f32 %v64, %v64
    %v250 = vmul.f32 %v65, %v65
    %v251 = vmul.f32 %v66, %v66
    %v252 = vmul.f32 %v67, %v67
    %v253 = vmul.f32 %v68, %v68
    %v254 = vmul.f32 %v69, %v69
    %v255 = vmul.f32 %v70, %v70
    %v256 = vmul.f32 %v71, %v71
    %v257 = vmul.f32 %v72, %v72
    %v258 = vmul.f32 %v73, %v73
    %v259 = vmul.f32 %v74, %v74
    %v260 = vmul.f32 %v75, %v75
    %v261 = vmul.f32 %v76, %v76
    %v262 = vmul.f32 %v77, %v77
    %v263 = vmul.f32 %v78, %v78
    %v264 = vmul.f32 %v79, %v79
    %v265 = vmul.f32 %v80, %v80
    %v266 = vmul.f32 %v81, %v81
    %v267 = vmul.f32 %v82, %v82
    %v268 = vmul.f32 %v83, %v83
    %v269 = vmul.f32 %v84, %v84
    %v270 = vmul.f32 %v85, %v85
    %v271 = vmul.f32 %v86, %v86
    %v272 = vmul.f32 %v87, %v87
    %v273 = vmul.f32 %v88, %v88
    %v274 = vmul.f32 %v89, %v89
    %v275 = vmul.f32 %v90, %v90
    %v276 = vmul.f32 %v91, %v91
    %v277 = vmul.f32 %v92, %v92
    %v278 = vmul.f32 %v93, %v93
    %v279 = vmul.f32 %v94, %v94
    %v280 = vmul.f32 %v95, %v95
    %v281 = vmul.f32 %v96, %v96
    %v282 = vmul.f32 %v97, %v97
    %v283 = vmul.f32 %v98, %v98
    %v284 = vmul.f32 %v99, %v99
    %v285 = vadd.f32 %v221, %v225
    %v286 = vadd.f32 %v285, %v229
    %v287 = vadd.f32 %v286, %v233
    %v288 = vadd.f32 %v287, %v237
    %v289 = vadd.f32 %v288, %v241
    %v290 = vadd.f32 %v289, %v245
    %v291 = vadd.f32 %v290, %v249
    %v292 = vadd.f32 %v291, %v253
    %v293 = vadd.f32 %v292, %v257
    %v294 = vadd.f32 %v293, %v261
    %v295 = vadd.f32 %v294, %v265
    %v296 = vadd.f32 %v295, %v269
    %v297 = vadd.f32 %v296, %v273
    %v298 = vadd.f32 %v297, %v277
    %v299 = vadd.f32 %v298, %v281
    %v300 = vrot.slane %v299, 4
    %v301 = vadd.f32 %v299, %v300
    %v302 = vrot.slane %v301, 2
    %v303 = vadd.f32 %v301, %v302
    %v304 = vrot.slane %v303, 1
    %v305 = vadd.f32 %v303, %v304
    %v306 = vadd.f32 %v222, %v226
    %v307 = vadd.f32 %v306, %v230
    %v308 = vadd.f32 %v307, %v234
    %v309 = vadd.f32 %v308, %v238
    %v310 = vadd.f32 %v309, %v242
    %v311 = vadd.f32 %v310, %v246
    %v312 = vadd.f32 %v311, %v250
    %v313 = vadd.f32 %v312, %v254
    %v314 = vadd.f32 %v313, %v258
    %v315 = vadd.f32 %v314, %v262
    %v316 = vadd.f32 %v315, %v266
    %v317 = vadd.f32 %v316, %v270
    %v318 = vadd.f32 %v317, %v274
    %v319 = vadd.f32 %v318, %v278
    %v320 = vadd.f32 %v319, %v282
    %v321 = vrot.slane %v320, 4
    %v322 = vadd.f32 %v320, %v321
    %v323 = vrot.slane %v322, 2
    %v324 = vadd.f32 %v322, %v323
    %v325 = vrot.slane %v324, 1
    %v326 = vadd.f32 %v324, %v325
    %v327 = vadd.f32 %v223, %v227
    %v328 = vadd.f32 %v327, %v231
    %v329 = vadd.f32 %v328, %v235
    %v330 = vadd.f32 %v329, %v239
    %v331 = vadd.f32 %v330, %v243
    %v332 = vadd.f32 %v331, %v247
    %v333 = vadd.f32 %v332, %v251
    %v334 = vadd.f32 %v333, %v255
    %v335 = vadd.f32 %v334, %v259
    %v336 = vadd.f32 %v335, %v263
    %v337 = vadd.f32 %v336, %v267
    %v338 = vadd.f32 %v337, %v271
    %v339 = vadd.f32 %v338, %v275
    %v340 = vadd.f32 %v339, %v279
    %v341 = vadd.f32 %v340, %v283
    %v342 = vrot.slane %v341, 4
    %v343 = vadd.f32 %v341, %v342
    %v344 = vrot.slane %v343, 2
    %v345 = vadd.f32 %v343, %v344
    %v346 = vrot.slane %v345, 1
    %v347 = vadd.f32 %v345, %v346
    %v348 = vadd.f32 %v224, %v228
    %v349 = vadd.f32 %v348, %v232
    %v350 = vadd.f32 %v349, %v236
    %v351 = vadd.f32 %v350, %v240
    %v352 = vadd.f32 %v351, %v244
    %v353 = vadd.f32 %v352, %v248
    %v354 = vadd.f32 %v353, %v252
    %v355 = vadd.f32 %v354, %v256
    %v356 = vadd.f32 %v355, %v260
    %v357 = vadd.f32 %v356, %v264
    %v358 = vadd.f32 %v357, %v268
    %v359 = vadd.f32 %v358, %v272
    %v360 = vadd.f32 %v359, %v276
    %v361 = vadd.f32 %v360, %v280
    %v362 = vadd.f32 %v361, %v284
    %v363 = vrot.slane %v362, 4
    %v364 = vadd.f32 %v362, %v363
    %v365 = vrot.slane %v364, 2
    %v366 = vadd.f32 %v364, %v365
    %v367 = vrot.slane %v366, 1
    %v368 = vadd.f32 %v366, %v367
    %v373 = vcombine.low %v305, %v326
    %v374 = vcombine.low %v347, %v368
    %v376 = vunpack.c.l.s4 1966171168
    %v377 = vunpack.c.0.s8 %v376
    %v378 = vlaneseq
    %v379 = vshrl.u32 %v378, 7
    %v380 = vsub.s32 %v377, %v379
    %v381 = vrot.slane %v373, %v380
    %v383 = vunpack.c.l.s4 1966171168
    %v384 = vunpack.c.0.s8 %v383
    %v385 = vlaneseq
    %v386 = vshrl.u32 %v385, 7
    %v387 = vsub.s32 %v384, %v386
    %v388 = vrot.slane %v374, %v387
    %v389 = vcombine.low %v381, %v388
    %v391 = vunpack.c.l.s4 1966171168
    %v392 = vunpack.c.0.s8 %v391
    %v393 = vlaneseq
    %v394 = vshrl.u32 %v393, 7
    %v395 = vsub.s32 %v392, %v394
    %v396 = vrot.slane %v389, %v395
    %v398 = vadd.f32 %v220, %v396
    %399 = vst.msk [vmem:[#allocation6] sm:$0xf] %vm218, %v398
    // Predicated region
    $region14: #{_lambda_.8} parent=1 // pred_check
      _
    $region15: #{_lambda_.8} parent=1 // pred_check_branch
      %401 = sbr.rel (0) target = $region17
    $region16: #{_lambda_.8} parent=1 // pred_region
      %s403 = ssub.s32 64, 64
      %404 = vsyncadd [#allocation4], %s403
      %s406 = sshll.u32 [#allocation5], 4
      %s407 = int_to_ptr.vmem [resolvable:$true] %s406
      %409 = dma.vmem_to_hbm [thread:$0]  %s407, 64, %s1, [#allocation4]
    $region17: #{_lambda_.8} parent=1 // pred_fallthru
      _
    // Predicated region
    $region18: #{_lambda_.8} parent=1 // pred_check
      _
    $region19: #{_lambda_.8} parent=1 // pred_check_branch
      %411 = sbr.rel (0) target = $region21
    $region20: #{_lambda_.8} parent=1 // pred_region
      %s413 = ssub.s32 64, 64
      %414 = vsyncadd [#allocation7], %s413
      %s416 = sshll.u32 [#allocation6], 4
      %s417 = int_to_ptr.vmem [resolvable:$true] %s416
      %419 = dma.vmem_to_hbm [thread:$0]  %s417, 64, %s2, [#allocation7]
    $region21: #{_lambda_.8} parent=1 // pred_fallthru
      _
    // Predicated region
    $region22: #{_lambda_.8} parent=1 // pred_check
      _
    $region23: #{_lambda_.8} parent=1 // pred_check_branch
      %421 = sbr.rel (0) target = $region25
    $region24: #{_lambda_.8} parent=1 // pred_region
      %422 = dma.done [#allocation4], 64
    $region25: #{_lambda_.8} parent=1 // pred_fallthru
      _
    // Predicated region
    $region26: #{_lambda_.8} parent=1 // pred_check
      _
    $region27: #{_lambda_.8} parent=1 // pred_check_branch
      %424 = sbr.rel (0) target = $region29
    $region28: #{_lambda_.8} parent=1 // pred_region
      %425 = dma.done [#allocation7], 64
    $region29: #{_lambda_.8} parent=1 // pred_fallthru
      _
    %426 = vsyncpa [#allocation3], 1
    %427 = vsyncpa [#allocation4], 1
    %428 = vsyncpa [#allocation7], 1

// kernel: _lambda_.9
$region0: #{_lambda_.9}
  #allocation0 [shape = 'u32[]', space=smem, size = 0x4, offset = 0x4, fixed_abs, tag = 'smem constant byte address 0x4 - core index']
  #allocation1 [shape = 'u32[144,128]{1,0:T(1,128)}', space=vmem, size = 0x12000, scoped, tag = 'internal scratch']
  %s0 = inlined_call_operand.hbm [shape: f32[128,512], index: 0, kind: input, shape index: {}]
  %s1 = inlined_call_operand.hbm [shape: f32[1,512], index: 1, kind: input, shape index: {}]
  %s2 = inlined_call_operand.hbm [shape: f32[1,512], index: 2, kind: input, shape index: {}]
  %s3 = inlined_call_operand.hbm [shape: f32[128,512], index: 3, kind: output, shape index: {}]
  %s4 = sld [smem:[#allocation0]]
  $region34: #{_lambda_.9} parent=0
    _
  %s6 = ssub.s32 1, %s4
  %s7 = scalar_select 0, %s6, %s4
  $region1: #{_lambda_.9} parent=0
    #allocation2 [shape = 'u8[262144]{0}', space=vmem, size = 0x40000, scoped, tag = 'input window, operand 0, single buffered']
    #allocation3 [shape = 's32[1]{0}', space=sflag, size = 0x4, scoped, tag = 'scoped memory for _lambda_.9']
    #allocation4 [shape = 's32[1]{0}', space=sflag, size = 0x4, scoped, tag = 'scoped memory for _lambda_.9']
    #allocation5 [shape = 'u8[2048]{0}', space=vmem, size = 0x800, scoped, tag = 'input window, operand 1, single buffered']
    #allocation6 [shape = 's32[1]{0}', space=sflag, size = 0x4, scoped, tag = 'scoped memory for _lambda_.9']
    #allocation7 [shape = 'u8[2048]{0}', space=vmem, size = 0x800, scoped, tag = 'input window, operand 2, single buffered']
    #allocation8 [shape = 'u8[262144]{0}', space=vmem, size = 0x40000, scoped, tag = 'output window, operand 0, single buffered']
    %8 = vsyncpa [#allocation3], 0
    %9 = vsyncpa [#allocation6], 0
    %10 = vsyncpa [#allocation4], 0
    // Predicated region
    $region2: #{_lambda_.9} parent=1 // pred_check
      _
    $region3: #{_lambda_.9} parent=1 // pred_check_branch
      %12 = sbr.rel (0) target = $region5
    $region4: #{_lambda_.9} parent=1 // pred_region
      %s14 = ssub.s32 8192, 8192
      %15 = vsyncadd [#allocation3], %s14
      %s16 = sshll.u32 [#allocation2], 4
      %s17 = int_to_ptr.vmem [resolvable:$true] %s16
      %22 = dma.hbm_to_vmem [thread:$0]  %s0, 8192, %s17, [#allocation3], 512, 512, 32
    $region5: #{_lambda_.9} parent=1 // pred_fallthru
      _
    // Predicated region
    $region6: #{_lambda_.9} parent=1 // pred_check
      _
    $region7: #{_lambda_.9} parent=1 // pred_check_branch
      %24 = sbr.rel (0) target = $region9
    $region8: #{_lambda_.9} parent=1 // pred_region
      %s26 = ssub.s32 64, 64
      %27 = vsyncadd [#allocation6], %s26
      %s29 = sshll.u32 [#allocation5], 4
      %s30 = int_to_ptr.vmem [resolvable:$true] %s29
      %32 = dma.hbm_to_vmem [thread:$0]  %s1, 64, %s30, [#allocation6]
    $region9: #{_lambda_.9} parent=1 // pred_fallthru
      _
    // Predicated region
    $region10: #{_lambda_.9} parent=1 // pred_check
      _
    $region11: #{_lambda_.9} parent=1 // pred_check_branch
      %34 = sbr.rel (0) target = $region13
    $region12: #{_lambda_.9} parent=1 // pred_region
      %s36 = ssub.s32 64, 64
      %37 = vsyncadd [#allocation6], %s36
      %s39 = sshll.u32 [#allocation7], 4
      %s40 = int_to_ptr.vmem [resolvable:$true] %s39
      %42 = dma.hbm_to_vmem [thread:$0]  %s2, 64, %s40, [#allocation6]
    $region13: #{_lambda_.9} parent=1 // pred_fallthru
      _
    // Predicated region
    $region14: #{_lambda_.9} parent=1 // pred_check
      _
    $region15: #{_lambda_.9} parent=1 // pred_check_branch
      %44 = sbr.rel (0) target = $region17
    $region16: #{_lambda_.9} parent=1 // pred_region
      %45 = dma.done [#allocation3], 8192
    $region17: #{_lambda_.9} parent=1 // pred_fallthru
      _
    // Predicated region
    $region18: #{_lambda_.9} parent=1 // pred_check
      _
    $region19: #{_lambda_.9} parent=1 // pred_check_branch
      %47 = sbr.rel (0) target = $region21
    $region20: #{_lambda_.9} parent=1 // pred_region
      %48 = dma.done [#allocation6], 64
    $region21: #{_lambda_.9} parent=1 // pred_fallthru
      _
    // Predicated region
    $region22: #{_lambda_.9} parent=1 // pred_check
      _
    $region23: #{_lambda_.9} parent=1 // pred_check_branch
      %50 = sbr.rel (0) target = $region25
    $region24: #{_lambda_.9} parent=1 // pred_region
      %51 = dma.done [#allocation6], 64
    $region25: #{_lambda_.9} parent=1 // pred_fallthru
      _
    %v52 = vld [vmem:[#allocation2] sm:$0xff]
    %v53 = vld [vmem:[#allocation2 + $0x8] sm:$0xff]
    %v54 = vld [vmem:[#allocation2 + $0x10] sm:$0xff]
    %v55 = vld [vmem:[#allocation2 + $0x18] sm:$0xff]
    %v56 = vld [vmem:[#allocation2 + $0x20] sm:$0xff]
    %v57 = vld [vmem:[#allocation2 + $0x28] sm:$0xff]
    %v58 = vld [vmem:[#allocation2 + $0x30] sm:$0xff]
    %v59 = vld [vmem:[#allocation2 + $0x38] sm:$0xff]
    %v60 = vld [vmem:[#allocation2 + $0x40] sm:$0xff]
    %v61 = vld [vmem:[#allocation2 + $0x48] sm:$0xff]
    %v62 = vld [vmem:[#allocation2 + $0x50] sm:$0xff]
    %v63 = vld [vmem:[#allocation2 + $0x58] sm:$0xff]
    %v64 = vld [vmem:[#allocation2 + $0x60] sm:$0xff]
    %v65 = vld [vmem:[#allocation2 + $0x68] sm:$0xff]
    %v66 = vld [vmem:[#allocation2 + $0x70] sm:$0xff]
    %v67 = vld [vmem:[#allocation2 + $0x78] sm:$0xff]
    %v68 = vld [vmem:[#allocation2 + $0x80] sm:$0xff]
    %v69 = vld [vmem:[#allocation2 + $0x88] sm:$0xff]
    %v70 = vld [vmem:[#allocation2 + $0x90] sm:$0xff]
    %v71 = vld [vmem:[#allocation2 + $0x98] sm:$0xff]
    %v72 = vld [vmem:[#allocation2 + $0xa0] sm:$0xff]
    %v73 = vld [vmem:[#allocation2 + $0xa8] sm:$0xff]
    %v74 = vld [vmem:[#allocation2 + $0xb0] sm:$0xff]
    %v75 = vld [vmem:[#allocation2 + $0xb8] sm:$0xff]
    %v76 = vld [vmem:[#allocation2 + $0xc0] sm:$0xff]
    %v77 = vld [vmem:[#allocation2 + $0xc8] sm:$0xff]
    %v78 = vld [vmem:[#allocation2 + $0xd0] sm:$0xff]
    %v79 = vld [vmem:[#allocation2 + $0xd8] sm:$0xff]
    %v80 = vld [vmem:[#allocation2 + $0xe0] sm:$0xff]
    %v81 = vld [vmem:[#allocation2 + $0xe8] sm:$0xff]
    %v82 = vld [vmem:[#allocation2 + $0xf0] sm:$0xff]
    %v83 = vld [vmem:[#allocation2 + $0xf8] sm:$0xff]
    %v84 = vld [vmem:[#allocation2 + $0x100] sm:$0xff]
    %v85 = vld [vmem:[#allocation2 + $0x108] sm:$0xff]
    %v86 = vld [vmem:[#allocation2 + $0x110] sm:$0xff]
    %v87 = vld [vmem:[#allocation2 + $0x118] sm:$0xff]
    %v88 = vld [vmem:[#allocation2 + $0x120] sm:$0xff]
    %v89 = vld [vmem:[#allocation2 + $0x128] sm:$0xff]
    %v90 = vld [vmem:[#allocation2 + $0x130] sm:$0xff]
    %v91 = vld [vmem:[#allocation2 + $0x138] sm:$0xff]
    %v92 = vld [vmem:[#allocation2 + $0x140] sm:$0xff]
    %v93 = vld [vmem:[#allocation2 + $0x148] sm:$0xff]
    %v94 = vld [vmem:[#allocation2 + $0x150] sm:$0xff]
    %v95 = vld [vmem:[#allocation2 + $0x158] sm:$0xff]
    %v96 = vld [vmem:[#allocation2 + $0x160] sm:$0xff]
    %v97 = vld [vmem:[#allocation2 + $0x168] sm:$0xff]
    %v98 = vld [vmem:[#allocation2 + $0x170] sm:$0xff]
    %v99 = vld [vmem:[#allocation2 + $0x178] sm:$0xff]
    %v100 = vld [vmem:[#allocation2 + $0x180] sm:$0xff]
    %v101 = vld [vmem:[#allocation2 + $0x188] sm:$0xff]
    %v102 = vld [vmem:[#allocation2 + $0x190] sm:$0xff]
    %v103 = vld [vmem:[#allocation2 + $0x198] sm:$0xff]
    %v104 = vld [vmem:[#allocation2 + $0x1a0] sm:$0xff]
    %v105 = vld [vmem:[#allocation2 + $0x1a8] sm:$0xff]
    %v106 = vld [vmem:[#allocation2 + $0x1b0] sm:$0xff]
    %v107 = vld [vmem:[#allocation2 + $0x1b8] sm:$0xff]
    %v108 = vld [vmem:[#allocation2 + $0x1c0] sm:$0xff]
    %v109 = vld [vmem:[#allocation2 + $0x1c8] sm:$0xff]
    %v110 = vld [vmem:[#allocation2 + $0x1d0] sm:$0xff]
    %v111 = vld [vmem:[#allocation2 + $0x1d8] sm:$0xff]
    %v112 = vld [vmem:[#allocation2 + $0x1e0] sm:$0xff]
    %v113 = vld [vmem:[#allocation2 + $0x1e8] sm:$0xff]
    %v114 = vld [vmem:[#allocation2 + $0x1f0] sm:$0xff]
    %v115 = vld [vmem:[#allocation2 + $0x1f8] sm:$0xff]
    %v116 = vld [vmem:[#allocation5] sm:$0xf]
    %v118 = vlaneseq
    %v119 = vshrl.u32 %v118, 7
    %v120 = vsub.s32 0, %v119
    %v121 = vrot.slane %v116, %v120
    %v122 = vlaneseq
    %v123 = vshrl.u32 %v122, 7
    %v124 = vsub.s32 1, %v123
    %v125 = vrot.slane %v116, %v124
    %v126 = vlaneseq
    %v127 = vshrl.u32 %v126, 7
    %v128 = vsub.s32 2, %v127
    %v129 = vrot.slane %v116, %v128
    %v130 = vlaneseq
    %v131 = vshrl.u32 %v130, 7
    %v132 = vsub.s32 3, %v131
    %v133 = vrot.slane %v116, %v132
    %v138 = vmul.f32 %v52, %v121
    %v139 = vmul.f32 %v53, %v125
    %v140 = vmul.f32 %v54, %v129
    %v141 = vmul.f32 %v55, %v133
    %v142 = vmul.f32 %v56, %v121
    %v143 = vmul.f32 %v57, %v125
    %v144 = vmul.f32 %v58, %v129
    %v145 = vmul.f32 %v59, %v133
    %v146 = vmul.f32 %v60, %v121
    %v147 = vmul.f32 %v61, %v125
    %v148 = vmul.f32 %v62, %v129
    %v149 = vmul.f32 %v63, %v133
    %v150 = vmul.f32 %v64, %v121
    %v151 = vmul.f32 %v65, %v125
    %v152 = vmul.f32 %v66, %v129
    %v153 = vmul.f32 %v67, %v133
    %v154 = vmul.f32 %v68, %v121
    %v155 = vmul.f32 %v69, %v125
    %v156 = vmul.f32 %v70, %v129
    %v157 = vmul.f32 %v71, %v133
    %v158 = vmul.f32 %v72, %v121
    %v159 = vmul.f32 %v73, %v125
    %v160 = vmul.f32 %v74, %v129
    %v161 = vmul.f32 %v75, %v133
    %v162 = vmul.f32 %v76, %v121
    %v163 = vmul.f32 %v77, %v125
    %v164 = vmul.f32 %v78, %v129
    %v165 = vmul.f32 %v79, %v133
    %v166 = vmul.f32 %v80, %v121
    %v167 = vmul.f32 %v81, %v125
    %v168 = vmul.f32 %v82, %v129
    %v169 = vmul.f32 %v83, %v133
    %v170 = vmul.f32 %v84, %v121
    %v171 = vmul.f32 %v85, %v125
    %v172 = vmul.f32 %v86, %v129
    %v173 = vmul.f32 %v87, %v133
    %v174 = vmul.f32 %v88, %v121
    %v175 = vmul.f32 %v89, %v125
    %v176 = vmul.f32 %v90, %v129
    %v177 = vmul.f32 %v91, %v133
    %v178 = vmul.f32 %v92, %v121
    %v179 = vmul.f32 %v93, %v125
    %v180 = vmul.f32 %v94, %v129
    %v181 = vmul.f32 %v95, %v133
    %v182 = vmul.f32 %v96, %v121
    %v183 = vmul.f32 %v97, %v125
    %v184 = vmul.f32 %v98, %v129
    %v185 = vmul.f32 %v99, %v133
    %v186 = vmul.f32 %v100, %v121
    %v187 = vmul.f32 %v101, %v125
    %v188 = vmul.f32 %v102, %v129
    %v189 = vmul.f32 %v103, %v133
    %v190 = vmul.f32 %v104, %v121
    %v191 = vmul.f32 %v105, %v125
    %v192 = vmul.f32 %v106, %v129
    %v193 = vmul.f32 %v107, %v133
    %v194 = vmul.f32 %v108, %v121
    %v195 = vmul.f32 %v109, %v125
    %v196 = vmul.f32 %v110, %v129
    %v197 = vmul.f32 %v111, %v133
    %v198 = vmul.f32 %v112, %v121
    %v199 = vmul.f32 %v113, %v125
    %v200 = vmul.f32 %v114, %v129
    %v201 = vmul.f32 %v115, %v133
    %v202 = vld [vmem:[#allocation7] sm:$0xf]
    %v204 = vlaneseq
    %v205 = vshrl.u32 %v204, 7
    %v206 = vsub.s32 0, %v205
    %v207 = vrot.slane %v202, %v206
    %v208 = vlaneseq
    %v209 = vshrl.u32 %v208, 7
    %v210 = vsub.s32 1, %v209
    %v211 = vrot.slane %v202, %v210
    %v212 = vlaneseq
    %v213 = vshrl.u32 %v212, 7
    %v214 = vsub.s32 2, %v213
    %v215 = vrot.slane %v202, %v214
    %v216 = vlaneseq
    %v217 = vshrl.u32 %v216, 7
    %v218 = vsub.s32 3, %v217
    %v219 = vrot.slane %v202, %v218
    %v224 = vadd.f32 %v138, %v207
    %v225 = vadd.f32 %v139, %v211
    %v226 = vadd.f32 %v140, %v215
    %v227 = vadd.f32 %v141, %v219
    %v228 = vadd.f32 %v142, %v207
    %v229 = vadd.f32 %v143, %v211
    %v230 = vadd.f32 %v144, %v215
    %v231 = vadd.f32 %v145, %v219
    %v232 = vadd.f32 %v146, %v207
    %v233 = vadd.f32 %v147, %v211
    %v234 = vadd.f32 %v148, %v215
    %v235 = vadd.f32 %v149, %v219
    %v236 = vadd.f32 %v150, %v207
    %v237 = vadd.f32 %v151, %v211
    %v238 = vadd.f32 %v152, %v215
    %v239 = vadd.f32 %v153, %v219
    %v240 = vadd.f32 %v154, %v207
    %v241 = vadd.f32 %v155, %v211
    %v242 = vadd.f32 %v156, %v215
    %v243 = vadd.f32 %v157, %v219
    %v244 = vadd.f32 %v158, %v207
    %v245 = vadd.f32 %v159, %v211
    %v246 = vadd.f32 %v160, %v215
    %v247 = vadd.f32 %v161, %v219
    %v248 = vadd.f32 %v162, %v207
    %v249 = vadd.f32 %v163, %v211
    %v250 = vadd.f32 %v164, %v215
    %v251 = vadd.f32 %v165, %v219
    %v252 = vadd.f32 %v166, %v207
    %v253 = vadd.f32 %v167, %v211
    %v254 = vadd.f32 %v168, %v215
    %v255 = vadd.f32 %v169, %v219
    %v256 = vadd.f32 %v170, %v207
    %v257 = vadd.f32 %v171, %v211
    %v258 = vadd.f32 %v172, %v215
    %v259 = vadd.f32 %v173, %v219
    %v260 = vadd.f32 %v174, %v207
    %v261 = vadd.f32 %v175, %v211
    %v262 = vadd.f32 %v176, %v215
    %v263 = vadd.f32 %v177, %v219
    %v264 = vadd.f32 %v178, %v207
    %v265 = vadd.f32 %v179, %v211
    %v266 = vadd.f32 %v180, %v215
    %v267 = vadd.f32 %v181, %v219
    %v268 = vadd.f32 %v182, %v207
    %v269 = vadd.f32 %v183, %v211
    %v270 = vadd.f32 %v184, %v215
    %v271 = vadd.f32 %v185, %v219
    %v272 = vadd.f32 %v186, %v207
    %v273 = vadd.f32 %v187, %v211
    %v274 = vadd.f32 %v188, %v215
    %v275 = vadd.f32 %v189, %v219
    %v276 = vadd.f32 %v190, %v207
    %v277 = vadd.f32 %v191, %v211
    %v278 = vadd.f32 %v192, %v215
    %v279 = vadd.f32 %v193, %v219
    %v280 = vadd.f32 %v194, %v207
    %v281 = vadd.f32 %v195, %v211
    %v282 = vadd.f32 %v196, %v215
    %v283 = vadd.f32 %v197, %v219
    %v284 = vadd.f32 %v198, %v207
    %v285 = vadd.f32 %v199, %v211
    %v286 = vadd.f32 %v200, %v215
    %v287 = vadd.f32 %v201, %v219
    %v288 = vmax.f32 %v224, 0.0
    %v289 = vmax.f32 %v225, 0.0
    %v290 = vmax.f32 %v226, 0.0
    %v291 = vmax.f32 %v227, 0.0
    %v292 = vmax.f32 %v228, 0.0
    %v293 = vmax.f32 %v229, 0.0
    %v294 = vmax.f32 %v230, 0.0
    %v295 = vmax.f32 %v231, 0.0
    %v296 = vmax.f32 %v232, 0.0
    %v297 = vmax.f32 %v233, 0.0
    %v298 = vmax.f32 %v234, 0.0
    %v299 = vmax.f32 %v235, 0.0
    %v300 = vmax.f32 %v236, 0.0
    %v301 = vmax.f32 %v237, 0.0
    %v302 = vmax.f32 %v238, 0.0
    %v303 = vmax.f32 %v239, 0.0
    %v304 = vmax.f32 %v240, 0.0
    %v305 = vmax.f32 %v241, 0.0
    %v306 = vmax.f32 %v242, 0.0
    %v307 = vmax.f32 %v243, 0.0
    %v308 = vmax.f32 %v244, 0.0
    %v309 = vmax.f32 %v245, 0.0
    %v310 = vmax.f32 %v246, 0.0
    %v311 = vmax.f32 %v247, 0.0
    %v312 = vmax.f32 %v248, 0.0
    %v313 = vmax.f32 %v249, 0.0
    %v314 = vmax.f32 %v250, 0.0
    %v315 = vmax.f32 %v251, 0.0
    %v316 = vmax.f32 %v252, 0.0
    %v317 = vmax.f32 %v253, 0.0
    %v318 = vmax.f32 %v254, 0.0
    %v319 = vmax.f32 %v255, 0.0
    %v320 = vmax.f32 %v256, 0.0
    %v321 = vmax.f32 %v257, 0.0
    %v322 = vmax.f32 %v258, 0.0
    %v323 = vmax.f32 %v259, 0.0
    %v324 = vmax.f32 %v260, 0.0
    %v325 = vmax.f32 %v261, 0.0
    %v326 = vmax.f32 %v262, 0.0
    %v327 = vmax.f32 %v263, 0.0
    %v328 = vmax.f32 %v264, 0.0
    %v329 = vmax.f32 %v265, 0.0
    %v330 = vmax.f32 %v266, 0.0
    %v331 = vmax.f32 %v267, 0.0
    %v332 = vmax.f32 %v268, 0.0
    %v333 = vmax.f32 %v269, 0.0
    %v334 = vmax.f32 %v270, 0.0
    %v335 = vmax.f32 %v271, 0.0
    %v336 = vmax.f32 %v272, 0.0
    %v337 = vmax.f32 %v273, 0.0
    %v338 = vmax.f32 %v274, 0.0
    %v339 = vmax.f32 %v275, 0.0
    %v340 = vmax.f32 %v276, 0.0
    %v341 = vmax.f32 %v277, 0.0
    %v342 = vmax.f32 %v278, 0.0
    %v343 = vmax.f32 %v279, 0.0
    %v344 = vmax.f32 %v280, 0.0
    %v345 = vmax.f32 %v281, 0.0
    %v346 = vmax.f32 %v282, 0.0
    %v347 = vmax.f32 %v283, 0.0
    %v348 = vmax.f32 %v284, 0.0
    %v349 = vmax.f32 %v285, 0.0
    %v350 = vmax.f32 %v286, 0.0
    %v351 = vmax.f32 %v287, 0.0
    %352 = vst [vmem:[#allocation8] sm:$0xff] %v288
    %353 = vst [vmem:[#allocation8 + $0x8] sm:$0xff] %v289
    %354 = vst [vmem:[#allocation8 + $0x10] sm:$0xff] %v290
    %355 = vst [vmem:[#allocation8 + $0x18] sm:$0xff] %v291
    %356 = vst [vmem:[#allocation8 + $0x20] sm:$0xff] %v292
    %357 = vst [vmem:[#allocation8 + $0x28] sm:$0xff] %v293
    %358 = vst [vmem:[#allocation8 + $0x30] sm:$0xff] %v294
    %359 = vst [vmem:[#allocation8 + $0x38] sm:$0xff] %v295
    %360 = vst [vmem:[#allocation8 + $0x40] sm:$0xff] %v296
    %361 = vst [vmem:[#allocation8 + $0x48] sm:$0xff] %v297
    %362 = vst [vmem:[#allocation8 + $0x50] sm:$0xff] %v298
    %363 = vst [vmem:[#allocation8 + $0x58] sm:$0xff] %v299
    %364 = vst [vmem:[#allocation8 + $0x60] sm:$0xff] %v300
    %365 = vst [vmem:[#allocation8 + $0x68] sm:$0xff] %v301
    %366 = vst [vmem:[#allocation8 + $0x70] sm:$0xff] %v302
    %367 = vst [vmem:[#allocation8 + $0x78] sm:$0xff] %v303
    %368 = vst [vmem:[#allocation8 + $0x80] sm:$0xff] %v304
    %369 = vst [vmem:[#allocation8 + $0x88] sm:$0xff] %v305
    %370 = vst [vmem:[#allocation8 + $0x90] sm:$0xff] %v306
    %371 = vst [vmem:[#allocation8 + $0x98] sm:$0xff] %v307
    %372 = vst [vmem:[#allocation8 + $0xa0] sm:$0xff] %v308
    %373 = vst [vmem:[#allocation8 + $0xa8] sm:$0xff] %v309
    %374 = vst [vmem:[#allocation8 + $0xb0] sm:$0xff] %v310
    %375 = vst [vmem:[#allocation8 + $0xb8] sm:$0xff] %v311
    %376 = vst [vmem:[#allocation8 + $0xc0] sm:$0xff] %v312
    %377 = vst [vmem:[#allocation8 + $0xc8] sm:$0xff] %v313
    %378 = vst [vmem:[#allocation8 + $0xd0] sm:$0xff] %v314
    %379 = vst [vmem:[#allocation8 + $0xd8] sm:$0xff] %v315
    %380 = vst [vmem:[#allocation8 + $0xe0] sm:$0xff] %v316
    %381 = vst [vmem:[#allocation8 + $0xe8] sm:$0xff] %v317
    %382 = vst [vmem:[#allocation8 + $0xf0] sm:$0xff] %v318
    %383 = vst [vmem:[#allocation8 + $0xf8] sm:$0xff] %v319
    %384 = vst [vmem:[#allocation8 + $0x100] sm:$0xff] %v320
    %385 = vst [vmem:[#allocation8 + $0x108] sm:$0xff] %v321
    %386 = vst [vmem:[#allocation8 + $0x110] sm:$0xff] %v322
    %387 = vst [vmem:[#allocation8 + $0x118] sm:$0xff] %v323
    %388 = vst [vmem:[#allocation8 + $0x120] sm:$0xff] %v324
    %389 = vst [vmem:[#allocation8 + $0x128] sm:$0xff] %v325
    %390 = vst [vmem:[#allocation8 + $0x130] sm:$0xff] %v326
    %391 = vst [vmem:[#allocation8 + $0x138] sm:$0xff] %v327
    %392 = vst [vmem:[#allocation8 + $0x140] sm:$0xff] %v328
    %393 = vst [vmem:[#allocation8 + $0x148] sm:$0xff] %v329
    %394 = vst [vmem:[#allocation8 + $0x150] sm:$0xff] %v330
    %395 = vst [vmem:[#allocation8 + $0x158] sm:$0xff] %v331
    %396 = vst [vmem:[#allocation8 + $0x160] sm:$0xff] %v332
    %397 = vst [vmem:[#allocation8 + $0x168] sm:$0xff] %v333
    %398 = vst [vmem:[#allocation8 + $0x170] sm:$0xff] %v334
    %399 = vst [vmem:[#allocation8 + $0x178] sm:$0xff] %v335
    %400 = vst [vmem:[#allocation8 + $0x180] sm:$0xff] %v336
    %401 = vst [vmem:[#allocation8 + $0x188] sm:$0xff] %v337
    %402 = vst [vmem:[#allocation8 + $0x190] sm:$0xff] %v338
    %403 = vst [vmem:[#allocation8 + $0x198] sm:$0xff] %v339
    %404 = vst [vmem:[#allocation8 + $0x1a0] sm:$0xff] %v340
    %405 = vst [vmem:[#allocation8 + $0x1a8] sm:$0xff] %v341
    %406 = vst [vmem:[#allocation8 + $0x1b0] sm:$0xff] %v342
    %407 = vst [vmem:[#allocation8 + $0x1b8] sm:$0xff] %v343
    %408 = vst [vmem:[#allocation8 + $0x1c0] sm:$0xff] %v344
    %409 = vst [vmem:[#allocation8 + $0x1c8] sm:$0xff] %v345
    %410 = vst [vmem:[#allocation8 + $0x1d0] sm:$0xff] %v346
    %411 = vst [vmem:[#allocation8 + $0x1d8] sm:$0xff] %v347
    %412 = vst [vmem:[#allocation8 + $0x1e0] sm:$0xff] %v348
    %413 = vst [vmem:[#allocation8 + $0x1e8] sm:$0xff] %v349
    %414 = vst [vmem:[#allocation8 + $0x1f0] sm:$0xff] %v350
    %415 = vst [vmem:[#allocation8 + $0x1f8] sm:$0xff] %v351
    // Predicated region
    $region26: #{_lambda_.9} parent=1 // pred_check
      _
    $region27: #{_lambda_.9} parent=1 // pred_check_branch
      %417 = sbr.rel (0) target = $region29
    $region28: #{_lambda_.9} parent=1 // pred_region
      %s419 = ssub.s32 8192, 8192
      %420 = vsyncadd [#allocation4], %s419
      %s421 = sshll.u32 [#allocation8], 4
      %s422 = int_to_ptr.vmem [resolvable:$true] %s421
      %427 = dma.vmem_to_hbm [thread:$0]  %s422, 8192, %s3, [#allocation4], 512, 512, 32
    $region29: #{_lambda_.9} parent=1 // pred_fallthru
      _
    // Predicated region
    $region30: #{_lambda_.9} parent=1 // pred_check
      _
    $region31: #{_lambda_.9} parent=1 // pred_check_branch
      %429 = sbr.rel (0) target = $region33
    $region32: #{_lambda_.9} parent=1 // pred_region
      %430 = dma.done [#allocation4], 8192
    $region33: #{_lambda_.9} parent=1 // pred_fallthru
      _
    %431 = vsyncpa [#allocation3], 1
    %432 = vsyncpa [#allocation6], 1
    %433 = vsyncpa [#allocation4], 1

</llo_original>
